<compile_context>
chip_gen: v6e
topology: v6e:2x2x1
jax: 0.10.0
libtpu: 0.0.40
codegen_flags: <defaults>
</compile_context>

<pallas_src>
import functools
import math

import numpy as np

import jax
import jax.numpy as jnp
from jax.experimental import pallas as pl
from jax.experimental.pallas import tpu as pltpu


def _conv_out(n, k, s):
    return (n - k) // s + 1


# ----------------------------------------------------------------------------
# Fused Pallas kernel: conv1 -> conv2 -> conv3 -> fc1 -> fc2 for one image.
# ----------------------------------------------------------------------------
def _dqn_kernel(x_ref, d1_ref, t1_ref, b1_ref, d2_ref, t2_ref, b2_ref,
                t3_ref, b3_ref, wf1_ref, bf1_ref, wf2_ref, bf2_ref, o_ref,
                *, layers, compute_dtype):
    (k1, s1, oh1, ow1, oc1), (k2, s2, oh2, ow2, oc2), (k3, s3, oh3, ow3, oc3) = layers

    def conv_relu(x, t_ref, b_ref, d_ref, k, s, oh, ow, oc):
        # x: f32 [H_in, W_in*C_in] NHWC slab.  Per kernel row kh, the tiny 0/1
        # matrix d selects rows kh, kh+s, ... (H-stride) and the block-Toeplitz
        # weight t[kh] applies the kw window + W-stride in one bf16 MXU matmul.
        span = s * (oh - 1) + 1
        acc = jnp.zeros((oh, ow * oc), jnp.float32)
        for kh in range(k):
            xs = x[kh:kh + span, :]
            z = xs if s == 1 else jnp.dot(
                d_ref[...], xs, preferred_element_type=jnp.float32)
            acc = acc + jnp.dot(z.astype(compute_dtype), t_ref[kh],
                                preferred_element_type=jnp.float32)
        return jnp.maximum(acc + b_ref[...], 0.0)            # f32 [oh, ow*oc]

    x = x_ref[0].astype(jnp.float32)                         # [H, W*C]
    x = conv_relu(x, t1_ref, b1_ref, d1_ref, k1, s1, oh1, ow1, oc1)
    x = conv_relu(x, t2_ref, b2_ref, d2_ref, k2, s2, oh2, ow2, oc2)
    x = conv_relu(x, t3_ref, b3_ref, None, k3, s3, oh3, ow3, oc3)

    # fc1: weight pre-split per conv3 spatial row (NHWC order), so PyTorch's
    # NCHW flatten never materializes.
    h = jnp.dot(x[0:1, :].astype(compute_dtype), wf1_ref[0],
                preferred_element_type=jnp.float32)
    for r in range(1, oh3):
        h = h + jnp.dot(x[r:r + 1, :].astype(compute_dtype), wf1_ref[r],
                        preferred_element_type=jnp.float32)
    h = jnp.maximum(h + bf1_ref[...], 0.0)

    # fc2 into a 128-lane padded Q row (lane-dense store); padding is sliced
    # off wrapper-side.
    q = jnp.dot(h.astype(compute_dtype), wf2_ref[...],
                preferred_element_type=jnp.float32)
    o_ref[0] = (q + bf2_ref[...]).astype(o_ref.dtype)


# ----------------------------------------------------------------------------
# Wrapper
# ----------------------------------------------------------------------------
def dqn_forward(state, tensors, *, meta):
    """state: [B, C, H, W] float32 (PyTorch NCHW).  Returns [B, n_actions]."""
    (d1, t1, bb1, d2, t2, bb2, t3, bb3, wf1s, bf1m, wf2m, bf2m) = tensors
    C, H, W = meta["input_dims"]
    a_pad = meta["a_pad"]
    layers = meta["layers"]
    B = state.shape[0]

    # TODO(synk): the NCHW->NHWC transpose + bf16 cast of the input (and the
    # final Q-row un-padding) are pure layout plumbing left to XLA; all FLOPs
    # happen inside the single Pallas kernel.
    x = jnp.transpose(state, (0, 2, 3, 1)).reshape(B, H, W * C)
    x = x.astype(meta["compute_dtype"])

    weights = (d1, t1, bb1, d2, t2, bb2, t3, bb3, wf1s, bf1m, wf2m, bf2m)

    def resident(a):          # whole array in VMEM, reused by every grid step
        nd = a.ndim
        return pl.BlockSpec(a.shape, lambda i: (0,) * nd)

    flops = 2 * B * meta["macs_per_image"]
    bytes_accessed = (x.size * x.dtype.itemsize
                      + meta["weight_bytes"] + B * a_pad * 4)

    out = pl.pallas_call(
        functools.partial(_dqn_kernel, layers=layers,
                          compute_dtype=meta["compute_dtype"]),
        out_shape=jax.ShapeDtypeStruct((B, 1, a_pad), jnp.float32),
        grid=(B,),
        in_specs=[pl.BlockSpec((1, H, W * C), lambda i: (i, 0, 0))]
                 + [resident(a) for a in weights],
        out_specs=pl.BlockSpec((1, 1, a_pad), lambda i: (i, 0, 0)),
        compiler_params=pltpu.CompilerParams(
            dimension_semantics=("parallel",)),      # v7x: one image per TC
        cost_estimate=pl.CostEstimate(
            flops=flops, transcendentals=0, bytes_accessed=bytes_accessed),
    )(x, *weights)

    return out.reshape(B, a_pad)[:, :meta["n_actions"]]


# ----------------------------------------------------------------------------
# Parameters (PyTorch layout) + one-time prep into kernel-friendly matrices
# ----------------------------------------------------------------------------
def init_params(key, input_dims, n_actions):
    C, H, W = input_dims
    H1, W1 = _conv_out(H, 8, 4), _conv_out(W, 8, 4)
    H2, W2 = _conv_out(H1, 4, 2), _conv_out(W1, 4, 2)
    H3, W3 = _conv_out(H2, 3, 1), _conv_out(W2, 3, 1)
    fc_in = 64 * H3 * W3

    ks = jax.random.split(key, 10)

    def unif(k, shape, fan_in):
        bound = 1.0 / math.sqrt(fan_in)
        return jax.random.uniform(k, shape, jnp.float32, -bound, bound)

    w1 = unif(ks[0], (32, C, 8, 8), C * 8 * 8)
    b1 = unif(ks[1], (32,), C * 8 * 8)
    w2 = unif(ks[2], (64, 32, 4, 4), 32 * 4 * 4)
    b2 = unif(ks[3], (64,), 32 * 4 * 4)
    w3 = unif(ks[4], (64, 64, 3, 3), 64 * 3 * 3)
    b3 = unif(ks[5], (64,), 64 * 3 * 3)
    wf1 = unif(ks[6], (512, fc_in), fc_in)
    bf1 = unif(ks[7], (512,), fc_in)
    wf2 = unif(ks[8], (n_actions, 512), 512)
    bf2 = unif(ks[9], (n_actions,), 512)
    return ((w1, b1), (w2, b2), (w3, b3), (wf1, bf1), (wf2, bf2))


def prep_params(params, input_dims, n_actions, compute_dtype=jnp.bfloat16):
    """One-time conversion of PyTorch-layout params into kernel form.

    Conv weights become per-kh block-Toeplitz matrices T[kh] of shape
    [W_in*Cin, OW*OC] (kw window + W-stride); a tiny 0/1 matrix D applies the
    H-stride.  fc1 is pre-split per conv3 output row (NHWC order); fc2 is
    zero-padded to a 128-lane output.
    """
    (w1, b1), (w2, b2), (w3, b3), (wf1, bf1), (wf2, bf2) = params
    C, H, W = input_dims
    H1, W1 = _conv_out(H, 8, 4), _conv_out(W, 8, 4)
    H2, W2 = _conv_out(H1, 4, 2), _conv_out(W1, 4, 2)
    H3, W3 = _conv_out(H2, 3, 1), _conv_out(W2, 3, 1)

    def toeplitz(w, w_in, stride):
        # w: [OC, IC, KH, KW] (PyTorch OIHW) -> T: [KH, W_in*IC, OW*OC] with
        # T[kh, w*IC+ic, ow*OC+oc] = w[oc, ic, kh, w - stride*ow] (0 if OOB).
        n_oc, n_ic, n_kh, n_kw = w.shape
        ow = _conv_out(w_in, n_kw, stride)
        sel = (np.arange(w_in)[None, :, None]
               == stride * np.arange(ow)[None, None, :]
               + np.arange(n_kw)[:, None, None]).astype(np.float32)
        wt = jnp.transpose(w, (2, 3, 1, 0))                   # [KH, KW, IC, OC]
        t = jnp.einsum("xwo,hxic->hwioc", jnp.asarray(sel), wt)
        return t.reshape(n_kh, w_in * n_ic, ow * n_oc).astype(compute_dtype)

    def decimation(oh, stride):
        span = stride * (oh - 1) + 1
        d = np.zeros((oh, span), np.float32)
        d[np.arange(oh), stride * np.arange(oh)] = 1.0
        return jnp.asarray(d, jnp.float32)

    def tiled_bias(b, ow):
        return jnp.tile(b, ow).reshape(1, -1).astype(jnp.float32)

    t1, d1, bb1 = toeplitz(w1, W, 4), decimation(H1, 4), tiled_bias(b1, W1)
    t2, d2, bb2 = toeplitz(w2, W1, 2), decimation(H2, 2), tiled_bias(b2, W2)
    t3, bb3 = toeplitz(w3, W2, 1), tiled_bias(b3, W3)

    # fc1: PyTorch expects an NCHW flatten of conv3's output; the kernel keeps
    # an [H3, W3*64] NHWC slab, so split the weight per spatial row:
    # wf1s[h, w*64 + c, :] = wf1[:, c*H3*W3 + h*W3 + w].
    wf1s = (jnp.transpose(wf1.reshape(512, 64, H3, W3), (2, 3, 1, 0))
            .reshape(H3, W3 * 64, 512).astype(compute_dtype))
    bf1m = bf1.reshape(1, 512).astype(jnp.float32)

    a_pad = ((n_actions + 127) // 128) * 128
    wf2m = jnp.zeros((512, a_pad), jnp.float32).at[:, :n_actions].set(wf2.T)
    wf2m = wf2m.astype(compute_dtype)
    bf2m = jnp.zeros((1, a_pad), jnp.float32).at[:, :n_actions].set(bf2[None, :])

    tensors = (d1, t1, bb1, d2, t2, bb2, t3, bb3, wf1s, bf1m, wf2m, bf2m)
    layers = ((8, 4, H1, W1, 32), (4, 2, H2, W2, 64), (3, 1, H3, W3, 64))

    # Cost-estimate bookkeeping (per image, as the kernel computes it).
    macs, w_in, ic = 0, W, C
    for (k, s, oh, ow, oc) in layers:
        span = s * (oh - 1) + 1
        macs += k * oh * (w_in * ic) * (ow * oc)     # block-Toeplitz matmuls
        if s > 1:
            macs += k * oh * span * (w_in * ic)      # row-decimation matmuls
        w_in, ic = ow, oc
    macs += H3 * (W3 * 64) * 512 + 512 * a_pad       # fc1 + fc2
    weight_bytes = sum(int(np.prod(a.shape)) * a.dtype.itemsize for a in tensors)

    meta = dict(input_dims=input_dims, n_actions=n_actions, a_pad=a_pad,
                layers=layers, macs_per_image=int(macs),
                weight_bytes=int(weight_bytes), compute_dtype=compute_dtype)
    return tensors, meta


# ----------------------------------------------------------------------------
# Pure-JAX reference (PyTorch semantics, full f32 precision)
# ----------------------------------------------------------------------------
def reference_forward(state, params):
    (w1, b1), (w2, b2), (w3, b3), (wf1, bf1), (wf2, bf2) = params
    dn = ("NCHW", "OIHW", "NCHW")
    hp = jax.lax.Precision.HIGHEST

    def conv_relu(x, w, b, stride):
        y = jax.lax.conv_general_dilated(
            x, w, (stride, stride), "VALID", dimension_numbers=dn, precision=hp)
        return jnp.maximum(y + b[None, :, None, None], 0.0)

    x = conv_relu(state, w1, b1, 4)
    x = conv_relu(x, w2, b2, 2)
    x = conv_relu(x, w3, b3, 1)
    x = x.reshape(x.shape[0], -1)  # PyTorch NCHW flatten
    x = jnp.maximum(jnp.dot(x, wf1.T, precision=hp) + bf1, 0.0)
    return jnp.dot(x, wf2.T, precision=hp) + bf2


# ----------------------------------------------------------------------------
if __name__ == "__main__":
    # Smallest spatial size the conv stack supports is 36x36.
    input_dims = (4, 36, 36)      # (C, H, W)
    B, n_actions = 2, 6

    key = jax.random.PRNGKey(0)
    k_state, k_params = jax.random.split(key)
    state = jax.random.normal(k_state, (B,) + input_dims, jnp.float32)

    params = init_params(k_params, input_dims, n_actions)
    tensors, meta = prep_params(params, input_dims, n_actions)

    fwd = jax.jit(functools.partial(dqn_forward, meta=meta))
    out = jax.block_until_ready(fwd(state, tensors))

    ref = reference_forward(state, params)
    assert out.shape == (B, n_actions), out.shape
    # bf16 weights/activations with f32 accumulation vs. an f32 HIGHEST ref.
    assert jnp.allclose(out, ref, atol=2e-2, rtol=2e-2), (out, ref)

    print("KERNEL_OK")
</pallas_src>

<mosaic_0001>
module attributes {stable_mosaic.version = 11 : i64} {
  func.func @_dqn_kernel(%arg0: i32, %arg1: memref<1x36x144xbf16, #tpu.memory_space<vmem>>, %arg2: memref<8x29xf32, #tpu.memory_space<vmem>>, %arg3: memref<8x144x256xbf16, #tpu.memory_space<vmem>>, %arg4: memref<1x256xf32, #tpu.memory_space<vmem>>, %arg5: memref<3x5xf32, #tpu.memory_space<vmem>>, %arg6: memref<4x256x192xbf16, #tpu.memory_space<vmem>>, %arg7: memref<1x192xf32, #tpu.memory_space<vmem>>, %arg8: memref<3x192x64xbf16, #tpu.memory_space<vmem>>, %arg9: memref<1x64xf32, #tpu.memory_space<vmem>>, %arg10: memref<1x64x512xbf16, #tpu.memory_space<vmem>>, %arg11: memref<1x512xf32, #tpu.memory_space<vmem>>, %arg12: memref<512x128xbf16, #tpu.memory_space<vmem>>, %arg13: memref<1x128xf32, #tpu.memory_space<vmem>>, %arg14: memref<1x1x128xf32, #tpu.memory_space<vmem>>) attributes {dimension_semantics = [#tpu.dimension_semantics<parallel>], iteration_bounds = array<i64: 2>, scalar_prefetch = 0 : i64, scratch_operands = 0 : i64, tpu.core_type = #tpu.core_type<tc>, window_params = [{transform_indices = @transform_0, window_bounds = array<i64: 1, 36, 144>}, {pipeline_mode = #tpu.pipeline_mode<synchronous>, transform_indices = @transform_1, window_bounds = array<i64: 8, 29>}, {pipeline_mode = #tpu.pipeline_mode<synchronous>, transform_indices = @transform_2, window_bounds = array<i64: 8, 144, 256>}, {pipeline_mode = #tpu.pipeline_mode<synchronous>, transform_indices = @transform_3, window_bounds = array<i64: 1, 256>}, {pipeline_mode = #tpu.pipeline_mode<synchronous>, transform_indices = @transform_4, window_bounds = array<i64: 3, 5>}, {pipeline_mode = #tpu.pipeline_mode<synchronous>, transform_indices = @transform_5, window_bounds = array<i64: 4, 256, 192>}, {pipeline_mode = #tpu.pipeline_mode<synchronous>, transform_indices = @transform_6, window_bounds = array<i64: 1, 192>}, {pipeline_mode = #tpu.pipeline_mode<synchronous>, transform_indices = @transform_7, window_bounds = array<i64: 3, 192, 64>}, {pipeline_mode = #tpu.pipeline_mode<synchronous>, transform_indices = @transform_8, window_bounds = array<i64: 1, 64>}, {pipeline_mode = #tpu.pipeline_mode<synchronous>, transform_indices = @transform_9, window_bounds = array<i64: 1, 64, 512>}, {pipeline_mode = #tpu.pipeline_mode<synchronous>, transform_indices = @transform_10, window_bounds = array<i64: 1, 512>}, {pipeline_mode = #tpu.pipeline_mode<synchronous>, transform_indices = @transform_11, window_bounds = array<i64: 512, 128>}, {pipeline_mode = #tpu.pipeline_mode<synchronous>, transform_indices = @transform_12, window_bounds = array<i64: 1, 128>}, {transform_indices = @transform_13, window_bounds = array<i64: 1, 1, 128>}]} {
    %c0 = arith.constant 0 : index
    %c0_0 = arith.constant 0 : index
    %c0_1 = arith.constant 0 : index
    %0 = vector.load %arg1[%c0, %c0_0, %c0_1] : memref<1x36x144xbf16, #tpu.memory_space<vmem>>, vector<1x36x144xbf16>
    %1 = vector.shape_cast %0 : vector<1x36x144xbf16> to vector<36x144xbf16>
    %2 = arith.extf %1 : vector<36x144xbf16> to vector<36x144xf32>
    %cst = arith.constant 0.000000e+00 : f32
    %3 = vector.broadcast %cst : f32 to vector<8x256xf32>
    %4 = vector.extract_strided_slice %2 {offsets = [0, 0], sizes = [29, 144], strides = [1, 1]} : vector<36x144xf32> to vector<29x144xf32>
    %c0_2 = arith.constant 0 : index
    %c0_3 = arith.constant 0 : index
    %5 = vector.load %arg2[%c0_2, %c0_3] : memref<8x29xf32, #tpu.memory_space<vmem>>, vector<8x29xf32>
    %cst_4 = arith.constant dense<0.000000e+00> : vector<8x144xf32>
    %6 = tpu.matmul %5, %4, %cst_4 {dimension_numbers = #tpu.dot_dimension_numbers<[1], [0], [0], [1], [0, 0, 1, 1], [], []>} : vector<8x29xf32>, vector<29x144xf32>, vector<8x144xf32> -> vector<8x144xf32>
    %7 = arith.truncf %6 : vector<8x144xf32> to vector<8x144xbf16>
    %c0_5 = arith.constant 0 : index
    %c0_6 = arith.constant 0 : index
    %c0_7 = arith.constant 0 : index
    %8 = vector.load %arg3[%c0_5, %c0_6, %c0_7] : memref<8x144x256xbf16, #tpu.memory_space<vmem>>, vector<1x144x256xbf16>
    %9 = vector.shape_cast %8 : vector<1x144x256xbf16> to vector<144x256xbf16>
    %cst_8 = arith.constant dense<0.000000e+00> : vector<8x256xf32>
    %10 = tpu.matmul %7, %9, %cst_8 {dimension_numbers = #tpu.dot_dimension_numbers<[1], [0], [0], [1], [0, 0, 1, 1], [], []>} : vector<8x144xbf16>, vector<144x256xbf16>, vector<8x256xf32> -> vector<8x256xf32>
    %11 = arith.addf %3, %10 : vector<8x256xf32>
    %12 = vector.extract_strided_slice %2 {offsets = [1, 0], sizes = [29, 144], strides = [1, 1]} : vector<36x144xf32> to vector<29x144xf32>
    %c0_9 = arith.constant 0 : index
    %c0_10 = arith.constant 0 : index
    %13 = vector.load %arg2[%c0_9, %c0_10] : memref<8x29xf32, #tpu.memory_space<vmem>>, vector<8x29xf32>
    %cst_11 = arith.constant dense<0.000000e+00> : vector<8x144xf32>
    %14 = tpu.matmul %13, %12, %cst_11 {dimension_numbers = #tpu.dot_dimension_numbers<[1], [0], [0], [1], [0, 0, 1, 1], [], []>} : vector<8x29xf32>, vector<29x144xf32>, vector<8x144xf32> -> vector<8x144xf32>
    %15 = arith.truncf %14 : vector<8x144xf32> to vector<8x144xbf16>
    %c1 = arith.constant 1 : index
    %c0_12 = arith.constant 0 : index
    %c0_13 = arith.constant 0 : index
    %16 = vector.load %arg3[%c1, %c0_12, %c0_13] : memref<8x144x256xbf16, #tpu.memory_space<vmem>>, vector<1x144x256xbf16>
    %17 = vector.shape_cast %16 : vector<1x144x256xbf16> to vector<144x256xbf16>
    %cst_14 = arith.constant dense<0.000000e+00> : vector<8x256xf32>
    %18 = tpu.matmul %15, %17, %cst_14 {dimension_numbers = #tpu.dot_dimension_numbers<[1], [0], [0], [1], [0, 0, 1, 1], [], []>} : vector<8x144xbf16>, vector<144x256xbf16>, vector<8x256xf32> -> vector<8x256xf32>
    %19 = arith.addf %11, %18 : vector<8x256xf32>
    %20 = vector.extract_strided_slice %2 {offsets = [2, 0], sizes = [29, 144], strides = [1, 1]} : vector<36x144xf32> to vector<29x144xf32>
    %c0_15 = arith.constant 0 : index
    %c0_16 = arith.constant 0 : index
    %21 = vector.load %arg2[%c0_15, %c0_16] : memref<8x29xf32, #tpu.memory_space<vmem>>, vector<8x29xf32>
    %cst_17 = arith.constant dense<0.000000e+00> : vector<8x144xf32>
    %22 = tpu.matmul %21, %20, %cst_17 {dimension_numbers = #tpu.dot_dimension_numbers<[1], [0], [0], [1], [0, 0, 1, 1], [], []>} : vector<8x29xf32>, vector<29x144xf32>, vector<8x144xf32> -> vector<8x144xf32>
    %23 = arith.truncf %22 : vector<8x144xf32> to vector<8x144xbf16>
    %c2 = arith.constant 2 : index
    %c0_18 = arith.constant 0 : index
    %c0_19 = arith.constant 0 : index
    %24 = vector.load %arg3[%c2, %c0_18, %c0_19] : memref<8x144x256xbf16, #tpu.memory_space<vmem>>, vector<1x144x256xbf16>
    %25 = vector.shape_cast %24 : vector<1x144x256xbf16> to vector<144x256xbf16>
    %cst_20 = arith.constant dense<0.000000e+00> : vector<8x256xf32>
    %26 = tpu.matmul %23, %25, %cst_20 {dimension_numbers = #tpu.dot_dimension_numbers<[1], [0], [0], [1], [0, 0, 1, 1], [], []>} : vector<8x144xbf16>, vector<144x256xbf16>, vector<8x256xf32> -> vector<8x256xf32>
    %27 = arith.addf %19, %26 : vector<8x256xf32>
    %28 = vector.extract_strided_slice %2 {offsets = [3, 0], sizes = [29, 144], strides = [1, 1]} : vector<36x144xf32> to vector<29x144xf32>
    %c0_21 = arith.constant 0 : index
    %c0_22 = arith.constant 0 : index
    %29 = vector.load %arg2[%c0_21, %c0_22] : memref<8x29xf32, #tpu.memory_space<vmem>>, vector<8x29xf32>
    %cst_23 = arith.constant dense<0.000000e+00> : vector<8x144xf32>
    %30 = tpu.matmul %29, %28, %cst_23 {dimension_numbers = #tpu.dot_dimension_numbers<[1], [0], [0], [1], [0, 0, 1, 1], [], []>} : vector<8x29xf32>, vector<29x144xf32>, vector<8x144xf32> -> vector<8x144xf32>
    %31 = arith.truncf %30 : vector<8x144xf32> to vector<8x144xbf16>
    %c3 = arith.constant 3 : index
    %c0_24 = arith.constant 0 : index
    %c0_25 = arith.constant 0 : index
    %32 = vector.load %arg3[%c3, %c0_24, %c0_25] : memref<8x144x256xbf16, #tpu.memory_space<vmem>>, vector<1x144x256xbf16>
    %33 = vector.shape_cast %32 : vector<1x144x256xbf16> to vector<144x256xbf16>
    %cst_26 = arith.constant dense<0.000000e+00> : vector<8x256xf32>
    %34 = tpu.matmul %31, %33, %cst_26 {dimension_numbers = #tpu.dot_dimension_numbers<[1], [0], [0], [1], [0, 0, 1, 1], [], []>} : vector<8x144xbf16>, vector<144x256xbf16>, vector<8x256xf32> -> vector<8x256xf32>
    %35 = arith.addf %27, %34 : vector<8x256xf32>
    %36 = vector.extract_strided_slice %2 {offsets = [4, 0], sizes = [29, 144], strides = [1, 1]} : vector<36x144xf32> to vector<29x144xf32>
    %c0_27 = arith.constant 0 : index
    %c0_28 = arith.constant 0 : index
    %37 = vector.load %arg2[%c0_27, %c0_28] : memref<8x29xf32, #tpu.memory_space<vmem>>, vector<8x29xf32>
    %cst_29 = arith.constant dense<0.000000e+00> : vector<8x144xf32>
    %38 = tpu.matmul %37, %36, %cst_29 {dimension_numbers = #tpu.dot_dimension_numbers<[1], [0], [0], [1], [0, 0, 1, 1], [], []>} : vector<8x29xf32>, vector<29x144xf32>, vector<8x144xf32> -> vector<8x144xf32>
    %39 = arith.truncf %38 : vector<8x144xf32> to vector<8x144xbf16>
    %c4 = arith.constant 4 : index
    %c0_30 = arith.constant 0 : index
    %c0_31 = arith.constant 0 : index
    %40 = vector.load %arg3[%c4, %c0_30, %c0_31] : memref<8x144x256xbf16, #tpu.memory_space<vmem>>, vector<1x144x256xbf16>
    %41 = vector.shape_cast %40 : vector<1x144x256xbf16> to vector<144x256xbf16>
    %cst_32 = arith.constant dense<0.000000e+00> : vector<8x256xf32>
    %42 = tpu.matmul %39, %41, %cst_32 {dimension_numbers = #tpu.dot_dimension_numbers<[1], [0], [0], [1], [0, 0, 1, 1], [], []>} : vector<8x144xbf16>, vector<144x256xbf16>, vector<8x256xf32> -> vector<8x256xf32>
    %43 = arith.addf %35, %42 : vector<8x256xf32>
    %44 = vector.extract_strided_slice %2 {offsets = [5, 0], sizes = [29, 144], strides = [1, 1]} : vector<36x144xf32> to vector<29x144xf32>
    %c0_33 = arith.constant 0 : index
    %c0_34 = arith.constant 0 : index
    %45 = vector.load %arg2[%c0_33, %c0_34] : memref<8x29xf32, #tpu.memory_space<vmem>>, vector<8x29xf32>
    %cst_35 = arith.constant dense<0.000000e+00> : vector<8x144xf32>
    %46 = tpu.matmul %45, %44, %cst_35 {dimension_numbers = #tpu.dot_dimension_numbers<[1], [0], [0], [1], [0, 0, 1, 1], [], []>} : vector<8x29xf32>, vector<29x144xf32>, vector<8x144xf32> -> vector<8x144xf32>
    %47 = arith.truncf %46 : vector<8x144xf32> to vector<8x144xbf16>
    %c5 = arith.constant 5 : index
    %c0_36 = arith.constant 0 : index
    %c0_37 = arith.constant 0 : index
    %48 = vector.load %arg3[%c5, %c0_36, %c0_37] : memref<8x144x256xbf16, #tpu.memory_space<vmem>>, vector<1x144x256xbf16>
    %49 = vector.shape_cast %48 : vector<1x144x256xbf16> to vector<144x256xbf16>
    %cst_38 = arith.constant dense<0.000000e+00> : vector<8x256xf32>
    %50 = tpu.matmul %47, %49, %cst_38 {dimension_numbers = #tpu.dot_dimension_numbers<[1], [0], [0], [1], [0, 0, 1, 1], [], []>} : vector<8x144xbf16>, vector<144x256xbf16>, vector<8x256xf32> -> vector<8x256xf32>
    %51 = arith.addf %43, %50 : vector<8x256xf32>
    %52 = vector.extract_strided_slice %2 {offsets = [6, 0], sizes = [29, 144], strides = [1, 1]} : vector<36x144xf32> to vector<29x144xf32>
    %c0_39 = arith.constant 0 : index
    %c0_40 = arith.constant 0 : index
    %53 = vector.load %arg2[%c0_39, %c0_40] : memref<8x29xf32, #tpu.memory_space<vmem>>, vector<8x29xf32>
    %cst_41 = arith.constant dense<0.000000e+00> : vector<8x144xf32>
    %54 = tpu.matmul %53, %52, %cst_41 {dimension_numbers = #tpu.dot_dimension_numbers<[1], [0], [0], [1], [0, 0, 1, 1], [], []>} : vector<8x29xf32>, vector<29x144xf32>, vector<8x144xf32> -> vector<8x144xf32>
    %55 = arith.truncf %54 : vector<8x144xf32> to vector<8x144xbf16>
    %c6 = arith.constant 6 : index
    %c0_42 = arith.constant 0 : index
    %c0_43 = arith.constant 0 : index
    %56 = vector.load %arg3[%c6, %c0_42, %c0_43] : memref<8x144x256xbf16, #tpu.memory_space<vmem>>, vector<1x144x256xbf16>
    %57 = vector.shape_cast %56 : vector<1x144x256xbf16> to vector<144x256xbf16>
    %cst_44 = arith.constant dense<0.000000e+00> : vector<8x256xf32>
    %58 = tpu.matmul %55, %57, %cst_44 {dimension_numbers = #tpu.dot_dimension_numbers<[1], [0], [0], [1], [0, 0, 1, 1], [], []>} : vector<8x144xbf16>, vector<144x256xbf16>, vector<8x256xf32> -> vector<8x256xf32>
    %59 = arith.addf %51, %58 : vector<8x256xf32>
    %60 = vector.extract_strided_slice %2 {offsets = [7, 0], sizes = [29, 144], strides = [1, 1]} : vector<36x144xf32> to vector<29x144xf32>
    %c0_45 = arith.constant 0 : index
    %c0_46 = arith.constant 0 : index
    %61 = vector.load %arg2[%c0_45, %c0_46] : memref<8x29xf32, #tpu.memory_space<vmem>>, vector<8x29xf32>
    %cst_47 = arith.constant dense<0.000000e+00> : vector<8x144xf32>
    %62 = tpu.matmul %61, %60, %cst_47 {dimension_numbers = #tpu.dot_dimension_numbers<[1], [0], [0], [1], [0, 0, 1, 1], [], []>} : vector<8x29xf32>, vector<29x144xf32>, vector<8x144xf32> -> vector<8x144xf32>
    %63 = arith.truncf %62 : vector<8x144xf32> to vector<8x144xbf16>
    %c7 = arith.constant 7 : index
    %c0_48 = arith.constant 0 : index
    %c0_49 = arith.constant 0 : index
    %64 = vector.load %arg3[%c7, %c0_48, %c0_49] : memref<8x144x256xbf16, #tpu.memory_space<vmem>>, vector<1x144x256xbf16>
    %65 = vector.shape_cast %64 : vector<1x144x256xbf16> to vector<144x256xbf16>
    %cst_50 = arith.constant dense<0.000000e+00> : vector<8x256xf32>
    %66 = tpu.matmul %63, %65, %cst_50 {dimension_numbers = #tpu.dot_dimension_numbers<[1], [0], [0], [1], [0, 0, 1, 1], [], []>} : vector<8x144xbf16>, vector<144x256xbf16>, vector<8x256xf32> -> vector<8x256xf32>
    %67 = arith.addf %59, %66 : vector<8x256xf32>
    %c0_51 = arith.constant 0 : index
    %c0_52 = arith.constant 0 : index
    %68 = vector.load %arg4[%c0_51, %c0_52] : memref<1x256xf32, #tpu.memory_space<vmem>>, vector<1x256xf32>
    %69 = vector.broadcast %68 : vector<1x256xf32> to vector<8x256xf32>
    %70 = arith.addf %67, %69 : vector<8x256xf32>
    %cst_53 = arith.constant 0.000000e+00 : f32
    %71 = vector.broadcast %cst_53 : f32 to vector<8x256xf32>
    %72 = arith.maximumf %70, %71 : vector<8x256xf32>
    %cst_54 = arith.constant 0.000000e+00 : f32
    %73 = vector.broadcast %cst_54 : f32 to vector<3x192xf32>
    %74 = vector.extract_strided_slice %72 {offsets = [0, 0], sizes = [5, 256], strides = [1, 1]} : vector<8x256xf32> to vector<5x256xf32>
    %c0_55 = arith.constant 0 : index
    %c0_56 = arith.constant 0 : index
    %75 = vector.load %arg5[%c0_55, %c0_56] : memref<3x5xf32, #tpu.memory_space<vmem>>, vector<3x5xf32>
    %cst_57 = arith.constant dense<0.000000e+00> : vector<3x256xf32>
    %76 = tpu.matmul %75, %74, %cst_57 {dimension_numbers = #tpu.dot_dimension_numbers<[1], [0], [0], [1], [0, 0, 1, 1], [], []>} : vector<3x5xf32>, vector<5x256xf32>, vector<3x256xf32> -> vector<3x256xf32>
    %77 = arith.truncf %76 : vector<3x256xf32> to vector<3x256xbf16>
    %c0_58 = arith.constant 0 : index
    %c0_59 = arith.constant 0 : index
    %c0_60 = arith.constant 0 : index
    %78 = vector.load %arg6[%c0_58, %c0_59, %c0_60] : memref<4x256x192xbf16, #tpu.memory_space<vmem>>, vector<1x256x192xbf16>
    %79 = vector.shape_cast %78 : vector<1x256x192xbf16> to vector<256x192xbf16>
    %cst_61 = arith.constant dense<0.000000e+00> : vector<3x192xf32>
    %80 = tpu.matmul %77, %79, %cst_61 {dimension_numbers = #tpu.dot_dimension_numbers<[1], [0], [0], [1], [0, 0, 1, 1], [], []>} : vector<3x256xbf16>, vector<256x192xbf16>, vector<3x192xf32> -> vector<3x192xf32>
    %81 = arith.addf %73, %80 : vector<3x192xf32>
    %82 = vector.extract_strided_slice %72 {offsets = [1, 0], sizes = [5, 256], strides = [1, 1]} : vector<8x256xf32> to vector<5x256xf32>
    %c0_62 = arith.constant 0 : index
    %c0_63 = arith.constant 0 : index
    %83 = vector.load %arg5[%c0_62, %c0_63] : memref<3x5xf32, #tpu.memory_space<vmem>>, vector<3x5xf32>
    %cst_64 = arith.constant dense<0.000000e+00> : vector<3x256xf32>
    %84 = tpu.matmul %83, %82, %cst_64 {dimension_numbers = #tpu.dot_dimension_numbers<[1], [0], [0], [1], [0, 0, 1, 1], [], []>} : vector<3x5xf32>, vector<5x256xf32>, vector<3x256xf32> -> vector<3x256xf32>
    %85 = arith.truncf %84 : vector<3x256xf32> to vector<3x256xbf16>
    %c1_65 = arith.constant 1 : index
    %c0_66 = arith.constant 0 : index
    %c0_67 = arith.constant 0 : index
    %86 = vector.load %arg6[%c1_65, %c0_66, %c0_67] : memref<4x256x192xbf16, #tpu.memory_space<vmem>>, vector<1x256x192xbf16>
    %87 = vector.shape_cast %86 : vector<1x256x192xbf16> to vector<256x192xbf16>
    %cst_68 = arith.constant dense<0.000000e+00> : vector<3x192xf32>
    %88 = tpu.matmul %85, %87, %cst_68 {dimension_numbers = #tpu.dot_dimension_numbers<[1], [0], [0], [1], [0, 0, 1, 1], [], []>} : vector<3x256xbf16>, vector<256x192xbf16>, vector<3x192xf32> -> vector<3x192xf32>
    %89 = arith.addf %81, %88 : vector<3x192xf32>
    %90 = vector.extract_strided_slice %72 {offsets = [2, 0], sizes = [5, 256], strides = [1, 1]} : vector<8x256xf32> to vector<5x256xf32>
    %c0_69 = arith.constant 0 : index
    %c0_70 = arith.constant 0 : index
    %91 = vector.load %arg5[%c0_69, %c0_70] : memref<3x5xf32, #tpu.memory_space<vmem>>, vector<3x5xf32>
    %cst_71 = arith.constant dense<0.000000e+00> : vector<3x256xf32>
    %92 = tpu.matmul %91, %90, %cst_71 {dimension_numbers = #tpu.dot_dimension_numbers<[1], [0], [0], [1], [0, 0, 1, 1], [], []>} : vector<3x5xf32>, vector<5x256xf32>, vector<3x256xf32> -> vector<3x256xf32>
    %93 = arith.truncf %92 : vector<3x256xf32> to vector<3x256xbf16>
    %c2_72 = arith.constant 2 : index
    %c0_73 = arith.constant 0 : index
    %c0_74 = arith.constant 0 : index
    %94 = vector.load %arg6[%c2_72, %c0_73, %c0_74] : memref<4x256x192xbf16, #tpu.memory_space<vmem>>, vector<1x256x192xbf16>
    %95 = vector.shape_cast %94 : vector<1x256x192xbf16> to vector<256x192xbf16>
    %cst_75 = arith.constant dense<0.000000e+00> : vector<3x192xf32>
    %96 = tpu.matmul %93, %95, %cst_75 {dimension_numbers = #tpu.dot_dimension_numbers<[1], [0], [0], [1], [0, 0, 1, 1], [], []>} : vector<3x256xbf16>, vector<256x192xbf16>, vector<3x192xf32> -> vector<3x192xf32>
    %97 = arith.addf %89, %96 : vector<3x192xf32>
    %98 = vector.extract_strided_slice %72 {offsets = [3, 0], sizes = [5, 256], strides = [1, 1]} : vector<8x256xf32> to vector<5x256xf32>
    %c0_76 = arith.constant 0 : index
    %c0_77 = arith.constant 0 : index
    %99 = vector.load %arg5[%c0_76, %c0_77] : memref<3x5xf32, #tpu.memory_space<vmem>>, vector<3x5xf32>
    %cst_78 = arith.constant dense<0.000000e+00> : vector<3x256xf32>
    %100 = tpu.matmul %99, %98, %cst_78 {dimension_numbers = #tpu.dot_dimension_numbers<[1], [0], [0], [1], [0, 0, 1, 1], [], []>} : vector<3x5xf32>, vector<5x256xf32>, vector<3x256xf32> -> vector<3x256xf32>
    %101 = arith.truncf %100 : vector<3x256xf32> to vector<3x256xbf16>
    %c3_79 = arith.constant 3 : index
    %c0_80 = arith.constant 0 : index
    %c0_81 = arith.constant 0 : index
    %102 = vector.load %arg6[%c3_79, %c0_80, %c0_81] : memref<4x256x192xbf16, #tpu.memory_space<vmem>>, vector<1x256x192xbf16>
    %103 = vector.shape_cast %102 : vector<1x256x192xbf16> to vector<256x192xbf16>
    %cst_82 = arith.constant dense<0.000000e+00> : vector<3x192xf32>
    %104 = tpu.matmul %101, %103, %cst_82 {dimension_numbers = #tpu.dot_dimension_numbers<[1], [0], [0], [1], [0, 0, 1, 1], [], []>} : vector<3x256xbf16>, vector<256x192xbf16>, vector<3x192xf32> -> vector<3x192xf32>
    %105 = arith.addf %97, %104 : vector<3x192xf32>
    %c0_83 = arith.constant 0 : index
    %c0_84 = arith.constant 0 : index
    %106 = vector.load %arg7[%c0_83, %c0_84] : memref<1x192xf32, #tpu.memory_space<vmem>>, vector<1x192xf32>
    %107 = vector.broadcast %106 : vector<1x192xf32> to vector<3x192xf32>
    %108 = arith.addf %105, %107 : vector<3x192xf32>
    %cst_85 = arith.constant 0.000000e+00 : f32
    %109 = vector.broadcast %cst_85 : f32 to vector<3x192xf32>
    %110 = arith.maximumf %108, %109 : vector<3x192xf32>
    %cst_86 = arith.constant 0.000000e+00 : f32
    %111 = vector.broadcast %cst_86 : f32 to vector<1x64xf32>
    %112 = vector.extract_strided_slice %110 {offsets = [0, 0], sizes = [1, 192], strides = [1, 1]} : vector<3x192xf32> to vector<1x192xf32>
    %113 = arith.truncf %112 : vector<1x192xf32> to vector<1x192xbf16>
    %c0_87 = arith.constant 0 : index
    %c0_88 = arith.constant 0 : index
    %c0_89 = arith.constant 0 : index
    %114 = vector.load %arg8[%c0_87, %c0_88, %c0_89] : memref<3x192x64xbf16, #tpu.memory_space<vmem>>, vector<1x192x64xbf16>
    %115 = vector.shape_cast %114 : vector<1x192x64xbf16> to vector<192x64xbf16>
    %cst_90 = arith.constant dense<0.000000e+00> : vector<1x64xf32>
    %116 = tpu.matmul %113, %115, %cst_90 {dimension_numbers = #tpu.dot_dimension_numbers<[1], [0], [0], [1], [0, 0, 1, 1], [], []>} : vector<1x192xbf16>, vector<192x64xbf16>, vector<1x64xf32> -> vector<1x64xf32>
    %117 = arith.addf %111, %116 : vector<1x64xf32>
    %118 = vector.extract_strided_slice %110 {offsets = [1, 0], sizes = [1, 192], strides = [1, 1]} : vector<3x192xf32> to vector<1x192xf32>
    %119 = arith.truncf %118 : vector<1x192xf32> to vector<1x192xbf16>
    %c1_91 = arith.constant 1 : index
    %c0_92 = arith.constant 0 : index
    %c0_93 = arith.constant 0 : index
    %120 = vector.load %arg8[%c1_91, %c0_92, %c0_93] : memref<3x192x64xbf16, #tpu.memory_space<vmem>>, vector<1x192x64xbf16>
    %121 = vector.shape_cast %120 : vector<1x192x64xbf16> to vector<192x64xbf16>
    %cst_94 = arith.constant dense<0.000000e+00> : vector<1x64xf32>
    %122 = tpu.matmul %119, %121, %cst_94 {dimension_numbers = #tpu.dot_dimension_numbers<[1], [0], [0], [1], [0, 0, 1, 1], [], []>} : vector<1x192xbf16>, vector<192x64xbf16>, vector<1x64xf32> -> vector<1x64xf32>
    %123 = arith.addf %117, %122 : vector<1x64xf32>
    %124 = vector.extract_strided_slice %110 {offsets = [2, 0], sizes = [1, 192], strides = [1, 1]} : vector<3x192xf32> to vector<1x192xf32>
    %125 = arith.truncf %124 : vector<1x192xf32> to vector<1x192xbf16>
    %c2_95 = arith.constant 2 : index
    %c0_96 = arith.constant 0 : index
    %c0_97 = arith.constant 0 : index
    %126 = vector.load %arg8[%c2_95, %c0_96, %c0_97] : memref<3x192x64xbf16, #tpu.memory_space<vmem>>, vector<1x192x64xbf16>
    %127 = vector.shape_cast %126 : vector<1x192x64xbf16> to vector<192x64xbf16>
    %cst_98 = arith.constant dense<0.000000e+00> : vector<1x64xf32>
    %128 = tpu.matmul %125, %127, %cst_98 {dimension_numbers = #tpu.dot_dimension_numbers<[1], [0], [0], [1], [0, 0, 1, 1], [], []>} : vector<1x192xbf16>, vector<192x64xbf16>, vector<1x64xf32> -> vector<1x64xf32>
    %129 = arith.addf %123, %128 : vector<1x64xf32>
    %c0_99 = arith.constant 0 : index
    %c0_100 = arith.constant 0 : index
    %130 = vector.load %arg9[%c0_99, %c0_100] : memref<1x64xf32, #tpu.memory_space<vmem>>, vector<1x64xf32>
    %131 = arith.addf %129, %130 : vector<1x64xf32>
    %cst_101 = arith.constant 0.000000e+00 : f32
    %132 = vector.broadcast %cst_101 : f32 to vector<1x64xf32>
    %133 = arith.maximumf %131, %132 : vector<1x64xf32>
    %134 = arith.truncf %133 : vector<1x64xf32> to vector<1x64xbf16>
    %c0_102 = arith.constant 0 : index
    %c0_103 = arith.constant 0 : index
    %c0_104 = arith.constant 0 : index
    %135 = vector.load %arg10[%c0_102, %c0_103, %c0_104] : memref<1x64x512xbf16, #tpu.memory_space<vmem>>, vector<1x64x512xbf16>
    %136 = vector.shape_cast %135 : vector<1x64x512xbf16> to vector<64x512xbf16>
    %cst_105 = arith.constant dense<0.000000e+00> : vector<1x512xf32>
    %137 = tpu.matmul %134, %136, %cst_105 {dimension_numbers = #tpu.dot_dimension_numbers<[1], [0], [0], [1], [0, 0, 1, 1], [], []>} : vector<1x64xbf16>, vector<64x512xbf16>, vector<1x512xf32> -> vector<1x512xf32>
    %c0_106 = arith.constant 0 : index
    %c0_107 = arith.constant 0 : index
    %138 = vector.load %arg11[%c0_106, %c0_107] : memref<1x512xf32, #tpu.memory_space<vmem>>, vector<1x512xf32>
    %139 = arith.addf %137, %138 : vector<1x512xf32>
    %cst_108 = arith.constant 0.000000e+00 : f32
    %140 = vector.broadcast %cst_108 : f32 to vector<1x512xf32>
    %141 = arith.maximumf %139, %140 : vector<1x512xf32>
    %142 = arith.truncf %141 : vector<1x512xf32> to vector<1x512xbf16>
    %c0_109 = arith.constant 0 : index
    %c0_110 = arith.constant 0 : index
    %143 = vector.load %arg12[%c0_109, %c0_110] : memref<512x128xbf16, #tpu.memory_space<vmem>>, vector<512x128xbf16>
    %cst_111 = arith.constant dense<0.000000e+00> : vector<1x128xf32>
    %144 = tpu.matmul %142, %143, %cst_111 {dimension_numbers = #tpu.dot_dimension_numbers<[1], [0], [0], [1], [0, 0, 1, 1], [], []>} : vector<1x512xbf16>, vector<512x128xbf16>, vector<1x128xf32> -> vector<1x128xf32>
    %c0_112 = arith.constant 0 : index
    %c0_113 = arith.constant 0 : index
    %145 = vector.load %arg13[%c0_112, %c0_113] : memref<1x128xf32, #tpu.memory_space<vmem>>, vector<1x128xf32>
    %146 = arith.addf %144, %145 : vector<1x128xf32>
    %c0_114 = arith.constant 0 : index
    %c0_115 = arith.constant 0 : index
    %c0_116 = arith.constant 0 : index
    %147 = vector.load %arg14[%c0_114, %c0_115, %c0_116] : memref<1x1x128xf32, #tpu.memory_space<vmem>>, vector<1x1x128xf32>
    %148 = vector.shape_cast %147 : vector<1x1x128xf32> to vector<1x128xf32>
    %149 = vector.shape_cast %146 : vector<1x128xf32> to vector<1x1x128xf32>
    tpu.vector_store %arg14[%c0_114, %c0_115, %c0_116], %149 {strides = array<i32>} : memref<1x1x128xf32, #tpu.memory_space<vmem>>, vector<1x1x128xf32>,
    return
  }
  func.func @transform_0(%arg0: i32) -> (i32, i32, i32) {
    %c0_i32 = arith.constant 0 : i32
    %c0_i32_0 = arith.constant 0 : i32
    %c0_i32_1 = arith.constant 0 : i32
    return %arg0, %c0_i32, %c0_i32_0 : i32, i32, i32
  }
  func.func @transform_1(%arg0: i32) -> (i32, i32) {
    %c0_i32 = arith.constant 0 : i32
    %c0_i32_0 = arith.constant 0 : i32
    %c0_i32_1 = arith.constant 0 : i32
    return %c0_i32, %c0_i32_0 : i32, i32
  }
  func.func @transform_2(%arg0: i32) -> (i32, i32, i32) {
    %c0_i32 = arith.constant 0 : i32
    %c0_i32_0 = arith.constant 0 : i32
    %c0_i32_1 = arith.constant 0 : i32
    %c0_i32_2 = arith.constant 0 : i32
    return %c0_i32, %c0_i32_0, %c0_i32_1 : i32, i32, i32
  }
  func.func @transform_3(%arg0: i32) -> (i32, i32) {
    %c0_i32 = arith.constant 0 : i32
    %c0_i32_0 = arith.constant 0 : i32
    %c0_i32_1 = arith.constant 0 : i32
    return %c0_i32, %c0_i32_0 : i32, i32
  }
  func.func @transform_4(%arg0: i32) -> (i32, i32) {
    %c0_i32 = arith.constant 0 : i32
    %c0_i32_0 = arith.constant 0 : i32
    %c0_i32_1 = arith.constant 0 : i32
    return %c0_i32, %c0_i32_0 : i32, i32
  }
  func.func @transform_5(%arg0: i32) -> (i32, i32, i32) {
    %c0_i32 = arith.constant 0 : i32
    %c0_i32_0 = arith.constant 0 : i32
    %c0_i32_1 = arith.constant 0 : i32
    %c0_i32_2 = arith.constant 0 : i32
    return %c0_i32, %c0_i32_0, %c0_i32_1 : i32, i32, i32
  }
  func.func @transform_6(%arg0: i32) -> (i32, i32) {
    %c0_i32 = arith.constant 0 : i32
    %c0_i32_0 = arith.constant 0 : i32
    %c0_i32_1 = arith.constant 0 : i32
    return %c0_i32, %c0_i32_0 : i32, i32
  }
  func.func @transform_7(%arg0: i32) -> (i32, i32, i32) {
    %c0_i32 = arith.constant 0 : i32
    %c0_i32_0 = arith.constant 0 : i32
    %c0_i32_1 = arith.constant 0 : i32
    %c0_i32_2 = arith.constant 0 : i32
    return %c0_i32, %c0_i32_0, %c0_i32_1 : i32, i32, i32
  }
  func.func @transform_8(%arg0: i32) -> (i32, i32) {
    %c0_i32 = arith.constant 0 : i32
    %c0_i32_0 = arith.constant 0 : i32
    %c0_i32_1 = arith.constant 0 : i32
    return %c0_i32, %c0_i32_0 : i32, i32
  }
  func.func @transform_9(%arg0: i32) -> (i32, i32, i32) {
    %c0_i32 = arith.constant 0 : i32
    %c0_i32_0 = arith.constant 0 : i32
    %c0_i32_1 = arith.constant 0 : i32
    %c0_i32_2 = arith.constant 0 : i32
    return %c0_i32, %c0_i32_0, %c0_i32_1 : i32, i32, i32
  }
  func.func @transform_10(%arg0: i32) -> (i32, i32) {
    %c0_i32 = arith.constant 0 : i32
    %c0_i32_0 = arith.constant 0 : i32
    %c0_i32_1 = arith.constant 0 : i32
    return %c0_i32, %c0_i32_0 : i32, i32
  }
  func.func @transform_11(%arg0: i32) -> (i32, i32) {
    %c0_i32 = arith.constant 0 : i32
    %c0_i32_0 = arith.constant 0 : i32
    %c0_i32_1 = arith.constant 0 : i32
    return %c0_i32, %c0_i32_0 : i32, i32
  }
  func.func @transform_12(%arg0: i32) -> (i32, i32) {
    %c0_i32 = arith.constant 0 : i32
    %c0_i32_0 = arith.constant 0 : i32
    %c0_i32_1 = arith.constant 0 : i32
    return %c0_i32, %c0_i32_0 : i32, i32
  }
  func.func @transform_13(%arg0: i32) -> (i32, i32, i32) {
    %c0_i32 = arith.constant 0 : i32
    %c0_i32_0 = arith.constant 0 : i32
    %c0_i32_1 = arith.constant 0 : i32
    return %arg0, %c0_i32, %c0_i32_0 : i32, i32, i32
  }
}

</mosaic_0001>

<llo_original>
// kernel: dqn_forward.1
$region0: #{dqn_forward.1}
  #allocation0 [shape = 'u32[]', space=smem, size = 0x4, offset = 0x4, fixed_abs, tag = 'smem constant byte address 0x4 - core index']
  #allocation1 [shape = 'u32[144,128]{1,0:T(1,128)}', space=vmem, size = 0x12000, scoped, tag = 'internal scratch']
  %s0 = inlined_call_operand.vmem [shape: bf16[2,36,144], index: 0, kind: input, shape index: {}]
  %s1 = inlined_call_operand.vmem [shape: f32[8,29], index: 1, kind: input, shape index: {}]
  %s2 = inlined_call_operand.vmem [shape: bf16[8,144,256], index: 2, kind: input, shape index: {}]
  %s3 = inlined_call_operand.vmem [shape: f32[1,256], index: 3, kind: input, shape index: {}]
  %s4 = inlined_call_operand.vmem [shape: f32[3,5], index: 4, kind: input, shape index: {}]
  %s5 = inlined_call_operand.vmem [shape: bf16[4,256,192], index: 5, kind: input, shape index: {}]
  %s6 = inlined_call_operand.vmem [shape: f32[1,192], index: 6, kind: input, shape index: {}]
  %s7 = inlined_call_operand.vmem [shape: bf16[3,192,64], index: 7, kind: input, shape index: {}]
  %s8 = inlined_call_operand.vmem [shape: f32[1,64], index: 8, kind: input, shape index: {}]
  %s9 = inlined_call_operand.vmem [shape: bf16[1,64,512], index: 9, kind: input, shape index: {}]
  %s10 = inlined_call_operand.vmem [shape: f32[1,512], index: 10, kind: input, shape index: {}]
  %s11 = inlined_call_operand.vmem [shape: bf16[512,128], index: 11, kind: input, shape index: {}]
  %s12 = inlined_call_operand.vmem [shape: f32[1,128], index: 12, kind: input, shape index: {}]
  %s13 = inlined_call_operand.hbm [shape: f32[2,1,128], index: 13, kind: output, shape index: {}]
  %s14 = sld [smem:[#allocation0]]
  $region85: #{dqn_forward.1} parent=0
    _
  %s16 = ssub.s32 1, %s14
  %s17 = scalar_select 0, %s16, %s14
  $region1: #{dqn_forward.1} parent=0
    #allocation2 [shape = 'u8[1024]{0}', space=vmem, size = 0x400, scoped, tag = 'output window, operand 0']
    #allocation3 [shape = 's32[2]{0}', space=sflag, size = 0x8, scoped, tag = 'scoped memory for dqn_forward.1']
    %18 = vsyncpa [#allocation3], 0
    %s19 = scalar_lea.sflag [#allocation3], 1
    %20 = vsyncpa %s19, 0
    loop: start=0, step=1, limit=4
    $region2: #{dqn_forward.1} parent=1 // loop_pre_header
      _
    $region3: #{dqn_forward.1} parent=1 // loop_header
      %s22 = sphi 0, %s26
      %p23 = scmp.ge.s32.totalorder %s22, 4
      %s32 = sphi 0, %s34
      %s35 = sphi 0, %s32
      %s36 = sphi 0, %s35
      %s52 = sphi 0, %s36
      %s56 = sphi 0, %s56
      %s58 = sphi 0, %s56
      %s59 = sphi 0, %s58
      %s73 = sphi 0, %s59
      %s77 = sphi 0, %s77
      %s79 = sphi 0, %s77
      %s80 = sphi 0, %s79
      %s94 = sphi 0, %s80
      %s98 = sphi 0, %s98
      %s100 = sphi 0, %s98
      %s101 = sphi 0, %s100
      %s115 = sphi 0, %s101
      %s119 = sphi 0, %s119
      %s121 = sphi 0, %s119
      %s122 = sphi 0, %s121
      %s136 = sphi 0, %s122
      %s140 = sphi 0, %s140
      %s142 = sphi 0, %s140
      %s143 = sphi 0, %s142
      %s157 = sphi 0, %s143
      %s161 = sphi 0, %s161
      %s163 = sphi 0, %s161
      %s164 = sphi 0, %s163
      %s178 = sphi 0, %s164
      %s182 = sphi 0, %s182
      %s184 = sphi 0, %s182
      %s185 = sphi 0, %s184
      %s199 = sphi 0, %s185
      %s203 = sphi 0, %s203
      %s205 = sphi 0, %s203
      %s206 = sphi 0, %s205
      %s220 = sphi 0, %s206
      %s224 = sphi 0, %s224
      %s226 = sphi 0, %s224
      %s227 = sphi 0, %s226
      %s241 = sphi 0, %s227
      %s245 = sphi 0, %s245
      %s247 = sphi 0, %s245
      %s248 = sphi 0, %s247
      %s262 = sphi 0, %s248
      %s266 = sphi 0, %s266
      %s268 = sphi 0, %s266
      %s269 = sphi 0, %s268
      %s283 = sphi 0, %s269
      %s287 = sphi 0, %s287
      %s289 = sphi 0, %s287
      %s290 = sphi 0, %s289
      %s304 = sphi 0, %s290
      %s310 = sphi 0, %s312
      %s313 = sphi 0, %s310
      %s314 = sphi 0, %s313
      %s330 = sphi 0, %s314
    $region4: #{dqn_forward.1} parent=1 // loop_header_branch
      %25 = sbr.rel (%p23) target = $region8
    $region5: #{dqn_forward.1} parent=1 // loop_body
      %s27 = ssub.s32 %s22, 1
      %s28 = ssub.s32 %s22, 2
      %s29 = sadd.s32 %s22, 1
      %s30 = ssub.s32 %s22, %s29
      %p31 = scmp.eq.s32.totalorder %s30, 0
      %s33 = sadd.s32 %s32, 1
      %s34 = scalar_select %p31, %s32, %s33
      %p37 = pneg %p31
      %p38 = scmp.eq.s32.totalorder %s22, 1
      %p39 = por %p37, %p38
      %p40 = scmp.ne.s32.totalorder %s32, %s35
      %p41 = scmp.eq.s32.totalorder %s22, 0
      %p42 = por %p40, %p41
      %p43 = scmp.ne.s32.totalorder %s32, %s35
      %p44 = scmp.eq.s32.totalorder %s27, 1
      %p45 = por %p43, %p44
      %p46 = scmp.ne.s32.totalorder %s35, %s36
      %p47 = scmp.eq.s32.totalorder %s27, 0
      %p48 = por %p46, %p47
      %p49 = scmp.ne.s32.totalorder %s35, %s36
      %p50 = scmp.eq.s32.totalorder %s28, 1
      %p51 = por %p49, %p50
      %p53 = scmp.ne.s32.totalorder %s36, %s52
      %p54 = scmp.eq.s32.totalorder %s28, 0
      %p55 = por %p53, %p54
      %s57 = sadd.s32 %s56, 1
      %p60 = scmp.eq.s32.totalorder %s22, 1
      %p61 = scmp.ne.s32.totalorder %s56, %s58
      %p62 = scmp.eq.s32.totalorder %s22, 0
      %p63 = por %p61, %p62
      %p64 = scmp.ne.s32.totalorder %s56, %s58
      %p65 = scmp.eq.s32.totalorder %s27, 1
      %p66 = por %p64, %p65
      %p67 = scmp.ne.s32.totalorder %s58, %s59
      %p68 = scmp.eq.s32.totalorder %s27, 0
      %p69 = por %p67, %p68
      %p70 = scmp.ne.s32.totalorder %s58, %s59
      %p71 = scmp.eq.s32.totalorder %s28, 1
      %p72 = por %p70, %p71
      %p74 = scmp.ne.s32.totalorder %s59, %s73
      %p75 = scmp.eq.s32.totalorder %s28, 0
      %p76 = por %p74, %p75
      %s78 = sadd.s32 %s77, 1
      %p81 = scmp.eq.s32.totalorder %s22, 1
      %p82 = scmp.ne.s32.totalorder %s77, %s79
      %p83 = scmp.eq.s32.totalorder %s22, 0
      %p84 = por %p82, %p83
      %p85 = scmp.ne.s32.totalorder %s77, %s79
      %p86 = scmp.eq.s32.totalorder %s27, 1
      %p87 = por %p85, %p86
      %p88 = scmp.ne.s32.totalorder %s79, %s80
      %p89 = scmp.eq.s32.totalorder %s27, 0
      %p90 = por %p88, %p89
      %p91 = scmp.ne.s32.totalorder %s79, %s80
      %p92 = scmp.eq.s32.totalorder %s28, 1
      %p93 = por %p91, %p92
      %p95 = scmp.ne.s32.totalorder %s80, %s94
      %p96 = scmp.eq.s32.totalorder %s28, 0
      %p97 = por %p95, %p96
      %s99 = sadd.s32 %s98, 1
      %p102 = scmp.eq.s32.totalorder %s22, 1
      %p103 = scmp.ne.s32.totalorder %s98, %s100
      %p104 = scmp.eq.s32.totalorder %s22, 0
      %p105 = por %p103, %p104
      %p106 = scmp.ne.s32.totalorder %s98, %s100
      %p107 = scmp.eq.s32.totalorder %s27, 1
      %p108 = por %p106, %p107
      %p109 = scmp.ne.s32.totalorder %s100, %s101
      %p110 = scmp.eq.s32.totalorder %s27, 0
      %p111 = por %p109, %p110
      %p112 = scmp.ne.s32.totalorder %s100, %s101
      %p113 = scmp.eq.s32.totalorder %s28, 1
      %p114 = por %p112, %p113
      %p116 = scmp.ne.s32.totalorder %s101, %s115
      %p117 = scmp.eq.s32.totalorder %s28, 0
      %p118 = por %p116, %p117
      %s120 = sadd.s32 %s119, 1
      %p123 = scmp.eq.s32.totalorder %s22, 1
      %p124 = scmp.ne.s32.totalorder %s119, %s121
      %p125 = scmp.eq.s32.totalorder %s22, 0
      %p126 = por %p124, %p125
      %p127 = scmp.ne.s32.totalorder %s119, %s121
      %p128 = scmp.eq.s32.totalorder %s27, 1
      %p129 = por %p127, %p128
      %p130 = scmp.ne.s32.totalorder %s121, %s122
      %p131 = scmp.eq.s32.totalorder %s27, 0
      %p132 = por %p130, %p131
      %p133 = scmp.ne.s32.totalorder %s121, %s122
      %p134 = scmp.eq.s32.totalorder %s28, 1
      %p135 = por %p133, %p134
      %p137 = scmp.ne.s32.totalorder %s122, %s136
      %p138 = scmp.eq.s32.totalorder %s28, 0
      %p139 = por %p137, %p138
      %s141 = sadd.s32 %s140, 1
      %p144 = scmp.eq.s32.totalorder %s22, 1
      %p145 = scmp.ne.s32.totalorder %s140, %s142
      %p146 = scmp.eq.s32.totalorder %s22, 0
      %p147 = por %p145, %p146
      %p148 = scmp.ne.s32.totalorder %s140, %s142
      %p149 = scmp.eq.s32.totalorder %s27, 1
      %p150 = por %p148, %p149
      %p151 = scmp.ne.s32.totalorder %s142, %s143
      %p152 = scmp.eq.s32.totalorder %s27, 0
      %p153 = por %p151, %p152
      %p154 = scmp.ne.s32.totalorder %s142, %s143
      %p155 = scmp.eq.s32.totalorder %s28, 1
      %p156 = por %p154, %p155
      %p158 = scmp.ne.s32.totalorder %s143, %s157
      %p159 = scmp.eq.s32.totalorder %s28, 0
      %p160 = por %p158, %p159
      %s162 = sadd.s32 %s161, 1
      %p165 = scmp.eq.s32.totalorder %s22, 1
      %p166 = scmp.ne.s32.totalorder %s161, %s163
      %p167 = scmp.eq.s32.totalorder %s22, 0
      %p168 = por %p166, %p167
      %p169 = scmp.ne.s32.totalorder %s161, %s163
      %p170 = scmp.eq.s32.totalorder %s27, 1
      %p171 = por %p169, %p170
      %p172 = scmp.ne.s32.totalorder %s163, %s164
      %p173 = scmp.eq.s32.totalorder %s27, 0
      %p174 = por %p172, %p173
      %p175 = scmp.ne.s32.totalorder %s163, %s164
      %p176 = scmp.eq.s32.totalorder %s28, 1
      %p177 = por %p175, %p176
      %p179 = scmp.ne.s32.totalorder %s164, %s178
      %p180 = scmp.eq.s32.totalorder %s28, 0
      %p181 = por %p179, %p180
      %s183 = sadd.s32 %s182, 1
      %p186 = scmp.eq.s32.totalorder %s22, 1
      %p187 = scmp.ne.s32.totalorder %s182, %s184
      %p188 = scmp.eq.s32.totalorder %s22, 0
      %p189 = por %p187, %p188
      %p190 = scmp.ne.s32.totalorder %s182, %s184
      %p191 = scmp.eq.s32.totalorder %s27, 1
      %p192 = por %p190, %p191
      %p193 = scmp.ne.s32.totalorder %s184, %s185
      %p194 = scmp.eq.s32.totalorder %s27, 0
      %p195 = por %p193, %p194
      %p196 = scmp.ne.s32.totalorder %s184, %s185
      %p197 = scmp.eq.s32.totalorder %s28, 1
      %p198 = por %p196, %p197
      %p200 = scmp.ne.s32.totalorder %s185, %s199
      %p201 = scmp.eq.s32.totalorder %s28, 0
      %p202 = por %p200, %p201
      %s204 = sadd.s32 %s203, 1
      %p207 = scmp.eq.s32.totalorder %s22, 1
      %p208 = scmp.ne.s32.totalorder %s203, %s205
      %p209 = scmp.eq.s32.totalorder %s22, 0
      %p210 = por %p208, %p209
      %p211 = scmp.ne.s32.totalorder %s203, %s205
      %p212 = scmp.eq.s32.totalorder %s27, 1
      %p213 = por %p211, %p212
      %p214 = scmp.ne.s32.totalorder %s205, %s206
      %p215 = scmp.eq.s32.totalorder %s27, 0
      %p216 = por %p214, %p215
      %p217 = scmp.ne.s32.totalorder %s205, %s206
      %p218 = scmp.eq.s32.totalorder %s28, 1
      %p219 = por %p217, %p218
      %p221 = scmp.ne.s32.totalorder %s206, %s220
      %p222 = scmp.eq.s32.totalorder %s28, 0
      %p223 = por %p221, %p222
      %s225 = sadd.s32 %s224, 1
      %p228 = scmp.eq.s32.totalorder %s22, 1
      %p229 = scmp.ne.s32.totalorder %s224, %s226
      %p230 = scmp.eq.s32.totalorder %s22, 0
      %p231 = por %p229, %p230
      %p232 = scmp.ne.s32.totalorder %s224, %s226
      %p233 = scmp.eq.s32.totalorder %s27, 1
      %p234 = por %p232, %p233
      %p235 = scmp.ne.s32.totalorder %s226, %s227
      %p236 = scmp.eq.s32.totalorder %s27, 0
      %p237 = por %p235, %p236
      %p238 = scmp.ne.s32.totalorder %s226, %s227
      %p239 = scmp.eq.s32.totalorder %s28, 1
      %p240 = por %p238, %p239
      %p242 = scmp.ne.s32.totalorder %s227, %s241
      %p243 = scmp.eq.s32.totalorder %s28, 0
      %p244 = por %p242, %p243
      %s246 = sadd.s32 %s245, 1
      %p249 = scmp.eq.s32.totalorder %s22, 1
      %p250 = scmp.ne.s32.totalorder %s245, %s247
      %p251 = scmp.eq.s32.totalorder %s22, 0
      %p252 = por %p250, %p251
      %p253 = scmp.ne.s32.totalorder %s245, %s247
      %p254 = scmp.eq.s32.totalorder %s27, 1
      %p255 = por %p253, %p254
      %p256 = scmp.ne.s32.totalorder %s247, %s248
      %p257 = scmp.eq.s32.totalorder %s27, 0
      %p258 = por %p256, %p257
      %p259 = scmp.ne.s32.totalorder %s247, %s248
      %p260 = scmp.eq.s32.totalorder %s28, 1
      %p261 = por %p259, %p260
      %p263 = scmp.ne.s32.totalorder %s248, %s262
      %p264 = scmp.eq.s32.totalorder %s28, 0
      %p265 = por %p263, %p264
      %s267 = sadd.s32 %s266, 1
      %p270 = scmp.eq.s32.totalorder %s22, 1
      %p271 = scmp.ne.s32.totalorder %s266, %s268
      %p272 = scmp.eq.s32.totalorder %s22, 0
      %p273 = por %p271, %p272
      %p274 = scmp.ne.s32.totalorder %s266, %s268
      %p275 = scmp.eq.s32.totalorder %s27, 1
      %p276 = por %p274, %p275
      %p277 = scmp.ne.s32.totalorder %s268, %s269
      %p278 = scmp.eq.s32.totalorder %s27, 0
      %p279 = por %p277, %p278
      %p280 = scmp.ne.s32.totalorder %s268, %s269
      %p281 = scmp.eq.s32.totalorder %s28, 1
      %p282 = por %p280, %p281
      %p284 = scmp.ne.s32.totalorder %s269, %s283
      %p285 = scmp.eq.s32.totalorder %s28, 0
      %p286 = por %p284, %p285
      %s288 = sadd.s32 %s287, 1
      %p291 = scmp.eq.s32.totalorder %s22, 1
      %p292 = scmp.ne.s32.totalorder %s287, %s289
      %p293 = scmp.eq.s32.totalorder %s22, 0
      %p294 = por %p292, %p293
      %p295 = scmp.ne.s32.totalorder %s287, %s289
      %p296 = scmp.eq.s32.totalorder %s27, 1
      %p297 = por %p295, %p296
      %p298 = scmp.ne.s32.totalorder %s289, %s290
      %p299 = scmp.eq.s32.totalorder %s27, 0
      %p300 = por %p298, %p299
      %p301 = scmp.ne.s32.totalorder %s289, %s290
      %p302 = scmp.eq.s32.totalorder %s28, 1
      %p303 = por %p301, %p302
      %p305 = scmp.ne.s32.totalorder %s290, %s304
      %p306 = scmp.eq.s32.totalorder %s28, 0
      %p307 = por %p305, %p306
      %s308 = ssub.s32 %s22, %s29
      %p309 = scmp.eq.s32.totalorder %s308, 0
      %s311 = sadd.s32 %s310, 1
      %s312 = scalar_select %p309, %s310, %s311
      %p315 = pneg %p309
      %p316 = scmp.eq.s32.totalorder %s22, 1
      %p317 = por %p315, %p316
      %p318 = scmp.ne.s32.totalorder %s310, %s313
      %p319 = scmp.eq.s32.totalorder %s22, 0
      %p320 = por %p318, %p319
      %p321 = scmp.ne.s32.totalorder %s310, %s313
      %p322 = scmp.eq.s32.totalorder %s27, 1
      %p323 = por %p321, %p322
      %p324 = scmp.ne.s32.totalorder %s313, %s314
      %p325 = scmp.eq.s32.totalorder %s27, 0
      %p326 = por %p324, %p325
      %p327 = scmp.ne.s32.totalorder %s313, %s314
      %p328 = scmp.eq.s32.totalorder %s28, 1
      %p329 = por %p327, %p328
      %p331 = scmp.ne.s32.totalorder %s314, %s330
      %p332 = scmp.eq.s32.totalorder %s28, 0
      %p333 = por %p331, %p332
      %p334 = scmp.le.s32.totalorder 1, %s22
      %p335 = scmp.lt.s32.totalorder %s22, 3
      %p336 = pnand %p334, %p335
      %p337 = pneg %p336
      // Predicated region
      $region9: #{dqn_forward.1} parent=5 // pred_check
        _
      $region10: #{dqn_forward.1} parent=5 // pred_check_branch
        %339 = sbr.rel (%p336) target = $region12
      $region11: #{dqn_forward.1} parent=5 // pred_region
        %s340 = ssub.s32 %s22, 1
        // Predicated region
        $region13: #{dqn_forward.1} parent=11 // pred_check
          %p341 = pneg %p69
        $region14: #{dqn_forward.1} parent=11 // pred_check_branch
          %343 = sbr.rel (%p341) target = $region16
        $region15: #{dqn_forward.1} parent=11 // pred_region
          _
        $region16: #{dqn_forward.1} parent=11 // pred_fallthru
          _
        // Predicated region
        $region17: #{dqn_forward.1} parent=11 // pred_check
          %p344 = pneg %p90
        $region18: #{dqn_forward.1} parent=11 // pred_check_branch
          %346 = sbr.rel (%p344) target = $region20
        $region19: #{dqn_forward.1} parent=11 // pred_region
          _
        $region20: #{dqn_forward.1} parent=11 // pred_fallthru
          _
        // Predicated region
        $region21: #{dqn_forward.1} parent=11 // pred_check
          %p347 = pneg %p111
        $region22: #{dqn_forward.1} parent=11 // pred_check_branch
          %349 = sbr.rel (%p347) target = $region24
        $region23: #{dqn_forward.1} parent=11 // pred_region
          _
        $region24: #{dqn_forward.1} parent=11 // pred_fallthru
          _
        // Predicated region
        $region25: #{dqn_forward.1} parent=11 // pred_check
          %p350 = pneg %p132
        $region26: #{dqn_forward.1} parent=11 // pred_check_branch
          %352 = sbr.rel (%p350) target = $region28
        $region27: #{dqn_forward.1} parent=11 // pred_region
          _
        $region28: #{dqn_forward.1} parent=11 // pred_fallthru
          _
        // Predicated region
        $region29: #{dqn_forward.1} parent=11 // pred_check
          %p353 = pneg %p153
        $region30: #{dqn_forward.1} parent=11 // pred_check_branch
          %355 = sbr.rel (%p353) target = $region32
        $region31: #{dqn_forward.1} parent=11 // pred_region
          _
        $region32: #{dqn_forward.1} parent=11 // pred_fallthru
          _
        // Predicated region
        $region33: #{dqn_forward.1} parent=11 // pred_check
          %p356 = pneg %p174
        $region34: #{dqn_forward.1} parent=11 // pred_check_branch
          %358 = sbr.rel (%p356) target = $region36
        $region35: #{dqn_forward.1} parent=11 // pred_region
          _
        $region36: #{dqn_forward.1} parent=11 // pred_fallthru
          _
        // Predicated region
        $region37: #{dqn_forward.1} parent=11 // pred_check
          %p359 = pneg %p195
        $region38: #{dqn_forward.1} parent=11 // pred_check_branch
          %361 = sbr.rel (%p359) target = $region40
        $region39: #{dqn_forward.1} parent=11 // pred_region
          _
        $region40: #{dqn_forward.1} parent=11 // pred_fallthru
          _
        // Predicated region
        $region41: #{dqn_forward.1} parent=11 // pred_check
          %p362 = pneg %p216
        $region42: #{dqn_forward.1} parent=11 // pred_check_branch
          %364 = sbr.rel (%p362) target = $region44
        $region43: #{dqn_forward.1} parent=11 // pred_region
          _
        $region44: #{dqn_forward.1} parent=11 // pred_fallthru
          _
        // Predicated region
        $region45: #{dqn_forward.1} parent=11 // pred_check
          %p365 = pneg %p237
        $region46: #{dqn_forward.1} parent=11 // pred_check_branch
          %367 = sbr.rel (%p365) target = $region48
        $region47: #{dqn_forward.1} parent=11 // pred_region
          _
        $region48: #{dqn_forward.1} parent=11 // pred_fallthru
          _
        // Predicated region
        $region49: #{dqn_forward.1} parent=11 // pred_check
          %p368 = pneg %p258
        $region50: #{dqn_forward.1} parent=11 // pred_check_branch
          %370 = sbr.rel (%p368) target = $region52
        $region51: #{dqn_forward.1} parent=11 // pred_region
          _
        $region52: #{dqn_forward.1} parent=11 // pred_fallthru
          _
        // Predicated region
        $region53: #{dqn_forward.1} parent=11 // pred_check
          %p371 = pneg %p279
        $region54: #{dqn_forward.1} parent=11 // pred_check_branch
          %373 = sbr.rel (%p371) target = $region56
        $region55: #{dqn_forward.1} parent=11 // pred_region
          _
        $region56: #{dqn_forward.1} parent=11 // pred_fallthru
          _
        // Predicated region
        $region57: #{dqn_forward.1} parent=11 // pred_check
          %p374 = pneg %p300
        $region58: #{dqn_forward.1} parent=11 // pred_check_branch
          %376 = sbr.rel (%p374) target = $region60
        $region59: #{dqn_forward.1} parent=11 // pred_region
          _
        $region60: #{dqn_forward.1} parent=11 // pred_fallthru
          _
      $region12: #{dqn_forward.1} parent=5 // pred_fallthru
        _
      %p377 = scmp.lt.s32.totalorder %s22, 2
      // Predicated region
      $region61: #{dqn_forward.1} parent=5 // pred_check
        %p378 = pneg %p377
      $region62: #{dqn_forward.1} parent=5 // pred_check_branch
        %380 = sbr.rel (%p378) target = $region64
      $region63: #{dqn_forward.1} parent=5 // pred_region
        // Predicated region
        $region65: #{dqn_forward.1} parent=63 // pred_check
          %p381 = pneg %p42
        $region66: #{dqn_forward.1} parent=63 // pred_check_branch
          %383 = sbr.rel (%p381) target = $region68
        $region67: #{dqn_forward.1} parent=63 // pred_region
          %p384 = scmp.lt.s32.totalorder %s22, 1
          %s385 = scalar_select %p384, %s22, 1
          %s386 = smul.addr %s385, 10
          %s387 = smul.addr %s386, 4
          %s388 = scalar_lea.vmem %s0, %s387
        $region68: #{dqn_forward.1} parent=63 // pred_fallthru
          _
      $region64: #{dqn_forward.1} parent=5 // pred_fallthru
        _
      %p389 = scmp.le.s32.totalorder 1, %s22
      %p390 = scmp.lt.s32.totalorder %s22, 3
      %p391 = pnand %p389, %p390
      %p392 = pneg %p391
      // Predicated region
      $region69: #{dqn_forward.1} parent=5 // pred_check
        _
      $region70: #{dqn_forward.1} parent=5 // pred_check_branch
        %394 = sbr.rel (%p391) target = $region72
      $region71: #{dqn_forward.1} parent=5 // pred_region
        %s395 = ssub.s32 %s22, 1
        %p396 = scmp.lt.s32.totalorder %s27, 1
        %s397 = scalar_select %p396, %s27, 1
        %s398 = smul.addr %s397, 10
        %s399 = smul.addr %s398, 4
        %s400 = scalar_lea.vmem %s0, %s399
        %p401 = pneg %p48
        %p402 = pneg %p45
        %p403 = pneg %p69
        %p404 = pneg %p66
        %p405 = pneg %p90
        %p406 = pneg %p87
        %p407 = pneg %p111
        %p408 = pneg %p108
        %p409 = pneg %p132
        %p410 = pneg %p129
        %p411 = pneg %p153
        %p412 = pneg %p150
        %p413 = pneg %p174
        %p414 = pneg %p171
        %p415 = pneg %p195
        %p416 = pneg %p192
        %p417 = pneg %p216
        %p418 = pneg %p213
        %p419 = pneg %p237
        %p420 = pneg %p234
        %p421 = pneg %p258
        %p422 = pneg %p255
        %p423 = pneg %p279
        %p424 = pneg %p276
        %p425 = pneg %p300
        %p426 = pneg %p297
        %p427 = pneg %p326
        %p428 = pneg %p323
        %s429 = sand.u32 %s313, 1
        %s430 = scalar_lea.sflag [#allocation3], %s429
        %s431 = sand.u32 %s313, 1
        %s432 = scalar_lea.vmem [#allocation2], %s431
        %p433 = scmp.lt.s32.totalorder %s27, 1
        %s434 = scalar_select %p433, %s27, 1
        %s435 = smul.addr %s434, 10
        %s436 = smul.addr %s435, 4
        %s437 = scalar_lea.vmem %s0, %s436
        %v439 = vld [vmem:[%s437] sm:$0xff]
        %v440 = vld [vmem:[%s437 + $0x8] sm:$0xff]
        %v441 = vld [vmem:[%s437 + $0x10] sm:$0xff]
        %v442 = vld [vmem:[%s437 + $0x18] sm:$0xff]
        %v443 = vld [vmem:[%s437 + $0x20] sm:$0x33]
        %v444 = vunpack.c.l.bf16 %v439
        %v445 = vunpack.c.h.bf16 %v439
        %v446 = vunpack.c.l.bf16 %v440
        %v447 = vunpack.c.h.bf16 %v440
        %v448 = vunpack.c.l.bf16 %v441
        %v449 = vunpack.c.h.bf16 %v441
        %v450 = vunpack.c.l.bf16 %v442
        %v451 = vunpack.c.h.bf16 %v442
        %v452 = vunpack.c.l.bf16 %v443
        %v453 = vunpack.c.h.bf16 %v443
        %v454 = vld [vmem:[%s1] sm:$0xff]
        %vm455 = vcmask 236544
        %v457 = vsel %vm455, %v454, 0
        %vm459 = vcmask 1044480
        %v461 = vsel %vm459, %v450, 0
        %v464 = vsel %vm459, %v451, 0
        %466 = vmatprep.subr.mxu0 0.0
        %467 = vmatpush1.msra.mxu0 0.0
        %468 = vmatprep.subr.mxu0 0.0
        %469 = vmatpush1.msra.mxu0 0.0
        %470 = vmatprep.subr.mxu0 0.0
        %471 = vmatpush1.msra.mxu0 0.0
        %472 = vmatprep.subr.mxu0 0.0
        %473 = vmatpush1.msra.mxu0 0.0
        %474 = vmatprep.subr.mxu0 0.0
        %475 = vmatpush1.msra.mxu0 0.0
        %476 = vmatprep.subr.mxu0 0.0
        %477 = vmatpush1.msra.mxu0 0.0
        %478 = vmatprep.subr.mxu0 0.0
        %479 = vmatpush1.msra.mxu0 0.0
        %480 = vmatprep.subr.mxu0 0.0
        %481 = vmatpush1.msra.mxu0 0.0
        %482 = vmatprep.subr.mxu0 0.0
        %483 = vmatpush1.msra.mxu0 0.0
        %484 = vmatprep.subr.mxu0 0.0
        %485 = vmatpush1.msra.mxu0 0.0
        %486 = vmatprep.subr.mxu0 0.0
        %487 = vmatpush1.msra.mxu0 0.0
        %488 = vmatprep.subr.mxu0 0.0
        %489 = vmatpush1.msra.mxu0 0.0
        %490 = vmatprep.subr.mxu0 %v464
        %491 = vmatpush1.msra.mxu0 %v461
        %492 = vmatprep.subr.mxu0 %v449
        %493 = vmatpush1.msra.mxu0 %v448
        %494 = vmatprep.subr.mxu0 %v447
        %495 = vmatpush1.msra.mxu0 %v446
        %496 = vmatprep.subr.mxu0 %v445
        %497 = vmatpush1.msra.mxu0 %v444
        %498 = vmatprep.subr.mxu0 0.0
        %499 = vmatpush2.msra.mxu0 0.0
        %500 = vmatprep.subr.mxu0 0.0
        %501 = vmatpush2.msra.mxu0 0.0
        %502 = vmatprep.subr.mxu0 0.0
        %503 = vmatpush2.msra.mxu0 0.0
        %504 = vmatprep.subr.mxu0 0.0
        %505 = vmatpush2.msra.mxu0 0.0
        %506 = vmatprep.subr.mxu0 0.0
        %507 = vmatpush2.msra.mxu0 0.0
        %508 = vmatprep.subr.mxu0 0.0
        %509 = vmatpush2.msra.mxu0 0.0
        %510 = vmatprep.subr.mxu0 0.0
        %511 = vmatpush2.msra.mxu0 0.0
        %512 = vmatprep.subr.mxu0 0.0
        %513 = vmatpush2.msra.mxu0 0.0
        %514 = vmatprep.subr.mxu0 0.0
        %515 = vmatpush2.msra.mxu0 0.0
        %516 = vmatprep.subr.mxu0 0.0
        %517 = vmatpush2.msra.mxu0 0.0
        %518 = vmatprep.subr.mxu0 0.0
        %519 = vmatpush2.msra.mxu0 0.0
        %520 = vmatprep.subr.mxu0 0.0
        %521 = vmatpush2.msra.mxu0 0.0
        %522 = vmatprep.subr.mxu0 0.0
        %523 = vmatpush2.msra.mxu0 0.0
        %524 = vmatprep.subr.mxu0 0.0
        %525 = vmatpush2.msra.mxu0 0.0
        %526 = vmatprep.subr.mxu0 0.0
        %527 = vmatpush2.msra.mxu0 0.0
        %528 = vmatprep.subr.mxu0 0.0
        %529 = vmatpush2.msra.mxu0 0.0
        %530 = vmatprep.mubr.f32.mxu0 0.0
        %531 = vmatmul.mubr.f32.gmra.mxu0 %v457
        %v532 = vpop.f32.mrf.mxu0
        %v533 = vadd.f32 0.0, %v532
        %v534 = vpop.f32.mrf.mxu0
        %v535 = vadd.f32 0.0, %v534
        %536 = vdwg.mxu0
        %v537 = vpack.c.bf16 %v533, %v533
        %v538 = vpack.c.bf16 %v535, %v535
        %v539 = vld [vmem:[%s2] sm:$0xff]
        %v540 = vld [vmem:[%s2 + $0x8] sm:$0xff]
        %v541 = vld [vmem:[%s2 + $0x10] sm:$0xff]
        %v542 = vld [vmem:[%s2 + $0x18] sm:$0xff]
        %v543 = vld [vmem:[%s2 + $0x20] sm:$0xff]
        %v544 = vld [vmem:[%s2 + $0x28] sm:$0xff]
        %v545 = vld [vmem:[%s2 + $0x30] sm:$0xff]
        %v546 = vld [vmem:[%s2 + $0x38] sm:$0xff]
        %v547 = vld [vmem:[%s2 + $0x40] sm:$0xff]
        %v548 = vld [vmem:[%s2 + $0x48] sm:$0xff]
        %v549 = vld [vmem:[%s2 + $0x50] sm:$0xff]
        %v550 = vld [vmem:[%s2 + $0x58] sm:$0xff]
        %v551 = vld [vmem:[%s2 + $0x60] sm:$0xff]
        %v552 = vld [vmem:[%s2 + $0x68] sm:$0xff]
        %v553 = vld [vmem:[%s2 + $0x70] sm:$0xff]
        %v554 = vld [vmem:[%s2 + $0x78] sm:$0xff]
        %v555 = vld [vmem:[%s2 + $0x80] sm:$0xff]
        %v556 = vld [vmem:[%s2 + $0x88] sm:$0xff]
        %vm563 = vcmask 1046528
        %v564 = vrot.slane %v444, 1
        %v565 = vrot.slane %v446, 1
        %v566 = vsel %vm563, %v564, %v565
        %v567 = vrot.slane %v445, 1
        %v568 = vrot.slane %v447, 1
        %v569 = vsel %vm563, %v567, %v568
        %v570 = vrot.slane %v448, 1
        %v571 = vsel %vm563, %v565, %v570
        %v572 = vrot.slane %v449, 1
        %v573 = vsel %vm563, %v568, %v572
        %v574 = vrot.slane %v450, 1
        %v575 = vsel %vm563, %v570, %v574
        %v576 = vrot.slane %v451, 1
        %v577 = vsel %vm563, %v572, %v576
        %v584 = vsel %vm459, %v574, 0
        %v586 = vsel %vm459, %v576, 0
        %588 = vmatprep.subr.mxu0 0.0
        %589 = vmatpush1.msra.mxu0 0.0
        %590 = vmatprep.subr.mxu0 0.0
        %591 = vmatpush1.msra.mxu0 0.0
        %592 = vmatprep.subr.mxu0 0.0
        %593 = vmatpush1.msra.mxu0 0.0
        %594 = vmatprep.subr.mxu0 0.0
        %595 = vmatpush1.msra.mxu0 0.0
        %596 = vmatprep.subr.mxu0 0.0
        %597 = vmatpush1.msra.mxu0 0.0
        %598 = vmatprep.subr.mxu0 0.0
        %599 = vmatpush1.msra.mxu0 0.0
        %600 = vmatprep.subr.mxu0 0.0
        %601 = vmatpush1.msra.mxu0 0.0
        %602 = vmatprep.subr.mxu0 0.0
        %603 = vmatpush1.msra.mxu0 0.0
        %604 = vmatprep.subr.mxu0 0.0
        %605 = vmatpush1.msra.mxu0 0.0
        %606 = vmatprep.subr.mxu0 0.0
        %607 = vmatpush1.msra.mxu0 0.0
        %608 = vmatprep.subr.mxu0 0.0
        %609 = vmatpush1.msra.mxu0 0.0
        %610 = vmatprep.subr.mxu0 0.0
        %611 = vmatpush1.msra.mxu0 0.0
        %612 = vmatprep.subr.mxu0 %v586
        %613 = vmatpush1.msra.mxu0 %v584
        %614 = vmatprep.subr.mxu0 %v577
        %615 = vmatpush1.msra.mxu0 %v575
        %616 = vmatprep.subr.mxu0 %v573
        %617 = vmatpush1.msra.mxu0 %v571
        %618 = vmatprep.subr.mxu0 %v569
        %619 = vmatpush1.msra.mxu0 %v566
        %620 = vmatprep.subr.mxu0 0.0
        %621 = vmatpush2.msra.mxu0 0.0
        %622 = vmatprep.subr.mxu0 0.0
        %623 = vmatpush2.msra.mxu0 0.0
        %624 = vmatprep.subr.mxu0 0.0
        %625 = vmatpush2.msra.mxu0 0.0
        %626 = vmatprep.subr.mxu0 0.0
        %627 = vmatpush2.msra.mxu0 0.0
        %628 = vmatprep.subr.mxu0 0.0
        %629 = vmatpush2.msra.mxu0 0.0
        %630 = vmatprep.subr.mxu0 0.0
        %631 = vmatpush2.msra.mxu0 0.0
        %632 = vmatprep.subr.mxu0 0.0
        %633 = vmatpush2.msra.mxu0 0.0
        %634 = vmatprep.subr.mxu0 0.0
        %635 = vmatpush2.msra.mxu0 0.0
        %636 = vmatprep.subr.mxu0 0.0
        %637 = vmatpush2.msra.mxu0 0.0
        %638 = vmatprep.subr.mxu0 0.0
        %639 = vmatpush2.msra.mxu0 0.0
        %640 = vmatprep.subr.mxu0 0.0
        %641 = vmatpush2.msra.mxu0 0.0
        %642 = vmatprep.subr.mxu0 0.0
        %643 = vmatpush2.msra.mxu0 0.0
        %644 = vmatprep.subr.mxu0 0.0
        %645 = vmatpush2.msra.mxu0 0.0
        %646 = vmatprep.subr.mxu0 0.0
        %647 = vmatpush2.msra.mxu0 0.0
        %648 = vmatprep.subr.mxu0 0.0
        %649 = vmatpush2.msra.mxu0 0.0
        %650 = vmatprep.subr.mxu0 0.0
        %651 = vmatpush2.msra.mxu0 0.0
        %652 = vmatprep.mubr.f32.mxu0 0.0
        %653 = vmatmul.mubr.f32.gmra.mxu0 %v457
        %v654 = vpop.f32.mrf.mxu0
        %v655 = vadd.f32 0.0, %v654
        %v656 = vpop.f32.mrf.mxu0
        %v657 = vadd.f32 0.0, %v656
        %658 = vdwg.mxu0
        %v659 = vpack.c.bf16 %v655, %v655
        %v660 = vpack.c.bf16 %v657, %v657
        %s661 = scalar_lea.vmem %s2, 144
        %v662 = vld [vmem:[%s661] sm:$0xff]
        %v663 = vld [vmem:[%s661 + $0x8] sm:$0xff]
        %v664 = vld [vmem:[%s661 + $0x10] sm:$0xff]
        %v665 = vld [vmem:[%s661 + $0x18] sm:$0xff]
        %v666 = vld [vmem:[%s661 + $0x20] sm:$0xff]
        %v667 = vld [vmem:[%s661 + $0x28] sm:$0xff]
        %v668 = vld [vmem:[%s661 + $0x30] sm:$0xff]
        %v669 = vld [vmem:[%s661 + $0x38] sm:$0xff]
        %v670 = vld [vmem:[%s661 + $0x40] sm:$0xff]
        %v671 = vld [vmem:[%s661 + $0x48] sm:$0xff]
        %v672 = vld [vmem:[%s661 + $0x50] sm:$0xff]
        %v673 = vld [vmem:[%s661 + $0x58] sm:$0xff]
        %v674 = vld [vmem:[%s661 + $0x60] sm:$0xff]
        %v675 = vld [vmem:[%s661 + $0x68] sm:$0xff]
        %v676 = vld [vmem:[%s661 + $0x70] sm:$0xff]
        %v677 = vld [vmem:[%s661 + $0x78] sm:$0xff]
        %v678 = vld [vmem:[%s661 + $0x80] sm:$0xff]
        %v679 = vld [vmem:[%s661 + $0x88] sm:$0xff]
        %v698 = vunpack.c.l.b16 %v662
        %v699 = vunpack.c.h.b16 %v662
        %v700 = vunpack.c.l.b16 %v663
        %v701 = vunpack.c.h.b16 %v663
        %v702 = vunpack.c.l.b16 %v664
        %v703 = vunpack.c.h.b16 %v664
        %v704 = vunpack.c.l.b16 %v665
        %v705 = vunpack.c.h.b16 %v665
        %v706 = vunpack.c.l.b16 %v666
        %v707 = vunpack.c.h.b16 %v666
        %v708 = vunpack.c.l.b16 %v667
        %v709 = vunpack.c.h.b16 %v667
        %v710 = vunpack.c.l.b16 %v668
        %v711 = vunpack.c.h.b16 %v668
        %v712 = vunpack.c.l.b16 %v669
        %v713 = vunpack.c.h.b16 %v669
        %v714 = vunpack.c.l.b16 %v670
        %v715 = vunpack.c.h.b16 %v670
        %v716 = vunpack.c.l.b16 %v671
        %v717 = vunpack.c.h.b16 %v671
        %v718 = vunpack.c.l.b16 %v672
        %v719 = vunpack.c.h.b16 %v672
        %v720 = vunpack.c.l.b16 %v673
        %v721 = vunpack.c.h.b16 %v673
        %v722 = vunpack.c.l.b16 %v674
        %v723 = vunpack.c.h.b16 %v674
        %v724 = vunpack.c.l.b16 %v675
        %v725 = vunpack.c.h.b16 %v675
        %v726 = vunpack.c.l.b16 %v676
        %v727 = vunpack.c.h.b16 %v676
        %v728 = vunpack.c.l.b16 %v677
        %v729 = vunpack.c.h.b16 %v677
        %v730 = vunpack.c.l.b16 %v678
        %v731 = vunpack.c.h.b16 %v678
        %v732 = vunpack.c.l.b16 %v679
        %v733 = vunpack.c.h.b16 %v679
        %v734 = vpack.c.b16 %v700, %v698
        %v735 = vpack.c.b16 %v701, %v699
        %v736 = vpack.c.b16 %v704, %v702
        %v737 = vpack.c.b16 %v705, %v703
        %v738 = vpack.c.b16 %v708, %v706
        %v739 = vpack.c.b16 %v709, %v707
        %v740 = vpack.c.b16 %v712, %v710
        %v741 = vpack.c.b16 %v713, %v711
        %v742 = vpack.c.b16 %v716, %v714
        %v743 = vpack.c.b16 %v717, %v715
        %v744 = vpack.c.b16 %v720, %v718
        %v745 = vpack.c.b16 %v721, %v719
        %v746 = vpack.c.b16 %v724, %v722
        %v747 = vpack.c.b16 %v725, %v723
        %v748 = vpack.c.b16 %v728, %v726
        %v749 = vpack.c.b16 %v729, %v727
        %v750 = vpack.c.b16 %v732, %v730
        %v751 = vpack.c.b16 %v733, %v731
        %vm770 = vcmask 130048
        %v772 = vsel %vm770, %v660, 0
        %774 = vmatprep.subr.bf16.mxu0 %v749
        %775 = vmatpush1.bf16.msra.mxu0 %v748
        %776 = vmatprep.subr.bf16.mxu0 %v747
        %777 = vmatpush1.bf16.msra.mxu0 %v746
        %778 = vmatprep.subr.bf16.mxu0 %v745
        %779 = vmatpush1.bf16.msra.mxu0 %v744
        %780 = vmatprep.subr.bf16.mxu0 %v743
        %781 = vmatpush1.bf16.msra.mxu0 %v742
        %782 = vmatprep.subr.bf16.mxu0 %v741
        %783 = vmatpush1.bf16.msra.mxu0 %v740
        %784 = vmatprep.subr.bf16.mxu0 %v739
        %785 = vmatpush1.bf16.msra.mxu0 %v738
        %786 = vmatprep.subr.bf16.mxu0 %v737
        %787 = vmatpush1.bf16.msra.mxu0 %v736
        %788 = vmatprep.subr.bf16.mxu0 %v735
        %789 = vmatpush1.bf16.msra.mxu0 %v734
        %790 = vmatprep.subr.bf16.mxu0 0
        %791 = vmatpush2.bf16.msra.mxu0 0
        %792 = vmatprep.subr.bf16.mxu0 0
        %793 = vmatpush2.bf16.msra.mxu0 0
        %794 = vmatprep.subr.bf16.mxu0 0
        %795 = vmatpush2.bf16.msra.mxu0 0
        %796 = vmatprep.subr.bf16.mxu0 0
        %797 = vmatpush2.bf16.msra.mxu0 0
        %798 = vmatprep.subr.bf16.mxu0 0
        %799 = vmatpush2.bf16.msra.mxu0 0
        %800 = vmatprep.subr.bf16.mxu0 0
        %801 = vmatpush2.bf16.msra.mxu0 0
        %802 = vmatprep.subr.bf16.mxu0 0
        %803 = vmatpush2.bf16.msra.mxu0 0
        %804 = vmatprep.subr.bf16.mxu0 %v751
        %805 = vmatpush2.bf16.msra.mxu0 %v750
        %806 = vmatprep.mubr.bf16.mxu0 %v772
        %807 = vmatmul.mubr.bf16.gmra.mxu0 %v659
        %v808 = vpop.f32.mrf.mxu0
        %v809 = vadd.f32 0.0, %v808
        %v810 = vpop.f32.mrf.mxu0
        %v811 = vadd.f32 0.0, %v810
        %v812 = vpop.f32.mrf.mxu0
        %v813 = vpop.f32.mrf.mxu0
        %814 = vdwg.mxu0
        %v833 = vunpack.c.l.b16 %v539
        %v834 = vunpack.c.h.b16 %v539
        %v835 = vunpack.c.l.b16 %v540
        %v836 = vunpack.c.h.b16 %v540
        %v837 = vunpack.c.l.b16 %v541
        %v838 = vunpack.c.h.b16 %v541
        %v839 = vunpack.c.l.b16 %v542
        %v840 = vunpack.c.h.b16 %v542
        %v841 = vunpack.c.l.b16 %v543
        %v842 = vunpack.c.h.b16 %v543
        %v843 = vunpack.c.l.b16 %v544
        %v844 = vunpack.c.h.b16 %v544
        %v845 = vunpack.c.l.b16 %v545
        %v846 = vunpack.c.h.b16 %v545
        %v847 = vunpack.c.l.b16 %v546
        %v848 = vunpack.c.h.b16 %v546
        %v849 = vunpack.c.l.b16 %v547
        %v850 = vunpack.c.h.b16 %v547
        %v851 = vunpack.c.l.b16 %v548
        %v852 = vunpack.c.h.b16 %v548
        %v853 = vunpack.c.l.b16 %v549
        %v854 = vunpack.c.h.b16 %v549
        %v855 = vunpack.c.l.b16 %v550
        %v856 = vunpack.c.h.b16 %v550
        %v857 = vunpack.c.l.b16 %v551
        %v858 = vunpack.c.h.b16 %v551
        %v859 = vunpack.c.l.b16 %v552
        %v860 = vunpack.c.h.b16 %v552
        %v861 = vunpack.c.l.b16 %v553
        %v862 = vunpack.c.h.b16 %v553
        %v863 = vunpack.c.l.b16 %v554
        %v864 = vunpack.c.h.b16 %v554
        %v865 = vunpack.c.l.b16 %v555
        %v866 = vunpack.c.h.b16 %v555
        %v867 = vunpack.c.l.b16 %v556
        %v868 = vunpack.c.h.b16 %v556
        %v869 = vpack.c.b16 %v835, %v833
        %v870 = vpack.c.b16 %v836, %v834
        %v871 = vpack.c.b16 %v839, %v837
        %v872 = vpack.c.b16 %v840, %v838
        %v873 = vpack.c.b16 %v843, %v841
        %v874 = vpack.c.b16 %v844, %v842
        %v875 = vpack.c.b16 %v847, %v845
        %v876 = vpack.c.b16 %v848, %v846
        %v877 = vpack.c.b16 %v851, %v849
        %v878 = vpack.c.b16 %v852, %v850
        %v879 = vpack.c.b16 %v855, %v853
        %v880 = vpack.c.b16 %v856, %v854
        %v881 = vpack.c.b16 %v859, %v857
        %v882 = vpack.c.b16 %v860, %v858
        %v883 = vpack.c.b16 %v863, %v861
        %v884 = vpack.c.b16 %v864, %v862
        %v885 = vpack.c.b16 %v867, %v865
        %v886 = vpack.c.b16 %v868, %v866
        %v906 = vsel %vm770, %v538, 0
        %908 = vmatprep.subr.bf16.mxu0 %v884
        %909 = vmatpush1.bf16.msra.mxu0 %v883
        %910 = vmatprep.subr.bf16.mxu0 %v882
        %911 = vmatpush1.bf16.msra.mxu0 %v881
        %912 = vmatprep.subr.bf16.mxu0 %v880
        %913 = vmatpush1.bf16.msra.mxu0 %v879
        %914 = vmatprep.subr.bf16.mxu0 %v878
        %915 = vmatpush1.bf16.msra.mxu0 %v877
        %916 = vmatprep.subr.bf16.mxu0 %v876
        %917 = vmatpush1.bf16.msra.mxu0 %v875
        %918 = vmatprep.subr.bf16.mxu0 %v874
        %919 = vmatpush1.bf16.msra.mxu0 %v873
        %920 = vmatprep.subr.bf16.mxu0 %v872
        %921 = vmatpush1.bf16.msra.mxu0 %v871
        %922 = vmatprep.subr.bf16.mxu0 %v870
        %923 = vmatpush1.bf16.msra.mxu0 %v869
        %924 = vmatprep.subr.bf16.mxu0 0
        %925 = vmatpush2.bf16.msra.mxu0 0
        %926 = vmatprep.subr.bf16.mxu0 0
        %927 = vmatpush2.bf16.msra.mxu0 0
        %928 = vmatprep.subr.bf16.mxu0 0
        %929 = vmatpush2.bf16.msra.mxu0 0
        %930 = vmatprep.subr.bf16.mxu0 0
        %931 = vmatpush2.bf16.msra.mxu0 0
        %932 = vmatprep.subr.bf16.mxu0 0
        %933 = vmatpush2.bf16.msra.mxu0 0
        %934 = vmatprep.subr.bf16.mxu0 0
        %935 = vmatpush2.bf16.msra.mxu0 0
        %936 = vmatprep.subr.bf16.mxu0 0
        %937 = vmatpush2.bf16.msra.mxu0 0
        %938 = vmatprep.subr.bf16.mxu0 %v886
        %939 = vmatpush2.bf16.msra.mxu0 %v885
        %940 = vmatprep.mubr.bf16.mxu0 %v906
        %941 = vmatmul.mubr.bf16.gmra.mxu0 %v537
        %v942 = vpop.f32.mrf.mxu0
        %v943 = vadd.f32 %v809, %v942
        %v944 = vpop.f32.mrf.mxu0
        %v945 = vadd.f32 %v811, %v944
        %v946 = vpop.f32.mrf.mxu0
        %v947 = vpop.f32.mrf.mxu0
        %948 = vdwg.mxu0
        %vm949 = vcmask 1045504
        %v950 = vrot.slane %v444, 2
        %v951 = vrot.slane %v446, 2
        %v952 = vsel %vm949, %v950, %v951
        %v953 = vrot.slane %v445, 2
        %v954 = vrot.slane %v447, 2
        %v955 = vsel %vm949, %v953, %v954
        %v956 = vrot.slane %v448, 2
        %v957 = vsel %vm949, %v951, %v956
        %v958 = vrot.slane %v449, 2
        %v959 = vsel %vm949, %v954, %v958
        %v960 = vrot.slane %v450, 2
        %v961 = vsel %vm949, %v956, %v960
        %v962 = vrot.slane %v451, 2
        %v963 = vsel %vm949, %v958, %v962
        %v970 = vsel %vm459, %v960, 0
        %v972 = vsel %vm459, %v962, 0
        %974 = vmatprep.subr.mxu0 0.0
        %975 = vmatpush1.msra.mxu0 0.0
        %976 = vmatprep.subr.mxu0 0.0
        %977 = vmatpush1.msra.mxu0 0.0
        %978 = vmatprep.subr.mxu0 0.0
        %979 = vmatpush1.msra.mxu0 0.0
        %980 = vmatprep.subr.mxu0 0.0
        %981 = vmatpush1.msra.mxu0 0.0
        %982 = vmatprep.subr.mxu0 0.0
        %983 = vmatpush1.msra.mxu0 0.0
        %984 = vmatprep.subr.mxu0 0.0
        %985 = vmatpush1.msra.mxu0 0.0
        %986 = vmatprep.subr.mxu0 0.0
        %987 = vmatpush1.msra.mxu0 0.0
        %988 = vmatprep.subr.mxu0 0.0
        %989 = vmatpush1.msra.mxu0 0.0
        %990 = vmatprep.subr.mxu0 0.0
        %991 = vmatpush1.msra.mxu0 0.0
        %992 = vmatprep.subr.mxu0 0.0
        %993 = vmatpush1.msra.mxu0 0.0
        %994 = vmatprep.subr.mxu0 0.0
        %995 = vmatpush1.msra.mxu0 0.0
        %996 = vmatprep.subr.mxu0 0.0
        %997 = vmatpush1.msra.mxu0 0.0
        %998 = vmatprep.subr.mxu0 %v972
        %999 = vmatpush1.msra.mxu0 %v970
        %1000 = vmatprep.subr.mxu0 %v963
        %1001 = vmatpush1.msra.mxu0 %v961
        %1002 = vmatprep.subr.mxu0 %v959
        %1003 = vmatpush1.msra.mxu0 %v957
        %1004 = vmatprep.subr.mxu0 %v955
        %1005 = vmatpush1.msra.mxu0 %v952
        %1006 = vmatprep.subr.mxu0 0.0
        %1007 = vmatpush2.msra.mxu0 0.0
        %1008 = vmatprep.subr.mxu0 0.0
        %1009 = vmatpush2.msra.mxu0 0.0
        %1010 = vmatprep.subr.mxu0 0.0
        %1011 = vmatpush2.msra.mxu0 0.0
        %1012 = vmatprep.subr.mxu0 0.0
        %1013 = vmatpush2.msra.mxu0 0.0
        %1014 = vmatprep.subr.mxu0 0.0
        %1015 = vmatpush2.msra.mxu0 0.0
        %1016 = vmatprep.subr.mxu0 0.0
        %1017 = vmatpush2.msra.mxu0 0.0
        %1018 = vmatprep.subr.mxu0 0.0
        %1019 = vmatpush2.msra.mxu0 0.0
        %1020 = vmatprep.subr.mxu0 0.0
        %1021 = vmatpush2.msra.mxu0 0.0
        %1022 = vmatprep.subr.mxu0 0.0
        %1023 = vmatpush2.msra.mxu0 0.0
        %1024 = vmatprep.subr.mxu0 0.0
        %1025 = vmatpush2.msra.mxu0 0.0
        %1026 = vmatprep.subr.mxu0 0.0
        %1027 = vmatpush2.msra.mxu0 0.0
        %1028 = vmatprep.subr.mxu0 0.0
        %1029 = vmatpush2.msra.mxu0 0.0
        %1030 = vmatprep.subr.mxu0 0.0
        %1031 = vmatpush2.msra.mxu0 0.0
        %1032 = vmatprep.subr.mxu0 0.0
        %1033 = vmatpush2.msra.mxu0 0.0
        %1034 = vmatprep.subr.mxu0 0.0
        %1035 = vmatpush2.msra.mxu0 0.0
        %1036 = vmatprep.subr.mxu0 0.0
        %1037 = vmatpush2.msra.mxu0 0.0
        %1038 = vmatprep.mubr.f32.mxu0 0.0
        %1039 = vmatmul.mubr.f32.gmra.mxu0 %v457
        %v1040 = vpop.f32.mrf.mxu0
        %v1041 = vadd.f32 0.0, %v1040
        %v1042 = vpop.f32.mrf.mxu0
        %v1043 = vadd.f32 0.0, %v1042
        %1044 = vdwg.mxu0
        %v1045 = vpack.c.bf16 %v1041, %v1041
        %v1046 = vpack.c.bf16 %v1043, %v1043
        %s1047 = scalar_lea.vmem %s2, 288
        %v1048 = vld [vmem:[%s1047] sm:$0xff]
        %v1049 = vld [vmem:[%s1047 + $0x8] sm:$0xff]
        %v1050 = vld [vmem:[%s1047 + $0x10] sm:$0xff]
        %v1051 = vld [vmem:[%s1047 + $0x18] sm:$0xff]
        %v1052 = vld [vmem:[%s1047 + $0x20] sm:$0xff]
        %v1053 = vld [vmem:[%s1047 + $0x28] sm:$0xff]
        %v1054 = vld [vmem:[%s1047 + $0x30] sm:$0xff]
        %v1055 = vld [vmem:[%s1047 + $0x38] sm:$0xff]
        %v1056 = vld [vmem:[%s1047 + $0x40] sm:$0xff]
        %v1057 = vld [vmem:[%s1047 + $0x48] sm:$0xff]
        %v1058 = vld [vmem:[%s1047 + $0x50] sm:$0xff]
        %v1059 = vld [vmem:[%s1047 + $0x58] sm:$0xff]
        %v1060 = vld [vmem:[%s1047 + $0x60] sm:$0xff]
        %v1061 = vld [vmem:[%s1047 + $0x68] sm:$0xff]
        %v1062 = vld [vmem:[%s1047 + $0x70] sm:$0xff]
        %v1063 = vld [vmem:[%s1047 + $0x78] sm:$0xff]
        %v1064 = vld [vmem:[%s1047 + $0x80] sm:$0xff]
        %v1065 = vld [vmem:[%s1047 + $0x88] sm:$0xff]
        %v1084 = vunpack.c.l.b16 %v1048
        %v1085 = vunpack.c.h.b16 %v1048
        %v1086 = vunpack.c.l.b16 %v1049
        %v1087 = vunpack.c.h.b16 %v1049
        %v1088 = vunpack.c.l.b16 %v1050
        %v1089 = vunpack.c.h.b16 %v1050
        %v1090 = vunpack.c.l.b16 %v1051
        %v1091 = vunpack.c.h.b16 %v1051
        %v1092 = vunpack.c.l.b16 %v1052
        %v1093 = vunpack.c.h.b16 %v1052
        %v1094 = vunpack.c.l.b16 %v1053
        %v1095 = vunpack.c.h.b16 %v1053
        %v1096 = vunpack.c.l.b16 %v1054
        %v1097 = vunpack.c.h.b16 %v1054
        %v1098 = vunpack.c.l.b16 %v1055
        %v1099 = vunpack.c.h.b16 %v1055
        %v1100 = vunpack.c.l.b16 %v1056
        %v1101 = vunpack.c.h.b16 %v1056
        %v1102 = vunpack.c.l.b16 %v1057
        %v1103 = vunpack.c.h.b16 %v1057
        %v1104 = vunpack.c.l.b16 %v1058
        %v1105 = vunpack.c.h.b16 %v1058
        %v1106 = vunpack.c.l.b16 %v1059
        %v1107 = vunpack.c.h.b16 %v1059
        %v1108 = vunpack.c.l.b16 %v1060
        %v1109 = vunpack.c.h.b16 %v1060
        %v1110 = vunpack.c.l.b16 %v1061
        %v1111 = vunpack.c.h.b16 %v1061
        %v1112 = vunpack.c.l.b16 %v1062
        %v1113 = vunpack.c.h.b16 %v1062
        %v1114 = vunpack.c.l.b16 %v1063
        %v1115 = vunpack.c.h.b16 %v1063
        %v1116 = vunpack.c.l.b16 %v1064
        %v1117 = vunpack.c.h.b16 %v1064
        %v1118 = vunpack.c.l.b16 %v1065
        %v1119 = vunpack.c.h.b16 %v1065
        %v1120 = vpack.c.b16 %v1086, %v1084
        %v1121 = vpack.c.b16 %v1087, %v1085
        %v1122 = vpack.c.b16 %v1090, %v1088
        %v1123 = vpack.c.b16 %v1091, %v1089
        %v1124 = vpack.c.b16 %v1094, %v1092
        %v1125 = vpack.c.b16 %v1095, %v1093
        %v1126 = vpack.c.b16 %v1098, %v1096
        %v1127 = vpack.c.b16 %v1099, %v1097
        %v1128 = vpack.c.b16 %v1102, %v1100
        %v1129 = vpack.c.b16 %v1103, %v1101
        %v1130 = vpack.c.b16 %v1106, %v1104
        %v1131 = vpack.c.b16 %v1107, %v1105
        %v1132 = vpack.c.b16 %v1110, %v1108
        %v1133 = vpack.c.b16 %v1111, %v1109
        %v1134 = vpack.c.b16 %v1114, %v1112
        %v1135 = vpack.c.b16 %v1115, %v1113
        %v1136 = vpack.c.b16 %v1118, %v1116
        %v1137 = vpack.c.b16 %v1119, %v1117
        %v1157 = vsel %vm770, %v1046, 0
        %1159 = vmatprep.subr.bf16.mxu0 %v1135
        %1160 = vmatpush1.bf16.msra.mxu0 %v1134
        %1161 = vmatprep.subr.bf16.mxu0 %v1133
        %1162 = vmatpush1.bf16.msra.mxu0 %v1132
        %1163 = vmatprep.subr.bf16.mxu0 %v1131
        %1164 = vmatpush1.bf16.msra.mxu0 %v1130
        %1165 = vmatprep.subr.bf16.mxu0 %v1129
        %1166 = vmatpush1.bf16.msra.mxu0 %v1128
        %1167 = vmatprep.subr.bf16.mxu0 %v1127
        %1168 = vmatpush1.bf16.msra.mxu0 %v1126
        %1169 = vmatprep.subr.bf16.mxu0 %v1125
        %1170 = vmatpush1.bf16.msra.mxu0 %v1124
        %1171 = vmatprep.subr.bf16.mxu0 %v1123
        %1172 = vmatpush1.bf16.msra.mxu0 %v1122
        %1173 = vmatprep.subr.bf16.mxu0 %v1121
        %1174 = vmatpush1.bf16.msra.mxu0 %v1120
        %1175 = vmatprep.subr.bf16.mxu0 0
        %1176 = vmatpush2.bf16.msra.mxu0 0
        %1177 = vmatprep.subr.bf16.mxu0 0
        %1178 = vmatpush2.bf16.msra.mxu0 0
        %1179 = vmatprep.subr.bf16.mxu0 0
        %1180 = vmatpush2.bf16.msra.mxu0 0
        %1181 = vmatprep.subr.bf16.mxu0 0
        %1182 = vmatpush2.bf16.msra.mxu0 0
        %1183 = vmatprep.subr.bf16.mxu0 0
        %1184 = vmatpush2.bf16.msra.mxu0 0
        %1185 = vmatprep.subr.bf16.mxu0 0
        %1186 = vmatpush2.bf16.msra.mxu0 0
        %1187 = vmatprep.subr.bf16.mxu0 0
        %1188 = vmatpush2.bf16.msra.mxu0 0
        %1189 = vmatprep.subr.bf16.mxu0 %v1137
        %1190 = vmatpush2.bf16.msra.mxu0 %v1136
        %1191 = vmatprep.mubr.bf16.mxu0 %v1157
        %1192 = vmatmul.mubr.bf16.gmra.mxu0 %v1045
        %v1193 = vpop.f32.mrf.mxu0
        %v1194 = vadd.f32 0.0, %v1193
        %v1195 = vpop.f32.mrf.mxu0
        %v1196 = vadd.f32 0.0, %v1195
        %v1197 = vpop.f32.mrf.mxu0
        %v1198 = vpop.f32.mrf.mxu0
        %1199 = vdwg.mxu0
        %v1200 = vadd.f32 %v943, %v1194
        %v1201 = vadd.f32 %v945, %v1196
        %v1202 = vrot.slane %v444, 3
        %v1203 = vrot.slane %v446, 3
        %v1204 = vsel %vm459, %v1202, %v1203
        %v1205 = vrot.slane %v445, 3
        %v1206 = vrot.slane %v447, 3
        %v1207 = vsel %vm459, %v1205, %v1206
        %v1208 = vrot.slane %v448, 3
        %v1209 = vsel %vm459, %v1203, %v1208
        %v1210 = vrot.slane %v449, 3
        %v1211 = vsel %vm459, %v1206, %v1210
        %v1212 = vrot.slane %v450, 3
        %v1213 = vsel %vm459, %v1208, %v1212
        %v1214 = vrot.slane %v451, 3
        %v1215 = vsel %vm459, %v1210, %v1214
        %v1222 = vsel %vm459, %v1212, 0
        %v1224 = vsel %vm459, %v1214, 0
        %1226 = vmatprep.subr.mxu0 0.0
        %1227 = vmatpush1.msra.mxu0 0.0
        %1228 = vmatprep.subr.mxu0 0.0
        %1229 = vmatpush1.msra.mxu0 0.0
        %1230 = vmatprep.subr.mxu0 0.0
        %1231 = vmatpush1.msra.mxu0 0.0
        %1232 = vmatprep.subr.mxu0 0.0
        %1233 = vmatpush1.msra.mxu0 0.0
        %1234 = vmatprep.subr.mxu0 0.0
        %1235 = vmatpush1.msra.mxu0 0.0
        %1236 = vmatprep.subr.mxu0 0.0
        %1237 = vmatpush1.msra.mxu0 0.0
        %1238 = vmatprep.subr.mxu0 0.0
        %1239 = vmatpush1.msra.mxu0 0.0
        %1240 = vmatprep.subr.mxu0 0.0
        %1241 = vmatpush1.msra.mxu0 0.0
        %1242 = vmatprep.subr.mxu0 0.0
        %1243 = vmatpush1.msra.mxu0 0.0
        %1244 = vmatprep.subr.mxu0 0.0
        %1245 = vmatpush1.msra.mxu0 0.0
        %1246 = vmatprep.subr.mxu0 0.0
        %1247 = vmatpush1.msra.mxu0 0.0
        %1248 = vmatprep.subr.mxu0 0.0
        %1249 = vmatpush1.msra.mxu0 0.0
        %1250 = vmatprep.subr.mxu0 %v1224
        %1251 = vmatpush1.msra.mxu0 %v1222
        %1252 = vmatprep.subr.mxu0 %v1215
        %1253 = vmatpush1.msra.mxu0 %v1213
        %1254 = vmatprep.subr.mxu0 %v1211
        %1255 = vmatpush1.msra.mxu0 %v1209
        %1256 = vmatprep.subr.mxu0 %v1207
        %1257 = vmatpush1.msra.mxu0 %v1204
        %1258 = vmatprep.subr.mxu0 0.0
        %1259 = vmatpush2.msra.mxu0 0.0
        %1260 = vmatprep.subr.mxu0 0.0
        %1261 = vmatpush2.msra.mxu0 0.0
        %1262 = vmatprep.subr.mxu0 0.0
        %1263 = vmatpush2.msra.mxu0 0.0
        %1264 = vmatprep.subr.mxu0 0.0
        %1265 = vmatpush2.msra.mxu0 0.0
        %1266 = vmatprep.subr.mxu0 0.0
        %1267 = vmatpush2.msra.mxu0 0.0
        %1268 = vmatprep.subr.mxu0 0.0
        %1269 = vmatpush2.msra.mxu0 0.0
        %1270 = vmatprep.subr.mxu0 0.0
        %1271 = vmatpush2.msra.mxu0 0.0
        %1272 = vmatprep.subr.mxu0 0.0
        %1273 = vmatpush2.msra.mxu0 0.0
        %1274 = vmatprep.subr.mxu0 0.0
        %1275 = vmatpush2.msra.mxu0 0.0
        %1276 = vmatprep.subr.mxu0 0.0
        %1277 = vmatpush2.msra.mxu0 0.0
        %1278 = vmatprep.subr.mxu0 0.0
        %1279 = vmatpush2.msra.mxu0 0.0
        %1280 = vmatprep.subr.mxu0 0.0
        %1281 = vmatpush2.msra.mxu0 0.0
        %1282 = vmatprep.subr.mxu0 0.0
        %1283 = vmatpush2.msra.mxu0 0.0
        %1284 = vmatprep.subr.mxu0 0.0
        %1285 = vmatpush2.msra.mxu0 0.0
        %1286 = vmatprep.subr.mxu0 0.0
        %1287 = vmatpush2.msra.mxu0 0.0
        %1288 = vmatprep.subr.mxu0 0.0
        %1289 = vmatpush2.msra.mxu0 0.0
        %1290 = vmatprep.mubr.f32.mxu0 0.0
        %1291 = vmatmul.mubr.f32.gmra.mxu0 %v457
        %v1292 = vpop.f32.mrf.mxu0
        %v1293 = vadd.f32 0.0, %v1292
        %v1294 = vpop.f32.mrf.mxu0
        %v1295 = vadd.f32 0.0, %v1294
        %1296 = vdwg.mxu0
        %v1297 = vpack.c.bf16 %v1293, %v1293
        %v1298 = vpack.c.bf16 %v1295, %v1295
        %s1299 = scalar_lea.vmem %s2, 432
        %v1300 = vld [vmem:[%s1299] sm:$0xff]
        %v1301 = vld [vmem:[%s1299 + $0x8] sm:$0xff]
        %v1302 = vld [vmem:[%s1299 + $0x10] sm:$0xff]
        %v1303 = vld [vmem:[%s1299 + $0x18] sm:$0xff]
        %v1304 = vld [vmem:[%s1299 + $0x20] sm:$0xff]
        %v1305 = vld [vmem:[%s1299 + $0x28] sm:$0xff]
        %v1306 = vld [vmem:[%s1299 + $0x30] sm:$0xff]
        %v1307 = vld [vmem:[%s1299 + $0x38] sm:$0xff]
        %v1308 = vld [vmem:[%s1299 + $0x40] sm:$0xff]
        %v1309 = vld [vmem:[%s1299 + $0x48] sm:$0xff]
        %v1310 = vld [vmem:[%s1299 + $0x50] sm:$0xff]
        %v1311 = vld [vmem:[%s1299 + $0x58] sm:$0xff]
        %v1312 = vld [vmem:[%s1299 + $0x60] sm:$0xff]
        %v1313 = vld [vmem:[%s1299 + $0x68] sm:$0xff]
        %v1314 = vld [vmem:[%s1299 + $0x70] sm:$0xff]
        %v1315 = vld [vmem:[%s1299 + $0x78] sm:$0xff]
        %v1316 = vld [vmem:[%s1299 + $0x80] sm:$0xff]
        %v1317 = vld [vmem:[%s1299 + $0x88] sm:$0xff]
        %v1336 = vunpack.c.l.b16 %v1300
        %v1337 = vunpack.c.h.b16 %v1300
        %v1338 = vunpack.c.l.b16 %v1301
        %v1339 = vunpack.c.h.b16 %v1301
        %v1340 = vunpack.c.l.b16 %v1302
        %v1341 = vunpack.c.h.b16 %v1302
        %v1342 = vunpack.c.l.b16 %v1303
        %v1343 = vunpack.c.h.b16 %v1303
        %v1344 = vunpack.c.l.b16 %v1304
        %v1345 = vunpack.c.h.b16 %v1304
        %v1346 = vunpack.c.l.b16 %v1305
        %v1347 = vunpack.c.h.b16 %v1305
        %v1348 = vunpack.c.l.b16 %v1306
        %v1349 = vunpack.c.h.b16 %v1306
        %v1350 = vunpack.c.l.b16 %v1307
        %v1351 = vunpack.c.h.b16 %v1307
        %v1352 = vunpack.c.l.b16 %v1308
        %v1353 = vunpack.c.h.b16 %v1308
        %v1354 = vunpack.c.l.b16 %v1309
        %v1355 = vunpack.c.h.b16 %v1309
        %v1356 = vunpack.c.l.b16 %v1310
        %v1357 = vunpack.c.h.b16 %v1310
        %v1358 = vunpack.c.l.b16 %v1311
        %v1359 = vunpack.c.h.b16 %v1311
        %v1360 = vunpack.c.l.b16 %v1312
        %v1361 = vunpack.c.h.b16 %v1312
        %v1362 = vunpack.c.l.b16 %v1313
        %v1363 = vunpack.c.h.b16 %v1313
        %v1364 = vunpack.c.l.b16 %v1314
        %v1365 = vunpack.c.h.b16 %v1314
        %v1366 = vunpack.c.l.b16 %v1315
        %v1367 = vunpack.c.h.b16 %v1315
        %v1368 = vunpack.c.l.b16 %v1316
        %v1369 = vunpack.c.h.b16 %v1316
        %v1370 = vunpack.c.l.b16 %v1317
        %v1371 = vunpack.c.h.b16 %v1317
        %v1372 = vpack.c.b16 %v1338, %v1336
        %v1373 = vpack.c.b16 %v1339, %v1337
        %v1374 = vpack.c.b16 %v1342, %v1340
        %v1375 = vpack.c.b16 %v1343, %v1341
        %v1376 = vpack.c.b16 %v1346, %v1344
        %v1377 = vpack.c.b16 %v1347, %v1345
        %v1378 = vpack.c.b16 %v1350, %v1348
        %v1379 = vpack.c.b16 %v1351, %v1349
        %v1380 = vpack.c.b16 %v1354, %v1352
        %v1381 = vpack.c.b16 %v1355, %v1353
        %v1382 = vpack.c.b16 %v1358, %v1356
        %v1383 = vpack.c.b16 %v1359, %v1357
        %v1384 = vpack.c.b16 %v1362, %v1360
        %v1385 = vpack.c.b16 %v1363, %v1361
        %v1386 = vpack.c.b16 %v1366, %v1364
        %v1387 = vpack.c.b16 %v1367, %v1365
        %v1388 = vpack.c.b16 %v1370, %v1368
        %v1389 = vpack.c.b16 %v1371, %v1369
        %v1409 = vsel %vm770, %v1298, 0
        %1411 = vmatprep.subr.bf16.mxu0 %v1387
        %1412 = vmatpush1.bf16.msra.mxu0 %v1386
        %1413 = vmatprep.subr.bf16.mxu0 %v1385
        %1414 = vmatpush1.bf16.msra.mxu0 %v1384
        %1415 = vmatprep.subr.bf16.mxu0 %v1383
        %1416 = vmatpush1.bf16.msra.mxu0 %v1382
        %1417 = vmatprep.subr.bf16.mxu0 %v1381
        %1418 = vmatpush1.bf16.msra.mxu0 %v1380
        %1419 = vmatprep.subr.bf16.mxu0 %v1379
        %1420 = vmatpush1.bf16.msra.mxu0 %v1378
        %1421 = vmatprep.subr.bf16.mxu0 %v1377
        %1422 = vmatpush1.bf16.msra.mxu0 %v1376
        %1423 = vmatprep.subr.bf16.mxu0 %v1375
        %1424 = vmatpush1.bf16.msra.mxu0 %v1374
        %1425 = vmatprep.subr.bf16.mxu0 %v1373
        %1426 = vmatpush1.bf16.msra.mxu0 %v1372
        %1427 = vmatprep.subr.bf16.mxu0 0
        %1428 = vmatpush2.bf16.msra.mxu0 0
        %1429 = vmatprep.subr.bf16.mxu0 0
        %1430 = vmatpush2.bf16.msra.mxu0 0
        %1431 = vmatprep.subr.bf16.mxu0 0
        %1432 = vmatpush2.bf16.msra.mxu0 0
        %1433 = vmatprep.subr.bf16.mxu0 0
        %1434 = vmatpush2.bf16.msra.mxu0 0
        %1435 = vmatprep.subr.bf16.mxu0 0
        %1436 = vmatpush2.bf16.msra.mxu0 0
        %1437 = vmatprep.subr.bf16.mxu0 0
        %1438 = vmatpush2.bf16.msra.mxu0 0
        %1439 = vmatprep.subr.bf16.mxu0 0
        %1440 = vmatpush2.bf16.msra.mxu0 0
        %1441 = vmatprep.subr.bf16.mxu0 %v1389
        %1442 = vmatpush2.bf16.msra.mxu0 %v1388
        %1443 = vmatprep.mubr.bf16.mxu0 %v1409
        %1444 = vmatmul.mubr.bf16.gmra.mxu0 %v1297
        %v1445 = vpop.f32.mrf.mxu0
        %v1446 = vadd.f32 0.0, %v1445
        %v1447 = vpop.f32.mrf.mxu0
        %v1448 = vadd.f32 0.0, %v1447
        %v1449 = vpop.f32.mrf.mxu0
        %v1450 = vpop.f32.mrf.mxu0
        %1451 = vdwg.mxu0
        %v1452 = vadd.f32 %v1200, %v1446
        %v1453 = vadd.f32 %v1201, %v1448
        %vm1456 = vcmask 1043456
        %v1457 = vrot.slane %v444, 4
        %v1458 = vrot.slane %v446, 4
        %v1459 = vsel %vm1456, %v1457, %v1458
        %v1460 = vrot.slane %v445, 4
        %v1461 = vrot.slane %v447, 4
        %v1462 = vsel %vm1456, %v1460, %v1461
        %v1463 = vrot.slane %v448, 4
        %v1464 = vsel %vm1456, %v1458, %v1463
        %v1465 = vrot.slane %v449, 4
        %v1466 = vsel %vm1456, %v1461, %v1465
        %v1467 = vrot.slane %v450, 4
        %v1468 = vsel %vm1456, %v1463, %v1467
        %v1469 = vrot.slane %v451, 4
        %v1470 = vsel %vm1456, %v1465, %v1469
        %v1471 = vrot.slane %v452, 4
        %v1472 = vsel %vm1456, %v1467, %v1471
        %v1473 = vrot.slane %v453, 4
        %v1474 = vsel %vm1456, %v1469, %v1473
        %v1481 = vsel %vm459, %v1472, 0
        %v1483 = vsel %vm459, %v1474, 0
        %1485 = vmatprep.subr.mxu0 0.0
        %1486 = vmatpush1.msra.mxu0 0.0
        %1487 = vmatprep.subr.mxu0 0.0
        %1488 = vmatpush1.msra.mxu0 0.0
        %1489 = vmatprep.subr.mxu0 0.0
        %1490 = vmatpush1.msra.mxu0 0.0
        %1491 = vmatprep.subr.mxu0 0.0
        %1492 = vmatpush1.msra.mxu0 0.0
        %1493 = vmatprep.subr.mxu0 0.0
        %1494 = vmatpush1.msra.mxu0 0.0
        %1495 = vmatprep.subr.mxu0 0.0
        %1496 = vmatpush1.msra.mxu0 0.0
        %1497 = vmatprep.subr.mxu0 0.0
        %1498 = vmatpush1.msra.mxu0 0.0
        %1499 = vmatprep.subr.mxu0 0.0
        %1500 = vmatpush1.msra.mxu0 0.0
        %1501 = vmatprep.subr.mxu0 0.0
        %1502 = vmatpush1.msra.mxu0 0.0
        %1503 = vmatprep.subr.mxu0 0.0
        %1504 = vmatpush1.msra.mxu0 0.0
        %1505 = vmatprep.subr.mxu0 0.0
        %1506 = vmatpush1.msra.mxu0 0.0
        %1507 = vmatprep.subr.mxu0 0.0
        %1508 = vmatpush1.msra.mxu0 0.0
        %1509 = vmatprep.subr.mxu0 %v1483
        %1510 = vmatpush1.msra.mxu0 %v1481
        %1511 = vmatprep.subr.mxu0 %v1470
        %1512 = vmatpush1.msra.mxu0 %v1468
        %1513 = vmatprep.subr.mxu0 %v1466
        %1514 = vmatpush1.msra.mxu0 %v1464
        %1515 = vmatprep.subr.mxu0 %v1462
        %1516 = vmatpush1.msra.mxu0 %v1459
        %1517 = vmatprep.subr.mxu0 0.0
        %1518 = vmatpush2.msra.mxu0 0.0
        %1519 = vmatprep.subr.mxu0 0.0
        %1520 = vmatpush2.msra.mxu0 0.0
        %1521 = vmatprep.subr.mxu0 0.0
        %1522 = vmatpush2.msra.mxu0 0.0
        %1523 = vmatprep.subr.mxu0 0.0
        %1524 = vmatpush2.msra.mxu0 0.0
        %1525 = vmatprep.subr.mxu0 0.0
        %1526 = vmatpush2.msra.mxu0 0.0
        %1527 = vmatprep.subr.mxu0 0.0
        %1528 = vmatpush2.msra.mxu0 0.0
        %1529 = vmatprep.subr.mxu0 0.0
        %1530 = vmatpush2.msra.mxu0 0.0
        %1531 = vmatprep.subr.mxu0 0.0
        %1532 = vmatpush2.msra.mxu0 0.0
        %1533 = vmatprep.subr.mxu0 0.0
        %1534 = vmatpush2.msra.mxu0 0.0
        %1535 = vmatprep.subr.mxu0 0.0
        %1536 = vmatpush2.msra.mxu0 0.0
        %1537 = vmatprep.subr.mxu0 0.0
        %1538 = vmatpush2.msra.mxu0 0.0
        %1539 = vmatprep.subr.mxu0 0.0
        %1540 = vmatpush2.msra.mxu0 0.0
        %1541 = vmatprep.subr.mxu0 0.0
        %1542 = vmatpush2.msra.mxu0 0.0
        %1543 = vmatprep.subr.mxu0 0.0
        %1544 = vmatpush2.msra.mxu0 0.0
        %1545 = vmatprep.subr.mxu0 0.0
        %1546 = vmatpush2.msra.mxu0 0.0
        %1547 = vmatprep.subr.mxu0 0.0
        %1548 = vmatpush2.msra.mxu0 0.0
        %1549 = vmatprep.mubr.f32.mxu0 0.0
        %1550 = vmatmul.mubr.f32.gmra.mxu0 %v457
        %v1551 = vpop.f32.mrf.mxu0
        %v1552 = vadd.f32 0.0, %v1551
        %v1553 = vpop.f32.mrf.mxu0
        %v1554 = vadd.f32 0.0, %v1553
        %1555 = vdwg.mxu0
        %v1556 = vpack.c.bf16 %v1552, %v1552
        %v1557 = vpack.c.bf16 %v1554, %v1554
        %s1558 = scalar_lea.vmem %s2, 576
        %v1559 = vld [vmem:[%s1558] sm:$0xff]
        %v1560 = vld [vmem:[%s1558 + $0x8] sm:$0xff]
        %v1561 = vld [vmem:[%s1558 + $0x10] sm:$0xff]
        %v1562 = vld [vmem:[%s1558 + $0x18] sm:$0xff]
        %v1563 = vld [vmem:[%s1558 + $0x20] sm:$0xff]
        %v1564 = vld [vmem:[%s1558 + $0x28] sm:$0xff]
        %v1565 = vld [vmem:[%s1558 + $0x30] sm:$0xff]
        %v1566 = vld [vmem:[%s1558 + $0x38] sm:$0xff]
        %v1567 = vld [vmem:[%s1558 + $0x40] sm:$0xff]
        %v1568 = vld [vmem:[%s1558 + $0x48] sm:$0xff]
        %v1569 = vld [vmem:[%s1558 + $0x50] sm:$0xff]
        %v1570 = vld [vmem:[%s1558 + $0x58] sm:$0xff]
        %v1571 = vld [vmem:[%s1558 + $0x60] sm:$0xff]
        %v1572 = vld [vmem:[%s1558 + $0x68] sm:$0xff]
        %v1573 = vld [vmem:[%s1558 + $0x70] sm:$0xff]
        %v1574 = vld [vmem:[%s1558 + $0x78] sm:$0xff]
        %v1575 = vld [vmem:[%s1558 + $0x80] sm:$0xff]
        %v1576 = vld [vmem:[%s1558 + $0x88] sm:$0xff]
        %v1595 = vunpack.c.l.b16 %v1559
        %v1596 = vunpack.c.h.b16 %v1559
        %v1597 = vunpack.c.l.b16 %v1560
        %v1598 = vunpack.c.h.b16 %v1560
        %v1599 = vunpack.c.l.b16 %v1561
        %v1600 = vunpack.c.h.b16 %v1561
        %v1601 = vunpack.c.l.b16 %v1562
        %v1602 = vunpack.c.h.b16 %v1562
        %v1603 = vunpack.c.l.b16 %v1563
        %v1604 = vunpack.c.h.b16 %v1563
        %v1605 = vunpack.c.l.b16 %v1564
        %v1606 = vunpack.c.h.b16 %v1564
        %v1607 = vunpack.c.l.b16 %v1565
        %v1608 = vunpack.c.h.b16 %v1565
        %v1609 = vunpack.c.l.b16 %v1566
        %v1610 = vunpack.c.h.b16 %v1566
        %v1611 = vunpack.c.l.b16 %v1567
        %v1612 = vunpack.c.h.b16 %v1567
        %v1613 = vunpack.c.l.b16 %v1568
        %v1614 = vunpack.c.h.b16 %v1568
        %v1615 = vunpack.c.l.b16 %v1569
        %v1616 = vunpack.c.h.b16 %v1569
        %v1617 = vunpack.c.l.b16 %v1570
        %v1618 = vunpack.c.h.b16 %v1570
        %v1619 = vunpack.c.l.b16 %v1571
        %v1620 = vunpack.c.h.b16 %v1571
        %v1621 = vunpack.c.l.b16 %v1572
        %v1622 = vunpack.c.h.b16 %v1572
        %v1623 = vunpack.c.l.b16 %v1573
        %v1624 = vunpack.c.h.b16 %v1573
        %v1625 = vunpack.c.l.b16 %v1574
        %v1626 = vunpack.c.h.b16 %v1574
        %v1627 = vunpack.c.l.b16 %v1575
        %v1628 = vunpack.c.h.b16 %v1575
        %v1629 = vunpack.c.l.b16 %v1576
        %v1630 = vunpack.c.h.b16 %v1576
        %v1631 = vpack.c.b16 %v1597, %v1595
        %v1632 = vpack.c.b16 %v1598, %v1596
        %v1633 = vpack.c.b16 %v1601, %v1599
        %v1634 = vpack.c.b16 %v1602, %v1600
        %v1635 = vpack.c.b16 %v1605, %v1603
        %v1636 = vpack.c.b16 %v1606, %v1604
        %v1637 = vpack.c.b16 %v1609, %v1607
        %v1638 = vpack.c.b16 %v1610, %v1608
        %v1639 = vpack.c.b16 %v1613, %v1611
        %v1640 = vpack.c.b16 %v1614, %v1612
        %v1641 = vpack.c.b16 %v1617, %v1615
        %v1642 = vpack.c.b16 %v1618, %v1616
        %v1643 = vpack.c.b16 %v1621, %v1619
        %v1644 = vpack.c.b16 %v1622, %v1620
        %v1645 = vpack.c.b16 %v1625, %v1623
        %v1646 = vpack.c.b16 %v1626, %v1624
        %v1647 = vpack.c.b16 %v1629, %v1627
        %v1648 = vpack.c.b16 %v1630, %v1628
        %v1668 = vsel %vm770, %v1557, 0
        %1670 = vmatprep.subr.bf16.mxu0 %v1646
        %1671 = vmatpush1.bf16.msra.mxu0 %v1645
        %1672 = vmatprep.subr.bf16.mxu0 %v1644
        %1673 = vmatpush1.bf16.msra.mxu0 %v1643
        %1674 = vmatprep.subr.bf16.mxu0 %v1642
        %1675 = vmatpush1.bf16.msra.mxu0 %v1641
        %1676 = vmatprep.subr.bf16.mxu0 %v1640
        %1677 = vmatpush1.bf16.msra.mxu0 %v1639
        %1678 = vmatprep.subr.bf16.mxu0 %v1638
        %1679 = vmatpush1.bf16.msra.mxu0 %v1637
        %1680 = vmatprep.subr.bf16.mxu0 %v1636
        %1681 = vmatpush1.bf16.msra.mxu0 %v1635
        %1682 = vmatprep.subr.bf16.mxu0 %v1634
        %1683 = vmatpush1.bf16.msra.mxu0 %v1633
        %1684 = vmatprep.subr.bf16.mxu0 %v1632
        %1685 = vmatpush1.bf16.msra.mxu0 %v1631
        %1686 = vmatprep.subr.bf16.mxu0 0
        %1687 = vmatpush2.bf16.msra.mxu0 0
        %1688 = vmatprep.subr.bf16.mxu0 0
        %1689 = vmatpush2.bf16.msra.mxu0 0
        %1690 = vmatprep.subr.bf16.mxu0 0
        %1691 = vmatpush2.bf16.msra.mxu0 0
        %1692 = vmatprep.subr.bf16.mxu0 0
        %1693 = vmatpush2.bf16.msra.mxu0 0
        %1694 = vmatprep.subr.bf16.mxu0 0
        %1695 = vmatpush2.bf16.msra.mxu0 0
        %1696 = vmatprep.subr.bf16.mxu0 0
        %1697 = vmatpush2.bf16.msra.mxu0 0
        %1698 = vmatprep.subr.bf16.mxu0 0
        %1699 = vmatpush2.bf16.msra.mxu0 0
        %1700 = vmatprep.subr.bf16.mxu0 %v1648
        %1701 = vmatpush2.bf16.msra.mxu0 %v1647
        %1702 = vmatprep.mubr.bf16.mxu0 %v1668
        %1703 = vmatmul.mubr.bf16.gmra.mxu0 %v1556
        %v1704 = vpop.f32.mrf.mxu0
        %v1705 = vadd.f32 0.0, %v1704
        %v1706 = vpop.f32.mrf.mxu0
        %v1707 = vadd.f32 0.0, %v1706
        %v1708 = vpop.f32.mrf.mxu0
        %v1709 = vpop.f32.mrf.mxu0
        %1710 = vdwg.mxu0
        %v1711 = vadd.f32 %v1452, %v1705
        %v1712 = vadd.f32 %v1453, %v1707
        %vm1713 = vcmask 1042432
        %v1714 = vrot.slane %v444, 5
        %v1715 = vrot.slane %v446, 5
        %v1716 = vsel %vm1713, %v1714, %v1715
        %v1717 = vrot.slane %v445, 5
        %v1718 = vrot.slane %v447, 5
        %v1719 = vsel %vm1713, %v1717, %v1718
        %v1720 = vrot.slane %v448, 5
        %v1721 = vsel %vm1713, %v1715, %v1720
        %v1722 = vrot.slane %v449, 5
        %v1723 = vsel %vm1713, %v1718, %v1722
        %v1724 = vrot.slane %v450, 5
        %v1725 = vsel %vm1713, %v1720, %v1724
        %v1726 = vrot.slane %v451, 5
        %v1727 = vsel %vm1713, %v1722, %v1726
        %v1728 = vrot.slane %v452, 5
        %v1729 = vsel %vm1713, %v1724, %v1728
        %v1730 = vrot.slane %v453, 5
        %v1731 = vsel %vm1713, %v1726, %v1730
        %v1738 = vsel %vm459, %v1729, 0
        %v1740 = vsel %vm459, %v1731, 0
        %1742 = vmatprep.subr.mxu0 0.0
        %1743 = vmatpush1.msra.mxu0 0.0
        %1744 = vmatprep.subr.mxu0 0.0
        %1745 = vmatpush1.msra.mxu0 0.0
        %1746 = vmatprep.subr.mxu0 0.0
        %1747 = vmatpush1.msra.mxu0 0.0
        %1748 = vmatprep.subr.mxu0 0.0
        %1749 = vmatpush1.msra.mxu0 0.0
        %1750 = vmatprep.subr.mxu0 0.0
        %1751 = vmatpush1.msra.mxu0 0.0
        %1752 = vmatprep.subr.mxu0 0.0
        %1753 = vmatpush1.msra.mxu0 0.0
        %1754 = vmatprep.subr.mxu0 0.0
        %1755 = vmatpush1.msra.mxu0 0.0
        %1756 = vmatprep.subr.mxu0 0.0
        %1757 = vmatpush1.msra.mxu0 0.0
        %1758 = vmatprep.subr.mxu0 0.0
        %1759 = vmatpush1.msra.mxu0 0.0
        %1760 = vmatprep.subr.mxu0 0.0
        %1761 = vmatpush1.msra.mxu0 0.0
        %1762 = vmatprep.subr.mxu0 0.0
        %1763 = vmatpush1.msra.mxu0 0.0
        %1764 = vmatprep.subr.mxu0 0.0
        %1765 = vmatpush1.msra.mxu0 0.0
        %1766 = vmatprep.subr.mxu0 %v1740
        %1767 = vmatpush1.msra.mxu0 %v1738
        %1768 = vmatprep.subr.mxu0 %v1727
        %1769 = vmatpush1.msra.mxu0 %v1725
        %1770 = vmatprep.subr.mxu0 %v1723
        %1771 = vmatpush1.msra.mxu0 %v1721
        %1772 = vmatprep.subr.mxu0 %v1719
        %1773 = vmatpush1.msra.mxu0 %v1716
        %1774 = vmatprep.subr.mxu0 0.0
        %1775 = vmatpush2.msra.mxu0 0.0
        %1776 = vmatprep.subr.mxu0 0.0
        %1777 = vmatpush2.msra.mxu0 0.0
        %1778 = vmatprep.subr.mxu0 0.0
        %1779 = vmatpush2.msra.mxu0 0.0
        %1780 = vmatprep.subr.mxu0 0.0
        %1781 = vmatpush2.msra.mxu0 0.0
        %1782 = vmatprep.subr.mxu0 0.0
        %1783 = vmatpush2.msra.mxu0 0.0
        %1784 = vmatprep.subr.mxu0 0.0
        %1785 = vmatpush2.msra.mxu0 0.0
        %1786 = vmatprep.subr.mxu0 0.0
        %1787 = vmatpush2.msra.mxu0 0.0
        %1788 = vmatprep.subr.mxu0 0.0
        %1789 = vmatpush2.msra.mxu0 0.0
        %1790 = vmatprep.subr.mxu0 0.0
        %1791 = vmatpush2.msra.mxu0 0.0
        %1792 = vmatprep.subr.mxu0 0.0
        %1793 = vmatpush2.msra.mxu0 0.0
        %1794 = vmatprep.subr.mxu0 0.0
        %1795 = vmatpush2.msra.mxu0 0.0
        %1796 = vmatprep.subr.mxu0 0.0
        %1797 = vmatpush2.msra.mxu0 0.0
        %1798 = vmatprep.subr.mxu0 0.0
        %1799 = vmatpush2.msra.mxu0 0.0
        %1800 = vmatprep.subr.mxu0 0.0
        %1801 = vmatpush2.msra.mxu0 0.0
        %1802 = vmatprep.subr.mxu0 0.0
        %1803 = vmatpush2.msra.mxu0 0.0
        %1804 = vmatprep.subr.mxu0 0.0
        %1805 = vmatpush2.msra.mxu0 0.0
        %1806 = vmatprep.mubr.f32.mxu0 0.0
        %1807 = vmatmul.mubr.f32.gmra.mxu0 %v457
        %v1808 = vpop.f32.mrf.mxu0
        %v1809 = vadd.f32 0.0, %v1808
        %v1810 = vpop.f32.mrf.mxu0
        %v1811 = vadd.f32 0.0, %v1810
        %1812 = vdwg.mxu0
        %v1813 = vpack.c.bf16 %v1809, %v1809
        %v1814 = vpack.c.bf16 %v1811, %v1811
        %s1815 = scalar_lea.vmem %s2, 720
        %v1816 = vld [vmem:[%s1815] sm:$0xff]
        %v1817 = vld [vmem:[%s1815 + $0x8] sm:$0xff]
        %v1818 = vld [vmem:[%s1815 + $0x10] sm:$0xff]
        %v1819 = vld [vmem:[%s1815 + $0x18] sm:$0xff]
        %v1820 = vld [vmem:[%s1815 + $0x20] sm:$0xff]
        %v1821 = vld [vmem:[%s1815 + $0x28] sm:$0xff]
        %v1822 = vld [vmem:[%s1815 + $0x30] sm:$0xff]
        %v1823 = vld [vmem:[%s1815 + $0x38] sm:$0xff]
        %v1824 = vld [vmem:[%s1815 + $0x40] sm:$0xff]
        %v1825 = vld [vmem:[%s1815 + $0x48] sm:$0xff]
        %v1826 = vld [vmem:[%s1815 + $0x50] sm:$0xff]
        %v1827 = vld [vmem:[%s1815 + $0x58] sm:$0xff]
        %v1828 = vld [vmem:[%s1815 + $0x60] sm:$0xff]
        %v1829 = vld [vmem:[%s1815 + $0x68] sm:$0xff]
        %v1830 = vld [vmem:[%s1815 + $0x70] sm:$0xff]
        %v1831 = vld [vmem:[%s1815 + $0x78] sm:$0xff]
        %v1832 = vld [vmem:[%s1815 + $0x80] sm:$0xff]
        %v1833 = vld [vmem:[%s1815 + $0x88] sm:$0xff]
        %v1852 = vunpack.c.l.b16 %v1816
        %v1853 = vunpack.c.h.b16 %v1816
        %v1854 = vunpack.c.l.b16 %v1817
        %v1855 = vunpack.c.h.b16 %v1817
        %v1856 = vunpack.c.l.b16 %v1818
        %v1857 = vunpack.c.h.b16 %v1818
        %v1858 = vunpack.c.l.b16 %v1819
        %v1859 = vunpack.c.h.b16 %v1819
        %v1860 = vunpack.c.l.b16 %v1820
        %v1861 = vunpack.c.h.b16 %v1820
        %v1862 = vunpack.c.l.b16 %v1821
        %v1863 = vunpack.c.h.b16 %v1821
        %v1864 = vunpack.c.l.b16 %v1822
        %v1865 = vunpack.c.h.b16 %v1822
        %v1866 = vunpack.c.l.b16 %v1823
        %v1867 = vunpack.c.h.b16 %v1823
        %v1868 = vunpack.c.l.b16 %v1824
        %v1869 = vunpack.c.h.b16 %v1824
        %v1870 = vunpack.c.l.b16 %v1825
        %v1871 = vunpack.c.h.b16 %v1825
        %v1872 = vunpack.c.l.b16 %v1826
        %v1873 = vunpack.c.h.b16 %v1826
        %v1874 = vunpack.c.l.b16 %v1827
        %v1875 = vunpack.c.h.b16 %v1827
        %v1876 = vunpack.c.l.b16 %v1828
        %v1877 = vunpack.c.h.b16 %v1828
        %v1878 = vunpack.c.l.b16 %v1829
        %v1879 = vunpack.c.h.b16 %v1829
        %v1880 = vunpack.c.l.b16 %v1830
        %v1881 = vunpack.c.h.b16 %v1830
        %v1882 = vunpack.c.l.b16 %v1831
        %v1883 = vunpack.c.h.b16 %v1831
        %v1884 = vunpack.c.l.b16 %v1832
        %v1885 = vunpack.c.h.b16 %v1832
        %v1886 = vunpack.c.l.b16 %v1833
        %v1887 = vunpack.c.h.b16 %v1833
        %v1888 = vpack.c.b16 %v1854, %v1852
        %v1889 = vpack.c.b16 %v1855, %v1853
        %v1890 = vpack.c.b16 %v1858, %v1856
        %v1891 = vpack.c.b16 %v1859, %v1857
        %v1892 = vpack.c.b16 %v1862, %v1860
        %v1893 = vpack.c.b16 %v1863, %v1861
        %v1894 = vpack.c.b16 %v1866, %v1864
        %v1895 = vpack.c.b16 %v1867, %v1865
        %v1896 = vpack.c.b16 %v1870, %v1868
        %v1897 = vpack.c.b16 %v1871, %v1869
        %v1898 = vpack.c.b16 %v1874, %v1872
        %v1899 = vpack.c.b16 %v1875, %v1873
        %v1900 = vpack.c.b16 %v1878, %v1876
        %v1901 = vpack.c.b16 %v1879, %v1877
        %v1902 = vpack.c.b16 %v1882, %v1880
        %v1903 = vpack.c.b16 %v1883, %v1881
        %v1904 = vpack.c.b16 %v1886, %v1884
        %v1905 = vpack.c.b16 %v1887, %v1885
        %v1925 = vsel %vm770, %v1814, 0
        %1927 = vmatprep.subr.bf16.mxu0 %v1903
        %1928 = vmatpush1.bf16.msra.mxu0 %v1902
        %1929 = vmatprep.subr.bf16.mxu0 %v1901
        %1930 = vmatpush1.bf16.msra.mxu0 %v1900
        %1931 = vmatprep.subr.bf16.mxu0 %v1899
        %1932 = vmatpush1.bf16.msra.mxu0 %v1898
        %1933 = vmatprep.subr.bf16.mxu0 %v1897
        %1934 = vmatpush1.bf16.msra.mxu0 %v1896
        %1935 = vmatprep.subr.bf16.mxu0 %v1895
        %1936 = vmatpush1.bf16.msra.mxu0 %v1894
        %1937 = vmatprep.subr.bf16.mxu0 %v1893
        %1938 = vmatpush1.bf16.msra.mxu0 %v1892
        %1939 = vmatprep.subr.bf16.mxu0 %v1891
        %1940 = vmatpush1.bf16.msra.mxu0 %v1890
        %1941 = vmatprep.subr.bf16.mxu0 %v1889
        %1942 = vmatpush1.bf16.msra.mxu0 %v1888
        %1943 = vmatprep.subr.bf16.mxu0 0
        %1944 = vmatpush2.bf16.msra.mxu0 0
        %1945 = vmatprep.subr.bf16.mxu0 0
        %1946 = vmatpush2.bf16.msra.mxu0 0
        %1947 = vmatprep.subr.bf16.mxu0 0
        %1948 = vmatpush2.bf16.msra.mxu0 0
        %1949 = vmatprep.subr.bf16.mxu0 0
        %1950 = vmatpush2.bf16.msra.mxu0 0
        %1951 = vmatprep.subr.bf16.mxu0 0
        %1952 = vmatpush2.bf16.msra.mxu0 0
        %1953 = vmatprep.subr.bf16.mxu0 0
        %1954 = vmatpush2.bf16.msra.mxu0 0
        %1955 = vmatprep.subr.bf16.mxu0 0
        %1956 = vmatpush2.bf16.msra.mxu0 0
        %1957 = vmatprep.subr.bf16.mxu0 %v1905
        %1958 = vmatpush2.bf16.msra.mxu0 %v1904
        %1959 = vmatprep.mubr.bf16.mxu0 %v1925
        %1960 = vmatmul.mubr.bf16.gmra.mxu0 %v1813
        %v1961 = vpop.f32.mrf.mxu0
        %v1962 = vadd.f32 0.0, %v1961
        %v1963 = vpop.f32.mrf.mxu0
        %v1964 = vadd.f32 0.0, %v1963
        %v1965 = vpop.f32.mrf.mxu0
        %v1966 = vpop.f32.mrf.mxu0
        %1967 = vdwg.mxu0
        %v1968 = vadd.f32 %v1711, %v1962
        %v1969 = vadd.f32 %v1712, %v1964
        %vm1970 = vcmask 1041408
        %v1971 = vrot.slane %v444, 6
        %v1972 = vrot.slane %v446, 6
        %v1973 = vsel %vm1970, %v1971, %v1972
        %v1974 = vrot.slane %v445, 6
        %v1975 = vrot.slane %v447, 6
        %v1976 = vsel %vm1970, %v1974, %v1975
        %v1977 = vrot.slane %v448, 6
        %v1978 = vsel %vm1970, %v1972, %v1977
        %v1979 = vrot.slane %v449, 6
        %v1980 = vsel %vm1970, %v1975, %v1979
        %v1981 = vrot.slane %v450, 6
        %v1982 = vsel %vm1970, %v1977, %v1981
        %v1983 = vrot.slane %v451, 6
        %v1984 = vsel %vm1970, %v1979, %v1983
        %v1985 = vrot.slane %v452, 6
        %v1986 = vsel %vm1970, %v1981, %v1985
        %v1987 = vrot.slane %v453, 6
        %v1988 = vsel %vm1970, %v1983, %v1987
        %v1995 = vsel %vm459, %v1986, 0
        %v1997 = vsel %vm459, %v1988, 0
        %1999 = vmatprep.subr.mxu0 0.0
        %2000 = vmatpush1.msra.mxu0 0.0
        %2001 = vmatprep.subr.mxu0 0.0
        %2002 = vmatpush1.msra.mxu0 0.0
        %2003 = vmatprep.subr.mxu0 0.0
        %2004 = vmatpush1.msra.mxu0 0.0
        %2005 = vmatprep.subr.mxu0 0.0
        %2006 = vmatpush1.msra.mxu0 0.0
        %2007 = vmatprep.subr.mxu0 0.0
        %2008 = vmatpush1.msra.mxu0 0.0
        %2009 = vmatprep.subr.mxu0 0.0
        %2010 = vmatpush1.msra.mxu0 0.0
        %2011 = vmatprep.subr.mxu0 0.0
        %2012 = vmatpush1.msra.mxu0 0.0
        %2013 = vmatprep.subr.mxu0 0.0
        %2014 = vmatpush1.msra.mxu0 0.0
        %2015 = vmatprep.subr.mxu0 0.0
        %2016 = vmatpush1.msra.mxu0 0.0
        %2017 = vmatprep.subr.mxu0 0.0
        %2018 = vmatpush1.msra.mxu0 0.0
        %2019 = vmatprep.subr.mxu0 0.0
        %2020 = vmatpush1.msra.mxu0 0.0
        %2021 = vmatprep.subr.mxu0 0.0
        %2022 = vmatpush1.msra.mxu0 0.0
        %2023 = vmatprep.subr.mxu0 %v1997
        %2024 = vmatpush1.msra.mxu0 %v1995
        %2025 = vmatprep.subr.mxu0 %v1984
        %2026 = vmatpush1.msra.mxu0 %v1982
        %2027 = vmatprep.subr.mxu0 %v1980
        %2028 = vmatpush1.msra.mxu0 %v1978
        %2029 = vmatprep.subr.mxu0 %v1976
        %2030 = vmatpush1.msra.mxu0 %v1973
        %2031 = vmatprep.subr.mxu0 0.0
        %2032 = vmatpush2.msra.mxu0 0.0
        %2033 = vmatprep.subr.mxu0 0.0
        %2034 = vmatpush2.msra.mxu0 0.0
        %2035 = vmatprep.subr.mxu0 0.0
        %2036 = vmatpush2.msra.mxu0 0.0
        %2037 = vmatprep.subr.mxu0 0.0
        %2038 = vmatpush2.msra.mxu0 0.0
        %2039 = vmatprep.subr.mxu0 0.0
        %2040 = vmatpush2.msra.mxu0 0.0
        %2041 = vmatprep.subr.mxu0 0.0
        %2042 = vmatpush2.msra.mxu0 0.0
        %2043 = vmatprep.subr.mxu0 0.0
        %2044 = vmatpush2.msra.mxu0 0.0
        %2045 = vmatprep.subr.mxu0 0.0
        %2046 = vmatpush2.msra.mxu0 0.0
        %2047 = vmatprep.subr.mxu0 0.0
        %2048 = vmatpush2.msra.mxu0 0.0
        %2049 = vmatprep.subr.mxu0 0.0
        %2050 = vmatpush2.msra.mxu0 0.0
        %2051 = vmatprep.subr.mxu0 0.0
        %2052 = vmatpush2.msra.mxu0 0.0
        %2053 = vmatprep.subr.mxu0 0.0
        %2054 = vmatpush2.msra.mxu0 0.0
        %2055 = vmatprep.subr.mxu0 0.0
        %2056 = vmatpush2.msra.mxu0 0.0
        %2057 = vmatprep.subr.mxu0 0.0
        %2058 = vmatpush2.msra.mxu0 0.0
        %2059 = vmatprep.subr.mxu0 0.0
        %2060 = vmatpush2.msra.mxu0 0.0
        %2061 = vmatprep.subr.mxu0 0.0
        %2062 = vmatpush2.msra.mxu0 0.0
        %2063 = vmatprep.mubr.f32.mxu0 0.0
        %2064 = vmatmul.mubr.f32.gmra.mxu0 %v457
        %v2065 = vpop.f32.mrf.mxu0
        %v2066 = vadd.f32 0.0, %v2065
        %v2067 = vpop.f32.mrf.mxu0
        %v2068 = vadd.f32 0.0, %v2067
        %2069 = vdwg.mxu0
        %v2070 = vpack.c.bf16 %v2066, %v2066
        %v2071 = vpack.c.bf16 %v2068, %v2068
        %s2072 = scalar_lea.vmem %s2, 864
        %v2073 = vld [vmem:[%s2072] sm:$0xff]
        %v2074 = vld [vmem:[%s2072 + $0x8] sm:$0xff]
        %v2075 = vld [vmem:[%s2072 + $0x10] sm:$0xff]
        %v2076 = vld [vmem:[%s2072 + $0x18] sm:$0xff]
        %v2077 = vld [vmem:[%s2072 + $0x20] sm:$0xff]
        %v2078 = vld [vmem:[%s2072 + $0x28] sm:$0xff]
        %v2079 = vld [vmem:[%s2072 + $0x30] sm:$0xff]
        %v2080 = vld [vmem:[%s2072 + $0x38] sm:$0xff]
        %v2081 = vld [vmem:[%s2072 + $0x40] sm:$0xff]
        %v2082 = vld [vmem:[%s2072 + $0x48] sm:$0xff]
        %v2083 = vld [vmem:[%s2072 + $0x50] sm:$0xff]
        %v2084 = vld [vmem:[%s2072 + $0x58] sm:$0xff]
        %v2085 = vld [vmem:[%s2072 + $0x60] sm:$0xff]
        %v2086 = vld [vmem:[%s2072 + $0x68] sm:$0xff]
        %v2087 = vld [vmem:[%s2072 + $0x70] sm:$0xff]
        %v2088 = vld [vmem:[%s2072 + $0x78] sm:$0xff]
        %v2089 = vld [vmem:[%s2072 + $0x80] sm:$0xff]
        %v2090 = vld [vmem:[%s2072 + $0x88] sm:$0xff]
        %v2109 = vunpack.c.l.b16 %v2073
        %v2110 = vunpack.c.h.b16 %v2073
        %v2111 = vunpack.c.l.b16 %v2074
        %v2112 = vunpack.c.h.b16 %v2074
        %v2113 = vunpack.c.l.b16 %v2075
        %v2114 = vunpack.c.h.b16 %v2075
        %v2115 = vunpack.c.l.b16 %v2076
        %v2116 = vunpack.c.h.b16 %v2076
        %v2117 = vunpack.c.l.b16 %v2077
        %v2118 = vunpack.c.h.b16 %v2077
        %v2119 = vunpack.c.l.b16 %v2078
        %v2120 = vunpack.c.h.b16 %v2078
        %v2121 = vunpack.c.l.b16 %v2079
        %v2122 = vunpack.c.h.b16 %v2079
        %v2123 = vunpack.c.l.b16 %v2080
        %v2124 = vunpack.c.h.b16 %v2080
        %v2125 = vunpack.c.l.b16 %v2081
        %v2126 = vunpack.c.h.b16 %v2081
        %v2127 = vunpack.c.l.b16 %v2082
        %v2128 = vunpack.c.h.b16 %v2082
        %v2129 = vunpack.c.l.b16 %v2083
        %v2130 = vunpack.c.h.b16 %v2083
        %v2131 = vunpack.c.l.b16 %v2084
        %v2132 = vunpack.c.h.b16 %v2084
        %v2133 = vunpack.c.l.b16 %v2085
        %v2134 = vunpack.c.h.b16 %v2085
        %v2135 = vunpack.c.l.b16 %v2086
        %v2136 = vunpack.c.h.b16 %v2086
        %v2137 = vunpack.c.l.b16 %v2087
        %v2138 = vunpack.c.h.b16 %v2087
        %v2139 = vunpack.c.l.b16 %v2088
        %v2140 = vunpack.c.h.b16 %v2088
        %v2141 = vunpack.c.l.b16 %v2089
        %v2142 = vunpack.c.h.b16 %v2089
        %v2143 = vunpack.c.l.b16 %v2090
        %v2144 = vunpack.c.h.b16 %v2090
        %v2145 = vpack.c.b16 %v2111, %v2109
        %v2146 = vpack.c.b16 %v2112, %v2110
        %v2147 = vpack.c.b16 %v2115, %v2113
        %v2148 = vpack.c.b16 %v2116, %v2114
        %v2149 = vpack.c.b16 %v2119, %v2117
        %v2150 = vpack.c.b16 %v2120, %v2118
        %v2151 = vpack.c.b16 %v2123, %v2121
        %v2152 = vpack.c.b16 %v2124, %v2122
        %v2153 = vpack.c.b16 %v2127, %v2125
        %v2154 = vpack.c.b16 %v2128, %v2126
        %v2155 = vpack.c.b16 %v2131, %v2129
        %v2156 = vpack.c.b16 %v2132, %v2130
        %v2157 = vpack.c.b16 %v2135, %v2133
        %v2158 = vpack.c.b16 %v2136, %v2134
        %v2159 = vpack.c.b16 %v2139, %v2137
        %v2160 = vpack.c.b16 %v2140, %v2138
        %v2161 = vpack.c.b16 %v2143, %v2141
        %v2162 = vpack.c.b16 %v2144, %v2142
        %v2182 = vsel %vm770, %v2071, 0
        %2184 = vmatprep.subr.bf16.mxu0 %v2160
        %2185 = vmatpush1.bf16.msra.mxu0 %v2159
        %2186 = vmatprep.subr.bf16.mxu0 %v2158
        %2187 = vmatpush1.bf16.msra.mxu0 %v2157
        %2188 = vmatprep.subr.bf16.mxu0 %v2156
        %2189 = vmatpush1.bf16.msra.mxu0 %v2155
        %2190 = vmatprep.subr.bf16.mxu0 %v2154
        %2191 = vmatpush1.bf16.msra.mxu0 %v2153
        %2192 = vmatprep.subr.bf16.mxu0 %v2152
        %2193 = vmatpush1.bf16.msra.mxu0 %v2151
        %2194 = vmatprep.subr.bf16.mxu0 %v2150
        %2195 = vmatpush1.bf16.msra.mxu0 %v2149
        %2196 = vmatprep.subr.bf16.mxu0 %v2148
        %2197 = vmatpush1.bf16.msra.mxu0 %v2147
        %2198 = vmatprep.subr.bf16.mxu0 %v2146
        %2199 = vmatpush1.bf16.msra.mxu0 %v2145
        %2200 = vmatprep.subr.bf16.mxu0 0
        %2201 = vmatpush2.bf16.msra.mxu0 0
        %2202 = vmatprep.subr.bf16.mxu0 0
        %2203 = vmatpush2.bf16.msra.mxu0 0
        %2204 = vmatprep.subr.bf16.mxu0 0
        %2205 = vmatpush2.bf16.msra.mxu0 0
        %2206 = vmatprep.subr.bf16.mxu0 0
        %2207 = vmatpush2.bf16.msra.mxu0 0
        %2208 = vmatprep.subr.bf16.mxu0 0
        %2209 = vmatpush2.bf16.msra.mxu0 0
        %2210 = vmatprep.subr.bf16.mxu0 0
        %2211 = vmatpush2.bf16.msra.mxu0 0
        %2212 = vmatprep.subr.bf16.mxu0 0
        %2213 = vmatpush2.bf16.msra.mxu0 0
        %2214 = vmatprep.subr.bf16.mxu0 %v2162
        %2215 = vmatpush2.bf16.msra.mxu0 %v2161
        %2216 = vmatprep.mubr.bf16.mxu0 %v2182
        %2217 = vmatmul.mubr.bf16.gmra.mxu0 %v2070
        %v2218 = vpop.f32.mrf.mxu0
        %v2219 = vadd.f32 0.0, %v2218
        %v2220 = vpop.f32.mrf.mxu0
        %v2221 = vadd.f32 0.0, %v2220
        %v2222 = vpop.f32.mrf.mxu0
        %v2223 = vpop.f32.mrf.mxu0
        %2224 = vdwg.mxu0
        %v2225 = vadd.f32 %v1968, %v2219
        %v2226 = vadd.f32 %v1969, %v2221
        %vm2227 = vcmask 1040384
        %v2228 = vrot.slane %v444, 7
        %v2229 = vrot.slane %v446, 7
        %v2230 = vsel %vm2227, %v2228, %v2229
        %v2231 = vrot.slane %v445, 7
        %v2232 = vrot.slane %v447, 7
        %v2233 = vsel %vm2227, %v2231, %v2232
        %v2234 = vrot.slane %v448, 7
        %v2235 = vsel %vm2227, %v2229, %v2234
        %v2236 = vrot.slane %v449, 7
        %v2237 = vsel %vm2227, %v2232, %v2236
        %v2238 = vrot.slane %v450, 7
        %v2239 = vsel %vm2227, %v2234, %v2238
        %v2240 = vrot.slane %v451, 7
        %v2241 = vsel %vm2227, %v2236, %v2240
        %v2242 = vrot.slane %v452, 7
        %v2243 = vsel %vm2227, %v2238, %v2242
        %v2244 = vrot.slane %v453, 7
        %v2245 = vsel %vm2227, %v2240, %v2244
        %v2252 = vsel %vm459, %v2243, 0
        %v2254 = vsel %vm459, %v2245, 0
        %2256 = vmatprep.subr.mxu0 0.0
        %2257 = vmatpush1.msra.mxu0 0.0
        %2258 = vmatprep.subr.mxu0 0.0
        %2259 = vmatpush1.msra.mxu0 0.0
        %2260 = vmatprep.subr.mxu0 0.0
        %2261 = vmatpush1.msra.mxu0 0.0
        %2262 = vmatprep.subr.mxu0 0.0
        %2263 = vmatpush1.msra.mxu0 0.0
        %2264 = vmatprep.subr.mxu0 0.0
        %2265 = vmatpush1.msra.mxu0 0.0
        %2266 = vmatprep.subr.mxu0 0.0
        %2267 = vmatpush1.msra.mxu0 0.0
        %2268 = vmatprep.subr.mxu0 0.0
        %2269 = vmatpush1.msra.mxu0 0.0
        %2270 = vmatprep.subr.mxu0 0.0
        %2271 = vmatpush1.msra.mxu0 0.0
        %2272 = vmatprep.subr.mxu0 0.0
        %2273 = vmatpush1.msra.mxu0 0.0
        %2274 = vmatprep.subr.mxu0 0.0
        %2275 = vmatpush1.msra.mxu0 0.0
        %2276 = vmatprep.subr.mxu0 0.0
        %2277 = vmatpush1.msra.mxu0 0.0
        %2278 = vmatprep.subr.mxu0 0.0
        %2279 = vmatpush1.msra.mxu0 0.0
        %2280 = vmatprep.subr.mxu0 %v2254
        %2281 = vmatpush1.msra.mxu0 %v2252
        %2282 = vmatprep.subr.mxu0 %v2241
        %2283 = vmatpush1.msra.mxu0 %v2239
        %2284 = vmatprep.subr.mxu0 %v2237
        %2285 = vmatpush1.msra.mxu0 %v2235
        %2286 = vmatprep.subr.mxu0 %v2233
        %2287 = vmatpush1.msra.mxu0 %v2230
        %2288 = vmatprep.subr.mxu0 0.0
        %2289 = vmatpush2.msra.mxu0 0.0
        %2290 = vmatprep.subr.mxu0 0.0
        %2291 = vmatpush2.msra.mxu0 0.0
        %2292 = vmatprep.subr.mxu0 0.0
        %2293 = vmatpush2.msra.mxu0 0.0
        %2294 = vmatprep.subr.mxu0 0.0
        %2295 = vmatpush2.msra.mxu0 0.0
        %2296 = vmatprep.subr.mxu0 0.0
        %2297 = vmatpush2.msra.mxu0 0.0
        %2298 = vmatprep.subr.mxu0 0.0
        %2299 = vmatpush2.msra.mxu0 0.0
        %2300 = vmatprep.subr.mxu0 0.0
        %2301 = vmatpush2.msra.mxu0 0.0
        %2302 = vmatprep.subr.mxu0 0.0
        %2303 = vmatpush2.msra.mxu0 0.0
        %2304 = vmatprep.subr.mxu0 0.0
        %2305 = vmatpush2.msra.mxu0 0.0
        %2306 = vmatprep.subr.mxu0 0.0
        %2307 = vmatpush2.msra.mxu0 0.0
        %2308 = vmatprep.subr.mxu0 0.0
        %2309 = vmatpush2.msra.mxu0 0.0
        %2310 = vmatprep.subr.mxu0 0.0
        %2311 = vmatpush2.msra.mxu0 0.0
        %2312 = vmatprep.subr.mxu0 0.0
        %2313 = vmatpush2.msra.mxu0 0.0
        %2314 = vmatprep.subr.mxu0 0.0
        %2315 = vmatpush2.msra.mxu0 0.0
        %2316 = vmatprep.subr.mxu0 0.0
        %2317 = vmatpush2.msra.mxu0 0.0
        %2318 = vmatprep.subr.mxu0 0.0
        %2319 = vmatpush2.msra.mxu0 0.0
        %2320 = vmatprep.mubr.f32.mxu0 0.0
        %2321 = vmatmul.mubr.f32.gmra.mxu0 %v457
        %v2322 = vpop.f32.mrf.mxu0
        %v2323 = vadd.f32 0.0, %v2322
        %v2324 = vpop.f32.mrf.mxu0
        %v2325 = vadd.f32 0.0, %v2324
        %2326 = vdwg.mxu0
        %v2327 = vpack.c.bf16 %v2323, %v2323
        %v2328 = vpack.c.bf16 %v2325, %v2325
        %s2329 = scalar_lea.vmem %s2, 1008
        %v2330 = vld [vmem:[%s2329] sm:$0xff]
        %v2331 = vld [vmem:[%s2329 + $0x8] sm:$0xff]
        %v2332 = vld [vmem:[%s2329 + $0x10] sm:$0xff]
        %v2333 = vld [vmem:[%s2329 + $0x18] sm:$0xff]
        %v2334 = vld [vmem:[%s2329 + $0x20] sm:$0xff]
        %v2335 = vld [vmem:[%s2329 + $0x28] sm:$0xff]
        %v2336 = vld [vmem:[%s2329 + $0x30] sm:$0xff]
        %v2337 = vld [vmem:[%s2329 + $0x38] sm:$0xff]
        %v2338 = vld [vmem:[%s2329 + $0x40] sm:$0xff]
        %v2339 = vld [vmem:[%s2329 + $0x48] sm:$0xff]
        %v2340 = vld [vmem:[%s2329 + $0x50] sm:$0xff]
        %v2341 = vld [vmem:[%s2329 + $0x58] sm:$0xff]
        %v2342 = vld [vmem:[%s2329 + $0x60] sm:$0xff]
        %v2343 = vld [vmem:[%s2329 + $0x68] sm:$0xff]
        %v2344 = vld [vmem:[%s2329 + $0x70] sm:$0xff]
        %v2345 = vld [vmem:[%s2329 + $0x78] sm:$0xff]
        %v2346 = vld [vmem:[%s2329 + $0x80] sm:$0xff]
        %v2347 = vld [vmem:[%s2329 + $0x88] sm:$0xff]
        %v2366 = vunpack.c.l.b16 %v2330
        %v2367 = vunpack.c.h.b16 %v2330
        %v2368 = vunpack.c.l.b16 %v2331
        %v2369 = vunpack.c.h.b16 %v2331
        %v2370 = vunpack.c.l.b16 %v2332
        %v2371 = vunpack.c.h.b16 %v2332
        %v2372 = vunpack.c.l.b16 %v2333
        %v2373 = vunpack.c.h.b16 %v2333
        %v2374 = vunpack.c.l.b16 %v2334
        %v2375 = vunpack.c.h.b16 %v2334
        %v2376 = vunpack.c.l.b16 %v2335
        %v2377 = vunpack.c.h.b16 %v2335
        %v2378 = vunpack.c.l.b16 %v2336
        %v2379 = vunpack.c.h.b16 %v2336
        %v2380 = vunpack.c.l.b16 %v2337
        %v2381 = vunpack.c.h.b16 %v2337
        %v2382 = vunpack.c.l.b16 %v2338
        %v2383 = vunpack.c.h.b16 %v2338
        %v2384 = vunpack.c.l.b16 %v2339
        %v2385 = vunpack.c.h.b16 %v2339
        %v2386 = vunpack.c.l.b16 %v2340
        %v2387 = vunpack.c.h.b16 %v2340
        %v2388 = vunpack.c.l.b16 %v2341
        %v2389 = vunpack.c.h.b16 %v2341
        %v2390 = vunpack.c.l.b16 %v2342
        %v2391 = vunpack.c.h.b16 %v2342
        %v2392 = vunpack.c.l.b16 %v2343
        %v2393 = vunpack.c.h.b16 %v2343
        %v2394 = vunpack.c.l.b16 %v2344
        %v2395 = vunpack.c.h.b16 %v2344
        %v2396 = vunpack.c.l.b16 %v2345
        %v2397 = vunpack.c.h.b16 %v2345
        %v2398 = vunpack.c.l.b16 %v2346
        %v2399 = vunpack.c.h.b16 %v2346
        %v2400 = vunpack.c.l.b16 %v2347
        %v2401 = vunpack.c.h.b16 %v2347
        %v2402 = vpack.c.b16 %v2368, %v2366
        %v2403 = vpack.c.b16 %v2369, %v2367
        %v2404 = vpack.c.b16 %v2372, %v2370
        %v2405 = vpack.c.b16 %v2373, %v2371
        %v2406 = vpack.c.b16 %v2376, %v2374
        %v2407 = vpack.c.b16 %v2377, %v2375
        %v2408 = vpack.c.b16 %v2380, %v2378
        %v2409 = vpack.c.b16 %v2381, %v2379
        %v2410 = vpack.c.b16 %v2384, %v2382
        %v2411 = vpack.c.b16 %v2385, %v2383
        %v2412 = vpack.c.b16 %v2388, %v2386
        %v2413 = vpack.c.b16 %v2389, %v2387
        %v2414 = vpack.c.b16 %v2392, %v2390
        %v2415 = vpack.c.b16 %v2393, %v2391
        %v2416 = vpack.c.b16 %v2396, %v2394
        %v2417 = vpack.c.b16 %v2397, %v2395
        %v2418 = vpack.c.b16 %v2400, %v2398
        %v2419 = vpack.c.b16 %v2401, %v2399
        %v2439 = vsel %vm770, %v2328, 0
        %2441 = vmatprep.subr.bf16.mxu0 %v2417
        %2442 = vmatpush1.bf16.msra.mxu0 %v2416
        %2443 = vmatprep.subr.bf16.mxu0 %v2415
        %2444 = vmatpush1.bf16.msra.mxu0 %v2414
        %2445 = vmatprep.subr.bf16.mxu0 %v2413
        %2446 = vmatpush1.bf16.msra.mxu0 %v2412
        %2447 = vmatprep.subr.bf16.mxu0 %v2411
        %2448 = vmatpush1.bf16.msra.mxu0 %v2410
        %2449 = vmatprep.subr.bf16.mxu0 %v2409
        %2450 = vmatpush1.bf16.msra.mxu0 %v2408
        %2451 = vmatprep.subr.bf16.mxu0 %v2407
        %2452 = vmatpush1.bf16.msra.mxu0 %v2406
        %2453 = vmatprep.subr.bf16.mxu0 %v2405
        %2454 = vmatpush1.bf16.msra.mxu0 %v2404
        %2455 = vmatprep.subr.bf16.mxu0 %v2403
        %2456 = vmatpush1.bf16.msra.mxu0 %v2402
        %2457 = vmatprep.subr.bf16.mxu0 0
        %2458 = vmatpush2.bf16.msra.mxu0 0
        %2459 = vmatprep.subr.bf16.mxu0 0
        %2460 = vmatpush2.bf16.msra.mxu0 0
        %2461 = vmatprep.subr.bf16.mxu0 0
        %2462 = vmatpush2.bf16.msra.mxu0 0
        %2463 = vmatprep.subr.bf16.mxu0 0
        %2464 = vmatpush2.bf16.msra.mxu0 0
        %2465 = vmatprep.subr.bf16.mxu0 0
        %2466 = vmatpush2.bf16.msra.mxu0 0
        %2467 = vmatprep.subr.bf16.mxu0 0
        %2468 = vmatpush2.bf16.msra.mxu0 0
        %2469 = vmatprep.subr.bf16.mxu0 0
        %2470 = vmatpush2.bf16.msra.mxu0 0
        %2471 = vmatprep.subr.bf16.mxu0 %v2419
        %2472 = vmatpush2.bf16.msra.mxu0 %v2418
        %2473 = vmatprep.mubr.bf16.mxu0 %v2439
        %2474 = vmatmul.mubr.bf16.gmra.mxu0 %v2327
        %v2475 = vpop.f32.mrf.mxu0
        %v2476 = vadd.f32 0.0, %v2475
        %v2477 = vpop.f32.mrf.mxu0
        %v2478 = vadd.f32 0.0, %v2477
        %v2479 = vpop.f32.mrf.mxu0
        %v2480 = vpop.f32.mrf.mxu0
        %2481 = vdwg.mxu0
        %v2482 = vadd.f32 %v2225, %v2476
        %v2483 = vadd.f32 %v2226, %v2478
        %v2484 = vld [vmem:[%s3] sm:$0x3]
        %v2486 = vlaneseq
        %v2487 = vshrl.u32 %v2486, 7
        %v2488 = vsub.s32 0, %v2487
        %v2489 = vrot.slane %v2484, %v2488
        %v2490 = vlaneseq
        %v2491 = vshrl.u32 %v2490, 7
        %v2492 = vsub.s32 1, %v2491
        %v2493 = vrot.slane %v2484, %v2492
        %v2496 = vadd.f32 %v2482, %v2489
        %v2497 = vadd.f32 %v2483, %v2493
        %v2498 = vmax.f32 %v2496, 0.0
        %v2499 = vmax.f32 %v2497, 0.0
        %v2500 = vld [vmem:[%s4] sm:$0x7]
        %vm2501 = vcmask 39936
        %v2503 = vsel %vm2501, %v2500, 0
        %v2506 = vsel %vm459, %v2498, 0
        %v2509 = vsel %vm459, %v2499, 0
        %2511 = vmatprep.subr.mxu0 0.0
        %2512 = vmatpush1.msra.mxu0 0.0
        %2513 = vmatprep.subr.mxu0 0.0
        %2514 = vmatpush1.msra.mxu0 0.0
        %2515 = vmatprep.subr.mxu0 0.0
        %2516 = vmatpush1.msra.mxu0 0.0
        %2517 = vmatprep.subr.mxu0 0.0
        %2518 = vmatpush1.msra.mxu0 0.0
        %2519 = vmatprep.subr.mxu0 0.0
        %2520 = vmatpush1.msra.mxu0 0.0
        %2521 = vmatprep.subr.mxu0 0.0
        %2522 = vmatpush1.msra.mxu0 0.0
        %2523 = vmatprep.subr.mxu0 0.0
        %2524 = vmatpush1.msra.mxu0 0.0
        %2525 = vmatprep.subr.mxu0 0.0
        %2526 = vmatpush1.msra.mxu0 0.0
        %2527 = vmatprep.subr.mxu0 0.0
        %2528 = vmatpush1.msra.mxu0 0.0
        %2529 = vmatprep.subr.mxu0 0.0
        %2530 = vmatpush1.msra.mxu0 0.0
        %2531 = vmatprep.subr.mxu0 0.0
        %2532 = vmatpush1.msra.mxu0 0.0
        %2533 = vmatprep.subr.mxu0 0.0
        %2534 = vmatpush1.msra.mxu0 0.0
        %2535 = vmatprep.subr.mxu0 0.0
        %2536 = vmatpush1.msra.mxu0 0.0
        %2537 = vmatprep.subr.mxu0 0.0
        %2538 = vmatpush1.msra.mxu0 0.0
        %2539 = vmatprep.subr.mxu0 0.0
        %2540 = vmatpush1.msra.mxu0 0.0
        %2541 = vmatprep.subr.mxu0 %v2509
        %2542 = vmatpush1.msra.mxu0 %v2506
        %2543 = vmatprep.subr.mxu0 0.0
        %2544 = vmatpush2.msra.mxu0 0.0
        %2545 = vmatprep.subr.mxu0 0.0
        %2546 = vmatpush2.msra.mxu0 0.0
        %2547 = vmatprep.subr.mxu0 0.0
        %2548 = vmatpush2.msra.mxu0 0.0
        %2549 = vmatprep.subr.mxu0 0.0
        %2550 = vmatpush2.msra.mxu0 0.0
        %2551 = vmatprep.subr.mxu0 0.0
        %2552 = vmatpush2.msra.mxu0 0.0
        %2553 = vmatprep.subr.mxu0 0.0
        %2554 = vmatpush2.msra.mxu0 0.0
        %2555 = vmatprep.subr.mxu0 0.0
        %2556 = vmatpush2.msra.mxu0 0.0
        %2557 = vmatprep.subr.mxu0 0.0
        %2558 = vmatpush2.msra.mxu0 0.0
        %2559 = vmatprep.subr.mxu0 0.0
        %2560 = vmatpush2.msra.mxu0 0.0
        %2561 = vmatprep.subr.mxu0 0.0
        %2562 = vmatpush2.msra.mxu0 0.0
        %2563 = vmatprep.subr.mxu0 0.0
        %2564 = vmatpush2.msra.mxu0 0.0
        %2565 = vmatprep.subr.mxu0 0.0
        %2566 = vmatpush2.msra.mxu0 0.0
        %2567 = vmatprep.subr.mxu0 0.0
        %2568 = vmatpush2.msra.mxu0 0.0
        %2569 = vmatprep.subr.mxu0 0.0
        %2570 = vmatpush2.msra.mxu0 0.0
        %2571 = vmatprep.subr.mxu0 0.0
        %2572 = vmatpush2.msra.mxu0 0.0
        %2573 = vmatprep.subr.mxu0 0.0
        %2574 = vmatpush2.msra.mxu0 0.0
        %2575 = vmatprep.mubr.f32.mxu0 0.0
        %2576 = vmatmul.mubr.f32.gmra.mxu0 %v2503
        %v2577 = vpop.f32.mrf.mxu0
        %v2578 = vadd.f32 0.0, %v2577
        %v2579 = vpop.f32.mrf.mxu0
        %v2580 = vadd.f32 0.0, %v2579
        %2581 = vdwg.mxu0
        %v2582 = vpack.c.bf16 %v2578, %v2578
        %v2583 = vpack.c.bf16 %v2580, %v2580
        %v2584 = vld [vmem:[%s5] sm:$0xff]
        %v2585 = vld [vmem:[%s5 + $0x8] sm:$0xff]
        %v2586 = vld [vmem:[%s5 + $0x10] sm:$0xff]
        %v2587 = vld [vmem:[%s5 + $0x18] sm:$0xff]
        %v2588 = vld [vmem:[%s5 + $0x20] sm:$0xff]
        %v2589 = vld [vmem:[%s5 + $0x28] sm:$0xff]
        %v2590 = vld [vmem:[%s5 + $0x30] sm:$0xff]
        %v2591 = vld [vmem:[%s5 + $0x38] sm:$0xff]
        %v2592 = vld [vmem:[%s5 + $0x40] sm:$0xff]
        %v2593 = vld [vmem:[%s5 + $0x48] sm:$0xff]
        %v2594 = vld [vmem:[%s5 + $0x50] sm:$0xff]
        %v2595 = vld [vmem:[%s5 + $0x58] sm:$0xff]
        %v2596 = vld [vmem:[%s5 + $0x60] sm:$0xff]
        %v2597 = vld [vmem:[%s5 + $0x68] sm:$0xff]
        %v2598 = vld [vmem:[%s5 + $0x70] sm:$0xff]
        %v2599 = vld [vmem:[%s5 + $0x78] sm:$0xff]
        %v2600 = vld [vmem:[%s5 + $0x80] sm:$0xff]
        %v2601 = vld [vmem:[%s5 + $0x88] sm:$0xff]
        %v2602 = vld [vmem:[%s5 + $0x90] sm:$0xff]
        %v2603 = vld [vmem:[%s5 + $0x98] sm:$0xff]
        %v2604 = vld [vmem:[%s5 + $0xa0] sm:$0xff]
        %v2605 = vld [vmem:[%s5 + $0xa8] sm:$0xff]
        %v2606 = vld [vmem:[%s5 + $0xb0] sm:$0xff]
        %v2607 = vld [vmem:[%s5 + $0xb8] sm:$0xff]
        %v2608 = vld [vmem:[%s5 + $0xc0] sm:$0xff]
        %v2609 = vld [vmem:[%s5 + $0xc8] sm:$0xff]
        %v2610 = vld [vmem:[%s5 + $0xd0] sm:$0xff]
        %v2611 = vld [vmem:[%s5 + $0xd8] sm:$0xff]
        %v2612 = vld [vmem:[%s5 + $0xe0] sm:$0xff]
        %v2613 = vld [vmem:[%s5 + $0xe8] sm:$0xff]
        %v2614 = vld [vmem:[%s5 + $0xf0] sm:$0xff]
        %v2615 = vld [vmem:[%s5 + $0xf8] sm:$0xff]
        %v2616 = vrot.slane %v2498, 1
        %v2617 = vrot.slane %v2499, 1
        %v2618 = vsel %vm459, %v2616, 0
        %v2620 = vsel %vm459, %v2617, 0
        %2622 = vmatprep.subr.mxu0 0.0
        %2623 = vmatpush1.msra.mxu0 0.0
        %2624 = vmatprep.subr.mxu0 0.0
        %2625 = vmatpush1.msra.mxu0 0.0
        %2626 = vmatprep.subr.mxu0 0.0
        %2627 = vmatpush1.msra.mxu0 0.0
        %2628 = vmatprep.subr.mxu0 0.0
        %2629 = vmatpush1.msra.mxu0 0.0
        %2630 = vmatprep.subr.mxu0 0.0
        %2631 = vmatpush1.msra.mxu0 0.0
        %2632 = vmatprep.subr.mxu0 0.0
        %2633 = vmatpush1.msra.mxu0 0.0
        %2634 = vmatprep.subr.mxu0 0.0
        %2635 = vmatpush1.msra.mxu0 0.0
        %2636 = vmatprep.subr.mxu0 0.0
        %2637 = vmatpush1.msra.mxu0 0.0
        %2638 = vmatprep.subr.mxu0 0.0
        %2639 = vmatpush1.msra.mxu0 0.0
        %2640 = vmatprep.subr.mxu0 0.0
        %2641 = vmatpush1.msra.mxu0 0.0
        %2642 = vmatprep.subr.mxu0 0.0
        %2643 = vmatpush1.msra.mxu0 0.0
        %2644 = vmatprep.subr.mxu0 0.0
        %2645 = vmatpush1.msra.mxu0 0.0
        %2646 = vmatprep.subr.mxu0 0.0
        %2647 = vmatpush1.msra.mxu0 0.0
        %2648 = vmatprep.subr.mxu0 0.0
        %2649 = vmatpush1.msra.mxu0 0.0
        %2650 = vmatprep.subr.mxu0 0.0
        %2651 = vmatpush1.msra.mxu0 0.0
        %2652 = vmatprep.subr.mxu0 %v2620
        %2653 = vmatpush1.msra.mxu0 %v2618
        %2654 = vmatprep.subr.mxu0 0.0
        %2655 = vmatpush2.msra.mxu0 0.0
        %2656 = vmatprep.subr.mxu0 0.0
        %2657 = vmatpush2.msra.mxu0 0.0
        %2658 = vmatprep.subr.mxu0 0.0
        %2659 = vmatpush2.msra.mxu0 0.0
        %2660 = vmatprep.subr.mxu0 0.0
        %2661 = vmatpush2.msra.mxu0 0.0
        %2662 = vmatprep.subr.mxu0 0.0
        %2663 = vmatpush2.msra.mxu0 0.0
        %2664 = vmatprep.subr.mxu0 0.0
        %2665 = vmatpush2.msra.mxu0 0.0
        %2666 = vmatprep.subr.mxu0 0.0
        %2667 = vmatpush2.msra.mxu0 0.0
        %2668 = vmatprep.subr.mxu0 0.0
        %2669 = vmatpush2.msra.mxu0 0.0
        %2670 = vmatprep.subr.mxu0 0.0
        %2671 = vmatpush2.msra.mxu0 0.0
        %2672 = vmatprep.subr.mxu0 0.0
        %2673 = vmatpush2.msra.mxu0 0.0
        %2674 = vmatprep.subr.mxu0 0.0
        %2675 = vmatpush2.msra.mxu0 0.0
        %2676 = vmatprep.subr.mxu0 0.0
        %2677 = vmatpush2.msra.mxu0 0.0
        %2678 = vmatprep.subr.mxu0 0.0
        %2679 = vmatpush2.msra.mxu0 0.0
        %2680 = vmatprep.subr.mxu0 0.0
        %2681 = vmatpush2.msra.mxu0 0.0
        %2682 = vmatprep.subr.mxu0 0.0
        %2683 = vmatpush2.msra.mxu0 0.0
        %2684 = vmatprep.subr.mxu0 0.0
        %2685 = vmatpush2.msra.mxu0 0.0
        %2686 = vmatprep.mubr.f32.mxu0 0.0
        %2687 = vmatmul.mubr.f32.gmra.mxu0 %v2503
        %v2688 = vpop.f32.mrf.mxu0
        %v2689 = vadd.f32 0.0, %v2688
        %v2690 = vpop.f32.mrf.mxu0
        %v2691 = vadd.f32 0.0, %v2690
        %2692 = vdwg.mxu0
        %v2693 = vpack.c.bf16 %v2689, %v2689
        %v2694 = vpack.c.bf16 %v2691, %v2691
        %s2695 = scalar_lea.vmem %s5, 256
        %v2696 = vld [vmem:[%s2695] sm:$0xff]
        %v2697 = vld [vmem:[%s2695 + $0x8] sm:$0xff]
        %v2698 = vld [vmem:[%s2695 + $0x10] sm:$0xff]
        %v2699 = vld [vmem:[%s2695 + $0x18] sm:$0xff]
        %v2700 = vld [vmem:[%s2695 + $0x20] sm:$0xff]
        %v2701 = vld [vmem:[%s2695 + $0x28] sm:$0xff]
        %v2702 = vld [vmem:[%s2695 + $0x30] sm:$0xff]
        %v2703 = vld [vmem:[%s2695 + $0x38] sm:$0xff]
        %v2704 = vld [vmem:[%s2695 + $0x40] sm:$0xff]
        %v2705 = vld [vmem:[%s2695 + $0x48] sm:$0xff]
        %v2706 = vld [vmem:[%s2695 + $0x50] sm:$0xff]
        %v2707 = vld [vmem:[%s2695 + $0x58] sm:$0xff]
        %v2708 = vld [vmem:[%s2695 + $0x60] sm:$0xff]
        %v2709 = vld [vmem:[%s2695 + $0x68] sm:$0xff]
        %v2710 = vld [vmem:[%s2695 + $0x70] sm:$0xff]
        %v2711 = vld [vmem:[%s2695 + $0x78] sm:$0xff]
        %v2712 = vld [vmem:[%s2695 + $0x80] sm:$0xff]
        %v2713 = vld [vmem:[%s2695 + $0x88] sm:$0xff]
        %v2714 = vld [vmem:[%s2695 + $0x90] sm:$0xff]
        %v2715 = vld [vmem:[%s2695 + $0x98] sm:$0xff]
        %v2716 = vld [vmem:[%s2695 + $0xa0] sm:$0xff]
        %v2717 = vld [vmem:[%s2695 + $0xa8] sm:$0xff]
        %v2718 = vld [vmem:[%s2695 + $0xb0] sm:$0xff]
        %v2719 = vld [vmem:[%s2695 + $0xb8] sm:$0xff]
        %v2720 = vld [vmem:[%s2695 + $0xc0] sm:$0xff]
        %v2721 = vld [vmem:[%s2695 + $0xc8] sm:$0xff]
        %v2722 = vld [vmem:[%s2695 + $0xd0] sm:$0xff]
        %v2723 = vld [vmem:[%s2695 + $0xd8] sm:$0xff]
        %v2724 = vld [vmem:[%s2695 + $0xe0] sm:$0xff]
        %v2725 = vld [vmem:[%s2695 + $0xe8] sm:$0xff]
        %v2726 = vld [vmem:[%s2695 + $0xf0] sm:$0xff]
        %v2727 = vld [vmem:[%s2695 + $0xf8] sm:$0xff]
        %v2760 = vunpack.c.l.b16 %v2696
        %v2761 = vunpack.c.h.b16 %v2696
        %v2762 = vunpack.c.l.b16 %v2697
        %v2763 = vunpack.c.h.b16 %v2697
        %v2764 = vunpack.c.l.b16 %v2698
        %v2765 = vunpack.c.h.b16 %v2698
        %v2766 = vunpack.c.l.b16 %v2699
        %v2767 = vunpack.c.h.b16 %v2699
        %v2768 = vunpack.c.l.b16 %v2700
        %v2769 = vunpack.c.h.b16 %v2700
        %v2770 = vunpack.c.l.b16 %v2701
        %v2771 = vunpack.c.h.b16 %v2701
        %v2772 = vunpack.c.l.b16 %v2702
        %v2773 = vunpack.c.h.b16 %v2702
        %v2774 = vunpack.c.l.b16 %v2703
        %v2775 = vunpack.c.h.b16 %v2703
        %v2776 = vunpack.c.l.b16 %v2704
        %v2777 = vunpack.c.h.b16 %v2704
        %v2778 = vunpack.c.l.b16 %v2705
        %v2779 = vunpack.c.h.b16 %v2705
        %v2780 = vunpack.c.l.b16 %v2706
        %v2781 = vunpack.c.h.b16 %v2706
        %v2782 = vunpack.c.l.b16 %v2707
        %v2783 = vunpack.c.h.b16 %v2707
        %v2784 = vunpack.c.l.b16 %v2708
        %v2785 = vunpack.c.h.b16 %v2708
        %v2786 = vunpack.c.l.b16 %v2709
        %v2787 = vunpack.c.h.b16 %v2709
        %v2788 = vunpack.c.l.b16 %v2710
        %v2789 = vunpack.c.h.b16 %v2710
        %v2790 = vunpack.c.l.b16 %v2711
        %v2791 = vunpack.c.h.b16 %v2711
        %v2792 = vunpack.c.l.b16 %v2712
        %v2793 = vunpack.c.h.b16 %v2712
        %v2794 = vunpack.c.l.b16 %v2713
        %v2795 = vunpack.c.h.b16 %v2713
        %v2796 = vunpack.c.l.b16 %v2714
        %v2797 = vunpack.c.h.b16 %v2714
        %v2798 = vunpack.c.l.b16 %v2715
        %v2799 = vunpack.c.h.b16 %v2715
        %v2800 = vunpack.c.l.b16 %v2716
        %v2801 = vunpack.c.h.b16 %v2716
        %v2802 = vunpack.c.l.b16 %v2717
        %v2803 = vunpack.c.h.b16 %v2717
        %v2804 = vunpack.c.l.b16 %v2718
        %v2805 = vunpack.c.h.b16 %v2718
        %v2806 = vunpack.c.l.b16 %v2719
        %v2807 = vunpack.c.h.b16 %v2719
        %v2808 = vunpack.c.l.b16 %v2720
        %v2809 = vunpack.c.h.b16 %v2720
        %v2810 = vunpack.c.l.b16 %v2721
        %v2811 = vunpack.c.h.b16 %v2721
        %v2812 = vunpack.c.l.b16 %v2722
        %v2813 = vunpack.c.h.b16 %v2722
        %v2814 = vunpack.c.l.b16 %v2723
        %v2815 = vunpack.c.h.b16 %v2723
        %v2816 = vunpack.c.l.b16 %v2724
        %v2817 = vunpack.c.h.b16 %v2724
        %v2818 = vunpack.c.l.b16 %v2725
        %v2819 = vunpack.c.h.b16 %v2725
        %v2820 = vunpack.c.l.b16 %v2726
        %v2821 = vunpack.c.h.b16 %v2726
        %v2822 = vunpack.c.l.b16 %v2727
        %v2823 = vunpack.c.h.b16 %v2727
        %v2824 = vpack.c.b16 %v2762, %v2760
        %v2825 = vpack.c.b16 %v2763, %v2761
        %v2826 = vpack.c.b16 %v2766, %v2764
        %v2827 = vpack.c.b16 %v2767, %v2765
        %v2828 = vpack.c.b16 %v2770, %v2768
        %v2829 = vpack.c.b16 %v2771, %v2769
        %v2830 = vpack.c.b16 %v2774, %v2772
        %v2831 = vpack.c.b16 %v2775, %v2773
        %v2832 = vpack.c.b16 %v2778, %v2776
        %v2833 = vpack.c.b16 %v2779, %v2777
        %v2834 = vpack.c.b16 %v2782, %v2780
        %v2835 = vpack.c.b16 %v2783, %v2781
        %v2836 = vpack.c.b16 %v2786, %v2784
        %v2837 = vpack.c.b16 %v2787, %v2785
        %v2838 = vpack.c.b16 %v2790, %v2788
        %v2839 = vpack.c.b16 %v2791, %v2789
        %v2840 = vpack.c.b16 %v2794, %v2792
        %v2841 = vpack.c.b16 %v2795, %v2793
        %v2842 = vpack.c.b16 %v2798, %v2796
        %v2843 = vpack.c.b16 %v2799, %v2797
        %v2844 = vpack.c.b16 %v2802, %v2800
        %v2845 = vpack.c.b16 %v2803, %v2801
        %v2846 = vpack.c.b16 %v2806, %v2804
        %v2847 = vpack.c.b16 %v2807, %v2805
        %v2848 = vpack.c.b16 %v2810, %v2808
        %v2849 = vpack.c.b16 %v2811, %v2809
        %v2850 = vpack.c.b16 %v2814, %v2812
        %v2851 = vpack.c.b16 %v2815, %v2813
        %v2852 = vpack.c.b16 %v2818, %v2816
        %v2853 = vpack.c.b16 %v2819, %v2817
        %v2854 = vpack.c.b16 %v2822, %v2820
        %v2855 = vpack.c.b16 %v2823, %v2821
        %2888 = vmatprep.subr.bf16.mxu0 %v2839
        %2889 = vmatpush1.bf16.msra.mxu0 %v2838
        %2890 = vmatprep.subr.bf16.mxu0 %v2837
        %2891 = vmatpush1.bf16.msra.mxu0 %v2836
        %2892 = vmatprep.subr.bf16.mxu0 %v2835
        %2893 = vmatpush1.bf16.msra.mxu0 %v2834
        %2894 = vmatprep.subr.bf16.mxu0 %v2833
        %2895 = vmatpush1.bf16.msra.mxu0 %v2832
        %2896 = vmatprep.subr.bf16.mxu0 %v2831
        %2897 = vmatpush1.bf16.msra.mxu0 %v2830
        %2898 = vmatprep.subr.bf16.mxu0 %v2829
        %2899 = vmatpush1.bf16.msra.mxu0 %v2828
        %2900 = vmatprep.subr.bf16.mxu0 %v2827
        %2901 = vmatpush1.bf16.msra.mxu0 %v2826
        %2902 = vmatprep.subr.bf16.mxu0 %v2825
        %2903 = vmatpush1.bf16.msra.mxu0 %v2824
        %2904 = vmatprep.subr.bf16.mxu0 %v2855
        %2905 = vmatpush2.bf16.msra.mxu0 %v2854
        %2906 = vmatprep.subr.bf16.mxu0 %v2853
        %2907 = vmatpush2.bf16.msra.mxu0 %v2852
        %2908 = vmatprep.subr.bf16.mxu0 %v2851
        %2909 = vmatpush2.bf16.msra.mxu0 %v2850
        %2910 = vmatprep.subr.bf16.mxu0 %v2849
        %2911 = vmatpush2.bf16.msra.mxu0 %v2848
        %2912 = vmatprep.subr.bf16.mxu0 %v2847
        %2913 = vmatpush2.bf16.msra.mxu0 %v2846
        %2914 = vmatprep.subr.bf16.mxu0 %v2845
        %2915 = vmatpush2.bf16.msra.mxu0 %v2844
        %2916 = vmatprep.subr.bf16.mxu0 %v2843
        %2917 = vmatpush2.bf16.msra.mxu0 %v2842
        %2918 = vmatprep.subr.bf16.mxu0 %v2841
        %2919 = vmatpush2.bf16.msra.mxu0 %v2840
        %2920 = vmatprep.mubr.bf16.mxu0 %v2694
        %2921 = vmatmul.mubr.bf16.gmra.mxu0 %v2693
        %v2922 = vpop.f32.mrf.mxu0
        %v2923 = vadd.f32 0.0, %v2922
        %v2924 = vpop.f32.mrf.mxu0
        %v2925 = vadd.f32 0.0, %v2924
        %v2926 = vpop.f32.mrf.mxu0
        %v2927 = vpop.f32.mrf.mxu0
        %2928 = vdwg.mxu0
        %v2961 = vunpack.c.l.b16 %v2584
        %v2962 = vunpack.c.h.b16 %v2584
        %v2963 = vunpack.c.l.b16 %v2585
        %v2964 = vunpack.c.h.b16 %v2585
        %v2965 = vunpack.c.l.b16 %v2586
        %v2966 = vunpack.c.h.b16 %v2586
        %v2967 = vunpack.c.l.b16 %v2587
        %v2968 = vunpack.c.h.b16 %v2587
        %v2969 = vunpack.c.l.b16 %v2588
        %v2970 = vunpack.c.h.b16 %v2588
        %v2971 = vunpack.c.l.b16 %v2589
        %v2972 = vunpack.c.h.b16 %v2589
        %v2973 = vunpack.c.l.b16 %v2590
        %v2974 = vunpack.c.h.b16 %v2590
        %v2975 = vunpack.c.l.b16 %v2591
        %v2976 = vunpack.c.h.b16 %v2591
        %v2977 = vunpack.c.l.b16 %v2592
        %v2978 = vunpack.c.h.b16 %v2592
        %v2979 = vunpack.c.l.b16 %v2593
        %v2980 = vunpack.c.h.b16 %v2593
        %v2981 = vunpack.c.l.b16 %v2594
        %v2982 = vunpack.c.h.b16 %v2594
        %v2983 = vunpack.c.l.b16 %v2595
        %v2984 = vunpack.c.h.b16 %v2595
        %v2985 = vunpack.c.l.b16 %v2596
        %v2986 = vunpack.c.h.b16 %v2596
        %v2987 = vunpack.c.l.b16 %v2597
        %v2988 = vunpack.c.h.b16 %v2597
        %v2989 = vunpack.c.l.b16 %v2598
        %v2990 = vunpack.c.h.b16 %v2598
        %v2991 = vunpack.c.l.b16 %v2599
        %v2992 = vunpack.c.h.b16 %v2599
        %v2993 = vunpack.c.l.b16 %v2600
        %v2994 = vunpack.c.h.b16 %v2600
        %v2995 = vunpack.c.l.b16 %v2601
        %v2996 = vunpack.c.h.b16 %v2601
        %v2997 = vunpack.c.l.b16 %v2602
        %v2998 = vunpack.c.h.b16 %v2602
        %v2999 = vunpack.c.l.b16 %v2603
        %v3000 = vunpack.c.h.b16 %v2603
        %v3001 = vunpack.c.l.b16 %v2604
        %v3002 = vunpack.c.h.b16 %v2604
        %v3003 = vunpack.c.l.b16 %v2605
        %v3004 = vunpack.c.h.b16 %v2605
        %v3005 = vunpack.c.l.b16 %v2606
        %v3006 = vunpack.c.h.b16 %v2606
        %v3007 = vunpack.c.l.b16 %v2607
        %v3008 = vunpack.c.h.b16 %v2607
        %v3009 = vunpack.c.l.b16 %v2608
        %v3010 = vunpack.c.h.b16 %v2608
        %v3011 = vunpack.c.l.b16 %v2609
        %v3012 = vunpack.c.h.b16 %v2609
        %v3013 = vunpack.c.l.b16 %v2610
        %v3014 = vunpack.c.h.b16 %v2610
        %v3015 = vunpack.c.l.b16 %v2611
        %v3016 = vunpack.c.h.b16 %v2611
        %v3017 = vunpack.c.l.b16 %v2612
        %v3018 = vunpack.c.h.b16 %v2612
        %v3019 = vunpack.c.l.b16 %v2613
        %v3020 = vunpack.c.h.b16 %v2613
        %v3021 = vunpack.c.l.b16 %v2614
        %v3022 = vunpack.c.h.b16 %v2614
        %v3023 = vunpack.c.l.b16 %v2615
        %v3024 = vunpack.c.h.b16 %v2615
        %v3025 = vpack.c.b16 %v2963, %v2961
        %v3026 = vpack.c.b16 %v2964, %v2962
        %v3027 = vpack.c.b16 %v2967, %v2965
        %v3028 = vpack.c.b16 %v2968, %v2966
        %v3029 = vpack.c.b16 %v2971, %v2969
        %v3030 = vpack.c.b16 %v2972, %v2970
        %v3031 = vpack.c.b16 %v2975, %v2973
        %v3032 = vpack.c.b16 %v2976, %v2974
        %v3033 = vpack.c.b16 %v2979, %v2977
        %v3034 = vpack.c.b16 %v2980, %v2978
        %v3035 = vpack.c.b16 %v2983, %v2981
        %v3036 = vpack.c.b16 %v2984, %v2982
        %v3037 = vpack.c.b16 %v2987, %v2985
        %v3038 = vpack.c.b16 %v2988, %v2986
        %v3039 = vpack.c.b16 %v2991, %v2989
        %v3040 = vpack.c.b16 %v2992, %v2990
        %v3041 = vpack.c.b16 %v2995, %v2993
        %v3042 = vpack.c.b16 %v2996, %v2994
        %v3043 = vpack.c.b16 %v2999, %v2997
        %v3044 = vpack.c.b16 %v3000, %v2998
        %v3045 = vpack.c.b16 %v3003, %v3001
        %v3046 = vpack.c.b16 %v3004, %v3002
        %v3047 = vpack.c.b16 %v3007, %v3005
        %v3048 = vpack.c.b16 %v3008, %v3006
        %v3049 = vpack.c.b16 %v3011, %v3009
        %v3050 = vpack.c.b16 %v3012, %v3010
        %v3051 = vpack.c.b16 %v3015, %v3013
        %v3052 = vpack.c.b16 %v3016, %v3014
        %v3053 = vpack.c.b16 %v3019, %v3017
        %v3054 = vpack.c.b16 %v3020, %v3018
        %v3055 = vpack.c.b16 %v3023, %v3021
        %v3056 = vpack.c.b16 %v3024, %v3022
        %3089 = vmatprep.subr.bf16.mxu0 %v3040
        %3090 = vmatpush1.bf16.msra.mxu0 %v3039
        %3091 = vmatprep.subr.bf16.mxu0 %v3038
        %3092 = vmatpush1.bf16.msra.mxu0 %v3037
        %3093 = vmatprep.subr.bf16.mxu0 %v3036
        %3094 = vmatpush1.bf16.msra.mxu0 %v3035
        %3095 = vmatprep.subr.bf16.mxu0 %v3034
        %3096 = vmatpush1.bf16.msra.mxu0 %v3033
        %3097 = vmatprep.subr.bf16.mxu0 %v3032
        %3098 = vmatpush1.bf16.msra.mxu0 %v3031
        %3099 = vmatprep.subr.bf16.mxu0 %v3030
        %3100 = vmatpush1.bf16.msra.mxu0 %v3029
        %3101 = vmatprep.subr.bf16.mxu0 %v3028
        %3102 = vmatpush1.bf16.msra.mxu0 %v3027
        %3103 = vmatprep.subr.bf16.mxu0 %v3026
        %3104 = vmatpush1.bf16.msra.mxu0 %v3025
        %3105 = vmatprep.subr.bf16.mxu0 %v3056
        %3106 = vmatpush2.bf16.msra.mxu0 %v3055
        %3107 = vmatprep.subr.bf16.mxu0 %v3054
        %3108 = vmatpush2.bf16.msra.mxu0 %v3053
        %3109 = vmatprep.subr.bf16.mxu0 %v3052
        %3110 = vmatpush2.bf16.msra.mxu0 %v3051
        %3111 = vmatprep.subr.bf16.mxu0 %v3050
        %3112 = vmatpush2.bf16.msra.mxu0 %v3049
        %3113 = vmatprep.subr.bf16.mxu0 %v3048
        %3114 = vmatpush2.bf16.msra.mxu0 %v3047
        %3115 = vmatprep.subr.bf16.mxu0 %v3046
        %3116 = vmatpush2.bf16.msra.mxu0 %v3045
        %3117 = vmatprep.subr.bf16.mxu0 %v3044
        %3118 = vmatpush2.bf16.msra.mxu0 %v3043
        %3119 = vmatprep.subr.bf16.mxu0 %v3042
        %3120 = vmatpush2.bf16.msra.mxu0 %v3041
        %3121 = vmatprep.mubr.bf16.mxu0 %v2583
        %3122 = vmatmul.mubr.bf16.gmra.mxu0 %v2582
        %v3123 = vpop.f32.mrf.mxu0
        %v3124 = vadd.f32 %v2923, %v3123
        %v3125 = vpop.f32.mrf.mxu0
        %v3126 = vadd.f32 %v2925, %v3125
        %v3127 = vpop.f32.mrf.mxu0
        %v3128 = vpop.f32.mrf.mxu0
        %3129 = vdwg.mxu0
        %v3130 = vrot.slane %v2498, 2
        %v3131 = vrot.slane %v2499, 2
        %v3132 = vsel %vm459, %v3130, 0
        %v3134 = vsel %vm459, %v3131, 0
        %3136 = vmatprep.subr.mxu0 0.0
        %3137 = vmatpush1.msra.mxu0 0.0
        %3138 = vmatprep.subr.mxu0 0.0
        %3139 = vmatpush1.msra.mxu0 0.0
        %3140 = vmatprep.subr.mxu0 0.0
        %3141 = vmatpush1.msra.mxu0 0.0
        %3142 = vmatprep.subr.mxu0 0.0
        %3143 = vmatpush1.msra.mxu0 0.0
        %3144 = vmatprep.subr.mxu0 0.0
        %3145 = vmatpush1.msra.mxu0 0.0
        %3146 = vmatprep.subr.mxu0 0.0
        %3147 = vmatpush1.msra.mxu0 0.0
        %3148 = vmatprep.subr.mxu0 0.0
        %3149 = vmatpush1.msra.mxu0 0.0
        %3150 = vmatprep.subr.mxu0 0.0
        %3151 = vmatpush1.msra.mxu0 0.0
        %3152 = vmatprep.subr.mxu0 0.0
        %3153 = vmatpush1.msra.mxu0 0.0
        %3154 = vmatprep.subr.mxu0 0.0
        %3155 = vmatpush1.msra.mxu0 0.0
        %3156 = vmatprep.subr.mxu0 0.0
        %3157 = vmatpush1.msra.mxu0 0.0
        %3158 = vmatprep.subr.mxu0 0.0
        %3159 = vmatpush1.msra.mxu0 0.0
        %3160 = vmatprep.subr.mxu0 0.0
        %3161 = vmatpush1.msra.mxu0 0.0
        %3162 = vmatprep.subr.mxu0 0.0
        %3163 = vmatpush1.msra.mxu0 0.0
        %3164 = vmatprep.subr.mxu0 0.0
        %3165 = vmatpush1.msra.mxu0 0.0
        %3166 = vmatprep.subr.mxu0 %v3134
        %3167 = vmatpush1.msra.mxu0 %v3132
        %3168 = vmatprep.subr.mxu0 0.0
        %3169 = vmatpush2.msra.mxu0 0.0
        %3170 = vmatprep.subr.mxu0 0.0
        %3171 = vmatpush2.msra.mxu0 0.0
        %3172 = vmatprep.subr.mxu0 0.0
        %3173 = vmatpush2.msra.mxu0 0.0
        %3174 = vmatprep.subr.mxu0 0.0
        %3175 = vmatpush2.msra.mxu0 0.0
        %3176 = vmatprep.subr.mxu0 0.0
        %3177 = vmatpush2.msra.mxu0 0.0
        %3178 = vmatprep.subr.mxu0 0.0
        %3179 = vmatpush2.msra.mxu0 0.0
        %3180 = vmatprep.subr.mxu0 0.0
        %3181 = vmatpush2.msra.mxu0 0.0
        %3182 = vmatprep.subr.mxu0 0.0
        %3183 = vmatpush2.msra.mxu0 0.0
        %3184 = vmatprep.subr.mxu0 0.0
        %3185 = vmatpush2.msra.mxu0 0.0
        %3186 = vmatprep.subr.mxu0 0.0
        %3187 = vmatpush2.msra.mxu0 0.0
        %3188 = vmatprep.subr.mxu0 0.0
        %3189 = vmatpush2.msra.mxu0 0.0
        %3190 = vmatprep.subr.mxu0 0.0
        %3191 = vmatpush2.msra.mxu0 0.0
        %3192 = vmatprep.subr.mxu0 0.0
        %3193 = vmatpush2.msra.mxu0 0.0
        %3194 = vmatprep.subr.mxu0 0.0
        %3195 = vmatpush2.msra.mxu0 0.0
        %3196 = vmatprep.subr.mxu0 0.0
        %3197 = vmatpush2.msra.mxu0 0.0
        %3198 = vmatprep.subr.mxu0 0.0
        %3199 = vmatpush2.msra.mxu0 0.0
        %3200 = vmatprep.mubr.f32.mxu0 0.0
        %3201 = vmatmul.mubr.f32.gmra.mxu0 %v2503
        %v3202 = vpop.f32.mrf.mxu0
        %v3203 = vadd.f32 0.0, %v3202
        %v3204 = vpop.f32.mrf.mxu0
        %v3205 = vadd.f32 0.0, %v3204
        %3206 = vdwg.mxu0
        %v3207 = vpack.c.bf16 %v3203, %v3203
        %v3208 = vpack.c.bf16 %v3205, %v3205
        %s3209 = scalar_lea.vmem %s5, 512
        %v3210 = vld [vmem:[%s3209] sm:$0xff]
        %v3211 = vld [vmem:[%s3209 + $0x8] sm:$0xff]
        %v3212 = vld [vmem:[%s3209 + $0x10] sm:$0xff]
        %v3213 = vld [vmem:[%s3209 + $0x18] sm:$0xff]
        %v3214 = vld [vmem:[%s3209 + $0x20] sm:$0xff]
        %v3215 = vld [vmem:[%s3209 + $0x28] sm:$0xff]
        %v3216 = vld [vmem:[%s3209 + $0x30] sm:$0xff]
        %v3217 = vld [vmem:[%s3209 + $0x38] sm:$0xff]
        %v3218 = vld [vmem:[%s3209 + $0x40] sm:$0xff]
        %v3219 = vld [vmem:[%s3209 + $0x48] sm:$0xff]
        %v3220 = vld [vmem:[%s3209 + $0x50] sm:$0xff]
        %v3221 = vld [vmem:[%s3209 + $0x58] sm:$0xff]
        %v3222 = vld [vmem:[%s3209 + $0x60] sm:$0xff]
        %v3223 = vld [vmem:[%s3209 + $0x68] sm:$0xff]
        %v3224 = vld [vmem:[%s3209 + $0x70] sm:$0xff]
        %v3225 = vld [vmem:[%s3209 + $0x78] sm:$0xff]
        %v3226 = vld [vmem:[%s3209 + $0x80] sm:$0xff]
        %v3227 = vld [vmem:[%s3209 + $0x88] sm:$0xff]
        %v3228 = vld [vmem:[%s3209 + $0x90] sm:$0xff]
        %v3229 = vld [vmem:[%s3209 + $0x98] sm:$0xff]
        %v3230 = vld [vmem:[%s3209 + $0xa0] sm:$0xff]
        %v3231 = vld [vmem:[%s3209 + $0xa8] sm:$0xff]
        %v3232 = vld [vmem:[%s3209 + $0xb0] sm:$0xff]
        %v3233 = vld [vmem:[%s3209 + $0xb8] sm:$0xff]
        %v3234 = vld [vmem:[%s3209 + $0xc0] sm:$0xff]
        %v3235 = vld [vmem:[%s3209 + $0xc8] sm:$0xff]
        %v3236 = vld [vmem:[%s3209 + $0xd0] sm:$0xff]
        %v3237 = vld [vmem:[%s3209 + $0xd8] sm:$0xff]
        %v3238 = vld [vmem:[%s3209 + $0xe0] sm:$0xff]
        %v3239 = vld [vmem:[%s3209 + $0xe8] sm:$0xff]
        %v3240 = vld [vmem:[%s3209 + $0xf0] sm:$0xff]
        %v3241 = vld [vmem:[%s3209 + $0xf8] sm:$0xff]
        %v3274 = vunpack.c.l.b16 %v3210
        %v3275 = vunpack.c.h.b16 %v3210
        %v3276 = vunpack.c.l.b16 %v3211
        %v3277 = vunpack.c.h.b16 %v3211
        %v3278 = vunpack.c.l.b16 %v3212
        %v3279 = vunpack.c.h.b16 %v3212
        %v3280 = vunpack.c.l.b16 %v3213
        %v3281 = vunpack.c.h.b16 %v3213
        %v3282 = vunpack.c.l.b16 %v3214
        %v3283 = vunpack.c.h.b16 %v3214
        %v3284 = vunpack.c.l.b16 %v3215
        %v3285 = vunpack.c.h.b16 %v3215
        %v3286 = vunpack.c.l.b16 %v3216
        %v3287 = vunpack.c.h.b16 %v3216
        %v3288 = vunpack.c.l.b16 %v3217
        %v3289 = vunpack.c.h.b16 %v3217
        %v3290 = vunpack.c.l.b16 %v3218
        %v3291 = vunpack.c.h.b16 %v3218
        %v3292 = vunpack.c.l.b16 %v3219
        %v3293 = vunpack.c.h.b16 %v3219
        %v3294 = vunpack.c.l.b16 %v3220
        %v3295 = vunpack.c.h.b16 %v3220
        %v3296 = vunpack.c.l.b16 %v3221
        %v3297 = vunpack.c.h.b16 %v3221
        %v3298 = vunpack.c.l.b16 %v3222
        %v3299 = vunpack.c.h.b16 %v3222
        %v3300 = vunpack.c.l.b16 %v3223
        %v3301 = vunpack.c.h.b16 %v3223
        %v3302 = vunpack.c.l.b16 %v3224
        %v3303 = vunpack.c.h.b16 %v3224
        %v3304 = vunpack.c.l.b16 %v3225
        %v3305 = vunpack.c.h.b16 %v3225
        %v3306 = vunpack.c.l.b16 %v3226
        %v3307 = vunpack.c.h.b16 %v3226
        %v3308 = vunpack.c.l.b16 %v3227
        %v3309 = vunpack.c.h.b16 %v3227
        %v3310 = vunpack.c.l.b16 %v3228
        %v3311 = vunpack.c.h.b16 %v3228
        %v3312 = vunpack.c.l.b16 %v3229
        %v3313 = vunpack.c.h.b16 %v3229
        %v3314 = vunpack.c.l.b16 %v3230
        %v3315 = vunpack.c.h.b16 %v3230
        %v3316 = vunpack.c.l.b16 %v3231
        %v3317 = vunpack.c.h.b16 %v3231
        %v3318 = vunpack.c.l.b16 %v3232
        %v3319 = vunpack.c.h.b16 %v3232
        %v3320 = vunpack.c.l.b16 %v3233
        %v3321 = vunpack.c.h.b16 %v3233
        %v3322 = vunpack.c.l.b16 %v3234
        %v3323 = vunpack.c.h.b16 %v3234
        %v3324 = vunpack.c.l.b16 %v3235
        %v3325 = vunpack.c.h.b16 %v3235
        %v3326 = vunpack.c.l.b16 %v3236
        %v3327 = vunpack.c.h.b16 %v3236
        %v3328 = vunpack.c.l.b16 %v3237
        %v3329 = vunpack.c.h.b16 %v3237
        %v3330 = vunpack.c.l.b16 %v3238
        %v3331 = vunpack.c.h.b16 %v3238
        %v3332 = vunpack.c.l.b16 %v3239
        %v3333 = vunpack.c.h.b16 %v3239
        %v3334 = vunpack.c.l.b16 %v3240
        %v3335 = vunpack.c.h.b16 %v3240
        %v3336 = vunpack.c.l.b16 %v3241
        %v3337 = vunpack.c.h.b16 %v3241
        %v3338 = vpack.c.b16 %v3276, %v3274
        %v3339 = vpack.c.b16 %v3277, %v3275
        %v3340 = vpack.c.b16 %v3280, %v3278
        %v3341 = vpack.c.b16 %v3281, %v3279
        %v3342 = vpack.c.b16 %v3284, %v3282
        %v3343 = vpack.c.b16 %v3285, %v3283
        %v3344 = vpack.c.b16 %v3288, %v3286
        %v3345 = vpack.c.b16 %v3289, %v3287
        %v3346 = vpack.c.b16 %v3292, %v3290
        %v3347 = vpack.c.b16 %v3293, %v3291
        %v3348 = vpack.c.b16 %v3296, %v3294
        %v3349 = vpack.c.b16 %v3297, %v3295
        %v3350 = vpack.c.b16 %v3300, %v3298
        %v3351 = vpack.c.b16 %v3301, %v3299
        %v3352 = vpack.c.b16 %v3304, %v3302
        %v3353 = vpack.c.b16 %v3305, %v3303
        %v3354 = vpack.c.b16 %v3308, %v3306
        %v3355 = vpack.c.b16 %v3309, %v3307
        %v3356 = vpack.c.b16 %v3312, %v3310
        %v3357 = vpack.c.b16 %v3313, %v3311
        %v3358 = vpack.c.b16 %v3316, %v3314
        %v3359 = vpack.c.b16 %v3317, %v3315
        %v3360 = vpack.c.b16 %v3320, %v3318
        %v3361 = vpack.c.b16 %v3321, %v3319
        %v3362 = vpack.c.b16 %v3324, %v3322
        %v3363 = vpack.c.b16 %v3325, %v3323
        %v3364 = vpack.c.b16 %v3328, %v3326
        %v3365 = vpack.c.b16 %v3329, %v3327
        %v3366 = vpack.c.b16 %v3332, %v3330
        %v3367 = vpack.c.b16 %v3333, %v3331
        %v3368 = vpack.c.b16 %v3336, %v3334
        %v3369 = vpack.c.b16 %v3337, %v3335
        %3402 = vmatprep.subr.bf16.mxu0 %v3353
        %3403 = vmatpush1.bf16.msra.mxu0 %v3352
        %3404 = vmatprep.subr.bf16.mxu0 %v3351
        %3405 = vmatpush1.bf16.msra.mxu0 %v3350
        %3406 = vmatprep.subr.bf16.mxu0 %v3349
        %3407 = vmatpush1.bf16.msra.mxu0 %v3348
        %3408 = vmatprep.subr.bf16.mxu0 %v3347
        %3409 = vmatpush1.bf16.msra.mxu0 %v3346
        %3410 = vmatprep.subr.bf16.mxu0 %v3345
        %3411 = vmatpush1.bf16.msra.mxu0 %v3344
        %3412 = vmatprep.subr.bf16.mxu0 %v3343
        %3413 = vmatpush1.bf16.msra.mxu0 %v3342
        %3414 = vmatprep.subr.bf16.mxu0 %v3341
        %3415 = vmatpush1.bf16.msra.mxu0 %v3340
        %3416 = vmatprep.subr.bf16.mxu0 %v3339
        %3417 = vmatpush1.bf16.msra.mxu0 %v3338
        %3418 = vmatprep.subr.bf16.mxu0 %v3369
        %3419 = vmatpush2.bf16.msra.mxu0 %v3368
        %3420 = vmatprep.subr.bf16.mxu0 %v3367
        %3421 = vmatpush2.bf16.msra.mxu0 %v3366
        %3422 = vmatprep.subr.bf16.mxu0 %v3365
        %3423 = vmatpush2.bf16.msra.mxu0 %v3364
        %3424 = vmatprep.subr.bf16.mxu0 %v3363
        %3425 = vmatpush2.bf16.msra.mxu0 %v3362
        %3426 = vmatprep.subr.bf16.mxu0 %v3361
        %3427 = vmatpush2.bf16.msra.mxu0 %v3360
        %3428 = vmatprep.subr.bf16.mxu0 %v3359
        %3429 = vmatpush2.bf16.msra.mxu0 %v3358
        %3430 = vmatprep.subr.bf16.mxu0 %v3357
        %3431 = vmatpush2.bf16.msra.mxu0 %v3356
        %3432 = vmatprep.subr.bf16.mxu0 %v3355
        %3433 = vmatpush2.bf16.msra.mxu0 %v3354
        %3434 = vmatprep.mubr.bf16.mxu0 %v3208
        %3435 = vmatmul.mubr.bf16.gmra.mxu0 %v3207
        %v3436 = vpop.f32.mrf.mxu0
        %v3437 = vadd.f32 0.0, %v3436
        %v3438 = vpop.f32.mrf.mxu0
        %v3439 = vadd.f32 0.0, %v3438
        %v3440 = vpop.f32.mrf.mxu0
        %v3441 = vpop.f32.mrf.mxu0
        %3442 = vdwg.mxu0
        %v3443 = vadd.f32 %v3124, %v3437
        %v3444 = vadd.f32 %v3126, %v3439
        %v3445 = vrot.slane %v2498, 3
        %v3446 = vrot.slane %v2499, 3
        %v3447 = vsel %vm459, %v3445, 0
        %v3449 = vsel %vm459, %v3446, 0
        %3451 = vmatprep.subr.mxu0 0.0
        %3452 = vmatpush1.msra.mxu0 0.0
        %3453 = vmatprep.subr.mxu0 0.0
        %3454 = vmatpush1.msra.mxu0 0.0
        %3455 = vmatprep.subr.mxu0 0.0
        %3456 = vmatpush1.msra.mxu0 0.0
        %3457 = vmatprep.subr.mxu0 0.0
        %3458 = vmatpush1.msra.mxu0 0.0
        %3459 = vmatprep.subr.mxu0 0.0
        %3460 = vmatpush1.msra.mxu0 0.0
        %3461 = vmatprep.subr.mxu0 0.0
        %3462 = vmatpush1.msra.mxu0 0.0
        %3463 = vmatprep.subr.mxu0 0.0
        %3464 = vmatpush1.msra.mxu0 0.0
        %3465 = vmatprep.subr.mxu0 0.0
        %3466 = vmatpush1.msra.mxu0 0.0
        %3467 = vmatprep.subr.mxu0 0.0
        %3468 = vmatpush1.msra.mxu0 0.0
        %3469 = vmatprep.subr.mxu0 0.0
        %3470 = vmatpush1.msra.mxu0 0.0
        %3471 = vmatprep.subr.mxu0 0.0
        %3472 = vmatpush1.msra.mxu0 0.0
        %3473 = vmatprep.subr.mxu0 0.0
        %3474 = vmatpush1.msra.mxu0 0.0
        %3475 = vmatprep.subr.mxu0 0.0
        %3476 = vmatpush1.msra.mxu0 0.0
        %3477 = vmatprep.subr.mxu0 0.0
        %3478 = vmatpush1.msra.mxu0 0.0
        %3479 = vmatprep.subr.mxu0 0.0
        %3480 = vmatpush1.msra.mxu0 0.0
        %3481 = vmatprep.subr.mxu0 %v3449
        %3482 = vmatpush1.msra.mxu0 %v3447
        %3483 = vmatprep.subr.mxu0 0.0
        %3484 = vmatpush2.msra.mxu0 0.0
        %3485 = vmatprep.subr.mxu0 0.0
        %3486 = vmatpush2.msra.mxu0 0.0
        %3487 = vmatprep.subr.mxu0 0.0
        %3488 = vmatpush2.msra.mxu0 0.0
        %3489 = vmatprep.subr.mxu0 0.0
        %3490 = vmatpush2.msra.mxu0 0.0
        %3491 = vmatprep.subr.mxu0 0.0
        %3492 = vmatpush2.msra.mxu0 0.0
        %3493 = vmatprep.subr.mxu0 0.0
        %3494 = vmatpush2.msra.mxu0 0.0
        %3495 = vmatprep.subr.mxu0 0.0
        %3496 = vmatpush2.msra.mxu0 0.0
        %3497 = vmatprep.subr.mxu0 0.0
        %3498 = vmatpush2.msra.mxu0 0.0
        %3499 = vmatprep.subr.mxu0 0.0
        %3500 = vmatpush2.msra.mxu0 0.0
        %3501 = vmatprep.subr.mxu0 0.0
        %3502 = vmatpush2.msra.mxu0 0.0
        %3503 = vmatprep.subr.mxu0 0.0
        %3504 = vmatpush2.msra.mxu0 0.0
        %3505 = vmatprep.subr.mxu0 0.0
        %3506 = vmatpush2.msra.mxu0 0.0
        %3507 = vmatprep.subr.mxu0 0.0
        %3508 = vmatpush2.msra.mxu0 0.0
        %3509 = vmatprep.subr.mxu0 0.0
        %3510 = vmatpush2.msra.mxu0 0.0
        %3511 = vmatprep.subr.mxu0 0.0
        %3512 = vmatpush2.msra.mxu0 0.0
        %3513 = vmatprep.subr.mxu0 0.0
        %3514 = vmatpush2.msra.mxu0 0.0
        %3515 = vmatprep.mubr.f32.mxu0 0.0
        %3516 = vmatmul.mubr.f32.gmra.mxu0 %v2503
        %v3517 = vpop.f32.mrf.mxu0
        %v3518 = vadd.f32 0.0, %v3517
        %v3519 = vpop.f32.mrf.mxu0
        %v3520 = vadd.f32 0.0, %v3519
        %3521 = vdwg.mxu0
        %v3522 = vpack.c.bf16 %v3518, %v3518
        %v3523 = vpack.c.bf16 %v3520, %v3520
        %s3524 = scalar_lea.vmem %s5, 768
        %v3525 = vld [vmem:[%s3524] sm:$0xff]
        %v3526 = vld [vmem:[%s3524 + $0x8] sm:$0xff]
        %v3527 = vld [vmem:[%s3524 + $0x10] sm:$0xff]
        %v3528 = vld [vmem:[%s3524 + $0x18] sm:$0xff]
        %v3529 = vld [vmem:[%s3524 + $0x20] sm:$0xff]
        %v3530 = vld [vmem:[%s3524 + $0x28] sm:$0xff]
        %v3531 = vld [vmem:[%s3524 + $0x30] sm:$0xff]
        %v3532 = vld [vmem:[%s3524 + $0x38] sm:$0xff]
        %v3533 = vld [vmem:[%s3524 + $0x40] sm:$0xff]
        %v3534 = vld [vmem:[%s3524 + $0x48] sm:$0xff]
        %v3535 = vld [vmem:[%s3524 + $0x50] sm:$0xff]
        %v3536 = vld [vmem:[%s3524 + $0x58] sm:$0xff]
        %v3537 = vld [vmem:[%s3524 + $0x60] sm:$0xff]
        %v3538 = vld [vmem:[%s3524 + $0x68] sm:$0xff]
        %v3539 = vld [vmem:[%s3524 + $0x70] sm:$0xff]
        %v3540 = vld [vmem:[%s3524 + $0x78] sm:$0xff]
        %v3541 = vld [vmem:[%s3524 + $0x80] sm:$0xff]
        %v3542 = vld [vmem:[%s3524 + $0x88] sm:$0xff]
        %v3543 = vld [vmem:[%s3524 + $0x90] sm:$0xff]
        %v3544 = vld [vmem:[%s3524 + $0x98] sm:$0xff]
        %v3545 = vld [vmem:[%s3524 + $0xa0] sm:$0xff]
        %v3546 = vld [vmem:[%s3524 + $0xa8] sm:$0xff]
        %v3547 = vld [vmem:[%s3524 + $0xb0] sm:$0xff]
        %v3548 = vld [vmem:[%s3524 + $0xb8] sm:$0xff]
        %v3549 = vld [vmem:[%s3524 + $0xc0] sm:$0xff]
        %v3550 = vld [vmem:[%s3524 + $0xc8] sm:$0xff]
        %v3551 = vld [vmem:[%s3524 + $0xd0] sm:$0xff]
        %v3552 = vld [vmem:[%s3524 + $0xd8] sm:$0xff]
        %v3553 = vld [vmem:[%s3524 + $0xe0] sm:$0xff]
        %v3554 = vld [vmem:[%s3524 + $0xe8] sm:$0xff]
        %v3555 = vld [vmem:[%s3524 + $0xf0] sm:$0xff]
        %v3556 = vld [vmem:[%s3524 + $0xf8] sm:$0xff]
        %v3589 = vunpack.c.l.b16 %v3525
        %v3590 = vunpack.c.h.b16 %v3525
        %v3591 = vunpack.c.l.b16 %v3526
        %v3592 = vunpack.c.h.b16 %v3526
        %v3593 = vunpack.c.l.b16 %v3527
        %v3594 = vunpack.c.h.b16 %v3527
        %v3595 = vunpack.c.l.b16 %v3528
        %v3596 = vunpack.c.h.b16 %v3528
        %v3597 = vunpack.c.l.b16 %v3529
        %v3598 = vunpack.c.h.b16 %v3529
        %v3599 = vunpack.c.l.b16 %v3530
        %v3600 = vunpack.c.h.b16 %v3530
        %v3601 = vunpack.c.l.b16 %v3531
        %v3602 = vunpack.c.h.b16 %v3531
        %v3603 = vunpack.c.l.b16 %v3532
        %v3604 = vunpack.c.h.b16 %v3532
        %v3605 = vunpack.c.l.b16 %v3533
        %v3606 = vunpack.c.h.b16 %v3533
        %v3607 = vunpack.c.l.b16 %v3534
        %v3608 = vunpack.c.h.b16 %v3534
        %v3609 = vunpack.c.l.b16 %v3535
        %v3610 = vunpack.c.h.b16 %v3535
        %v3611 = vunpack.c.l.b16 %v3536
        %v3612 = vunpack.c.h.b16 %v3536
        %v3613 = vunpack.c.l.b16 %v3537
        %v3614 = vunpack.c.h.b16 %v3537
        %v3615 = vunpack.c.l.b16 %v3538
        %v3616 = vunpack.c.h.b16 %v3538
        %v3617 = vunpack.c.l.b16 %v3539
        %v3618 = vunpack.c.h.b16 %v3539
        %v3619 = vunpack.c.l.b16 %v3540
        %v3620 = vunpack.c.h.b16 %v3540
        %v3621 = vunpack.c.l.b16 %v3541
        %v3622 = vunpack.c.h.b16 %v3541
        %v3623 = vunpack.c.l.b16 %v3542
        %v3624 = vunpack.c.h.b16 %v3542
        %v3625 = vunpack.c.l.b16 %v3543
        %v3626 = vunpack.c.h.b16 %v3543
        %v3627 = vunpack.c.l.b16 %v3544
        %v3628 = vunpack.c.h.b16 %v3544
        %v3629 = vunpack.c.l.b16 %v3545
        %v3630 = vunpack.c.h.b16 %v3545
        %v3631 = vunpack.c.l.b16 %v3546
        %v3632 = vunpack.c.h.b16 %v3546
        %v3633 = vunpack.c.l.b16 %v3547
        %v3634 = vunpack.c.h.b16 %v3547
        %v3635 = vunpack.c.l.b16 %v3548
        %v3636 = vunpack.c.h.b16 %v3548
        %v3637 = vunpack.c.l.b16 %v3549
        %v3638 = vunpack.c.h.b16 %v3549
        %v3639 = vunpack.c.l.b16 %v3550
        %v3640 = vunpack.c.h.b16 %v3550
        %v3641 = vunpack.c.l.b16 %v3551
        %v3642 = vunpack.c.h.b16 %v3551
        %v3643 = vunpack.c.l.b16 %v3552
        %v3644 = vunpack.c.h.b16 %v3552
        %v3645 = vunpack.c.l.b16 %v3553
        %v3646 = vunpack.c.h.b16 %v3553
        %v3647 = vunpack.c.l.b16 %v3554
        %v3648 = vunpack.c.h.b16 %v3554
        %v3649 = vunpack.c.l.b16 %v3555
        %v3650 = vunpack.c.h.b16 %v3555
        %v3651 = vunpack.c.l.b16 %v3556
        %v3652 = vunpack.c.h.b16 %v3556
        %v3653 = vpack.c.b16 %v3591, %v3589
        %v3654 = vpack.c.b16 %v3592, %v3590
        %v3655 = vpack.c.b16 %v3595, %v3593
        %v3656 = vpack.c.b16 %v3596, %v3594
        %v3657 = vpack.c.b16 %v3599, %v3597
        %v3658 = vpack.c.b16 %v3600, %v3598
        %v3659 = vpack.c.b16 %v3603, %v3601
        %v3660 = vpack.c.b16 %v3604, %v3602
        %v3661 = vpack.c.b16 %v3607, %v3605
        %v3662 = vpack.c.b16 %v3608, %v3606
        %v3663 = vpack.c.b16 %v3611, %v3609
        %v3664 = vpack.c.b16 %v3612, %v3610
        %v3665 = vpack.c.b16 %v3615, %v3613
        %v3666 = vpack.c.b16 %v3616, %v3614
        %v3667 = vpack.c.b16 %v3619, %v3617
        %v3668 = vpack.c.b16 %v3620, %v3618
        %v3669 = vpack.c.b16 %v3623, %v3621
        %v3670 = vpack.c.b16 %v3624, %v3622
        %v3671 = vpack.c.b16 %v3627, %v3625
        %v3672 = vpack.c.b16 %v3628, %v3626
        %v3673 = vpack.c.b16 %v3631, %v3629
        %v3674 = vpack.c.b16 %v3632, %v3630
        %v3675 = vpack.c.b16 %v3635, %v3633
        %v3676 = vpack.c.b16 %v3636, %v3634
        %v3677 = vpack.c.b16 %v3639, %v3637
        %v3678 = vpack.c.b16 %v3640, %v3638
        %v3679 = vpack.c.b16 %v3643, %v3641
        %v3680 = vpack.c.b16 %v3644, %v3642
        %v3681 = vpack.c.b16 %v3647, %v3645
        %v3682 = vpack.c.b16 %v3648, %v3646
        %v3683 = vpack.c.b16 %v3651, %v3649
        %v3684 = vpack.c.b16 %v3652, %v3650
        %3717 = vmatprep.subr.bf16.mxu0 %v3668
        %3718 = vmatpush1.bf16.msra.mxu0 %v3667
        %3719 = vmatprep.subr.bf16.mxu0 %v3666
        %3720 = vmatpush1.bf16.msra.mxu0 %v3665
        %3721 = vmatprep.subr.bf16.mxu0 %v3664
        %3722 = vmatpush1.bf16.msra.mxu0 %v3663
        %3723 = vmatprep.subr.bf16.mxu0 %v3662
        %3724 = vmatpush1.bf16.msra.mxu0 %v3661
        %3725 = vmatprep.subr.bf16.mxu0 %v3660
        %3726 = vmatpush1.bf16.msra.mxu0 %v3659
        %3727 = vmatprep.subr.bf16.mxu0 %v3658
        %3728 = vmatpush1.bf16.msra.mxu0 %v3657
        %3729 = vmatprep.subr.bf16.mxu0 %v3656
        %3730 = vmatpush1.bf16.msra.mxu0 %v3655
        %3731 = vmatprep.subr.bf16.mxu0 %v3654
        %3732 = vmatpush1.bf16.msra.mxu0 %v3653
        %3733 = vmatprep.subr.bf16.mxu0 %v3684
        %3734 = vmatpush2.bf16.msra.mxu0 %v3683
        %3735 = vmatprep.subr.bf16.mxu0 %v3682
        %3736 = vmatpush2.bf16.msra.mxu0 %v3681
        %3737 = vmatprep.subr.bf16.mxu0 %v3680
        %3738 = vmatpush2.bf16.msra.mxu0 %v3679
        %3739 = vmatprep.subr.bf16.mxu0 %v3678
        %3740 = vmatpush2.bf16.msra.mxu0 %v3677
        %3741 = vmatprep.subr.bf16.mxu0 %v3676
        %3742 = vmatpush2.bf16.msra.mxu0 %v3675
        %3743 = vmatprep.subr.bf16.mxu0 %v3674
        %3744 = vmatpush2.bf16.msra.mxu0 %v3673
        %3745 = vmatprep.subr.bf16.mxu0 %v3672
        %3746 = vmatpush2.bf16.msra.mxu0 %v3671
        %3747 = vmatprep.subr.bf16.mxu0 %v3670
        %3748 = vmatpush2.bf16.msra.mxu0 %v3669
        %3749 = vmatprep.mubr.bf16.mxu0 %v3523
        %3750 = vmatmul.mubr.bf16.gmra.mxu0 %v3522
        %v3751 = vpop.f32.mrf.mxu0
        %v3752 = vadd.f32 0.0, %v3751
        %v3753 = vpop.f32.mrf.mxu0
        %v3754 = vadd.f32 0.0, %v3753
        %v3755 = vpop.f32.mrf.mxu0
        %v3756 = vpop.f32.mrf.mxu0
        %3757 = vdwg.mxu0
        %v3758 = vadd.f32 %v3443, %v3752
        %v3759 = vadd.f32 %v3444, %v3754
        %v3760 = vld [vmem:[%s6] sm:$0x3]
        %v3762 = vlaneseq
        %v3763 = vshrl.u32 %v3762, 7
        %v3764 = vsub.s32 0, %v3763
        %v3765 = vrot.slane %v3760, %v3764
        %v3766 = vlaneseq
        %v3767 = vshrl.u32 %v3766, 7
        %v3768 = vsub.s32 1, %v3767
        %v3769 = vrot.slane %v3760, %v3768
        %v3772 = vadd.f32 %v3758, %v3765
        %v3773 = vadd.f32 %v3759, %v3769
        %v3774 = vmax.f32 %v3772, 0.0
        %v3775 = vmax.f32 %v3773, 0.0
        %v3776 = vpack.c.bf16 %v3774, %v3774
        %v3777 = vpack.c.bf16 %v3775, %v3775
        %v3778 = vld [vmem:[%s7] sm:$0xf]
        %v3779 = vld [vmem:[%s7 + $0x4] sm:$0xf]
        %v3780 = vld [vmem:[%s7 + $0x8] sm:$0xf]
        %v3781 = vld [vmem:[%s7 + $0xc] sm:$0xf]
        %v3782 = vld [vmem:[%s7 + $0x10] sm:$0xf]
        %v3783 = vld [vmem:[%s7 + $0x14] sm:$0xf]
        %v3784 = vld [vmem:[%s7 + $0x18] sm:$0xf]
        %v3785 = vld [vmem:[%s7 + $0x1c] sm:$0xf]
        %v3786 = vld [vmem:[%s7 + $0x20] sm:$0xf]
        %v3787 = vld [vmem:[%s7 + $0x24] sm:$0xf]
        %v3788 = vld [vmem:[%s7 + $0x28] sm:$0xf]
        %v3789 = vld [vmem:[%s7 + $0x2c] sm:$0xf]
        %v3790 = vld [vmem:[%s7 + $0x30] sm:$0xf]
        %v3791 = vld [vmem:[%s7 + $0x34] sm:$0xf]
        %v3792 = vld [vmem:[%s7 + $0x38] sm:$0xf]
        %v3793 = vld [vmem:[%s7 + $0x3c] sm:$0xf]
        %v3794 = vld [vmem:[%s7 + $0x40] sm:$0xf]
        %v3795 = vld [vmem:[%s7 + $0x44] sm:$0xf]
        %v3796 = vld [vmem:[%s7 + $0x48] sm:$0xf]
        %v3797 = vld [vmem:[%s7 + $0x4c] sm:$0xf]
        %v3798 = vld [vmem:[%s7 + $0x50] sm:$0xf]
        %v3799 = vld [vmem:[%s7 + $0x54] sm:$0xf]
        %v3800 = vld [vmem:[%s7 + $0x58] sm:$0xf]
        %v3801 = vld [vmem:[%s7 + $0x5c] sm:$0xf]
        %s3802 = scalar_lea.vmem %s7, 96
        %v3803 = vld [vmem:[%s3802] sm:$0xf]
        %v3804 = vld [vmem:[%s3802 + $0x4] sm:$0xf]
        %v3805 = vld [vmem:[%s3802 + $0x8] sm:$0xf]
        %v3806 = vld [vmem:[%s3802 + $0xc] sm:$0xf]
        %v3807 = vld [vmem:[%s3802 + $0x10] sm:$0xf]
        %v3808 = vld [vmem:[%s3802 + $0x14] sm:$0xf]
        %v3809 = vld [vmem:[%s3802 + $0x18] sm:$0xf]
        %v3810 = vld [vmem:[%s3802 + $0x1c] sm:$0xf]
        %v3811 = vld [vmem:[%s3802 + $0x20] sm:$0xf]
        %v3812 = vld [vmem:[%s3802 + $0x24] sm:$0xf]
        %v3813 = vld [vmem:[%s3802 + $0x28] sm:$0xf]
        %v3814 = vld [vmem:[%s3802 + $0x2c] sm:$0xf]
        %v3815 = vld [vmem:[%s3802 + $0x30] sm:$0xf]
        %v3816 = vld [vmem:[%s3802 + $0x34] sm:$0xf]
        %v3817 = vld [vmem:[%s3802 + $0x38] sm:$0xf]
        %v3818 = vld [vmem:[%s3802 + $0x3c] sm:$0xf]
        %v3819 = vld [vmem:[%s3802 + $0x40] sm:$0xf]
        %v3820 = vld [vmem:[%s3802 + $0x44] sm:$0xf]
        %v3821 = vld [vmem:[%s3802 + $0x48] sm:$0xf]
        %v3822 = vld [vmem:[%s3802 + $0x4c] sm:$0xf]
        %v3823 = vld [vmem:[%s3802 + $0x50] sm:$0xf]
        %v3824 = vld [vmem:[%s3802 + $0x54] sm:$0xf]
        %v3825 = vld [vmem:[%s3802 + $0x58] sm:$0xf]
        %v3826 = vld [vmem:[%s3802 + $0x5c] sm:$0xf]
        %v3828 = vshrl.u32 %v3776, 16
        %v3831 = vshrl.u32 %v3777, 16
        %v3858 = vunpack.c.l.b16 %v3803
        %v3859 = vunpack.c.l.b16 %v3804
        %v3860 = vunpack.c.l.b16 %v3805
        %v3861 = vunpack.c.l.b16 %v3806
        %v3862 = vunpack.c.l.b16 %v3807
        %v3863 = vunpack.c.l.b16 %v3808
        %v3864 = vunpack.c.l.b16 %v3809
        %v3865 = vunpack.c.l.b16 %v3810
        %v3866 = vunpack.c.l.b16 %v3811
        %v3867 = vunpack.c.l.b16 %v3812
        %v3868 = vunpack.c.l.b16 %v3813
        %v3869 = vunpack.c.l.b16 %v3814
        %v3870 = vunpack.c.l.b16 %v3815
        %v3871 = vunpack.c.l.b16 %v3816
        %v3872 = vunpack.c.l.b16 %v3817
        %v3873 = vunpack.c.l.b16 %v3818
        %v3874 = vunpack.c.l.b16 %v3819
        %v3875 = vunpack.c.l.b16 %v3820
        %v3876 = vunpack.c.l.b16 %v3821
        %v3877 = vunpack.c.l.b16 %v3822
        %v3878 = vunpack.c.l.b16 %v3823
        %v3879 = vunpack.c.l.b16 %v3824
        %v3880 = vunpack.c.l.b16 %v3825
        %v3881 = vunpack.c.l.b16 %v3826
        %v3882 = vpack.c.b16 %v3859, %v3858
        %v3883 = vpack.c.b16 %v3861, %v3860
        %v3884 = vpack.c.b16 %v3863, %v3862
        %v3885 = vpack.c.b16 %v3865, %v3864
        %v3886 = vpack.c.b16 %v3867, %v3866
        %v3887 = vpack.c.b16 %v3869, %v3868
        %v3888 = vpack.c.b16 %v3871, %v3870
        %v3889 = vpack.c.b16 %v3873, %v3872
        %v3890 = vpack.c.b16 %v3875, %v3874
        %v3891 = vpack.c.b16 %v3877, %v3876
        %v3892 = vpack.c.b16 %v3879, %v3878
        %v3893 = vpack.c.b16 %v3881, %v3880
        %vm3906 = vcmask 523264
        %v3908 = vsel %vm3906, %v3831, 0
        %3910 = vmatprep.subr.bf16.mxu0 0
        %3911 = vmatpush1.bf16.msra.mxu0 %v3889
        %3912 = vmatprep.subr.bf16.mxu0 0
        %3913 = vmatpush1.bf16.msra.mxu0 %v3888
        %3914 = vmatprep.subr.bf16.mxu0 0
        %3915 = vmatpush1.bf16.msra.mxu0 %v3887
        %3916 = vmatprep.subr.bf16.mxu0 0
        %3917 = vmatpush1.bf16.msra.mxu0 %v3886
        %3918 = vmatprep.subr.bf16.mxu0 0
        %3919 = vmatpush1.bf16.msra.mxu0 %v3885
        %3920 = vmatprep.subr.bf16.mxu0 0
        %3921 = vmatpush1.bf16.msra.mxu0 %v3884
        %3922 = vmatprep.subr.bf16.mxu0 0
        %3923 = vmatpush1.bf16.msra.mxu0 %v3883
        %3924 = vmatprep.subr.bf16.mxu0 0
        %3925 = vmatpush1.bf16.msra.mxu0 %v3882
        %3926 = vmatprep.subr.bf16.mxu0 0
        %3927 = vmatpush2.bf16.msra.mxu0 0
        %3928 = vmatprep.subr.bf16.mxu0 0
        %3929 = vmatpush2.bf16.msra.mxu0 0
        %3930 = vmatprep.subr.bf16.mxu0 0
        %3931 = vmatpush2.bf16.msra.mxu0 0
        %3932 = vmatprep.subr.bf16.mxu0 0
        %3933 = vmatpush2.bf16.msra.mxu0 0
        %3934 = vmatprep.subr.bf16.mxu0 0
        %3935 = vmatpush2.bf16.msra.mxu0 %v3893
        %3936 = vmatprep.subr.bf16.mxu0 0
        %3937 = vmatpush2.bf16.msra.mxu0 %v3892
        %3938 = vmatprep.subr.bf16.mxu0 0
        %3939 = vmatpush2.bf16.msra.mxu0 %v3891
        %3940 = vmatprep.subr.bf16.mxu0 0
        %3941 = vmatpush2.bf16.msra.mxu0 %v3890
        %3942 = vmatprep.mubr.bf16.mxu0 %v3908
        %3943 = vmatmul.mubr.bf16.gmra.mxu0 %v3828
        %v3944 = vpop.f32.mrf.mxu0
        %v3945 = vadd.f32 0.0, %v3944
        %v3946 = vpop.f32.mrf.mxu0
        %v3947 = vpop.f32.mrf.mxu0
        %v3948 = vpop.f32.mrf.mxu0
        %3949 = vdwg.mxu0
        %v3974 = vunpack.c.l.b16 %v3778
        %v3975 = vunpack.c.l.b16 %v3779
        %v3976 = vunpack.c.l.b16 %v3780
        %v3977 = vunpack.c.l.b16 %v3781
        %v3978 = vunpack.c.l.b16 %v3782
        %v3979 = vunpack.c.l.b16 %v3783
        %v3980 = vunpack.c.l.b16 %v3784
        %v3981 = vunpack.c.l.b16 %v3785
        %v3982 = vunpack.c.l.b16 %v3786
        %v3983 = vunpack.c.l.b16 %v3787
        %v3984 = vunpack.c.l.b16 %v3788
        %v3985 = vunpack.c.l.b16 %v3789
        %v3986 = vunpack.c.l.b16 %v3790
        %v3987 = vunpack.c.l.b16 %v3791
        %v3988 = vunpack.c.l.b16 %v3792
        %v3989 = vunpack.c.l.b16 %v3793
        %v3990 = vunpack.c.l.b16 %v3794
        %v3991 = vunpack.c.l.b16 %v3795
        %v3992 = vunpack.c.l.b16 %v3796
        %v3993 = vunpack.c.l.b16 %v3797
        %v3994 = vunpack.c.l.b16 %v3798
        %v3995 = vunpack.c.l.b16 %v3799
        %v3996 = vunpack.c.l.b16 %v3800
        %v3997 = vunpack.c.l.b16 %v3801
        %v3998 = vpack.c.b16 %v3975, %v3974
        %v3999 = vpack.c.b16 %v3977, %v3976
        %v4000 = vpack.c.b16 %v3979, %v3978
        %v4001 = vpack.c.b16 %v3981, %v3980
        %v4002 = vpack.c.b16 %v3983, %v3982
        %v4003 = vpack.c.b16 %v3985, %v3984
        %v4004 = vpack.c.b16 %v3987, %v3986
        %v4005 = vpack.c.b16 %v3989, %v3988
        %v4006 = vpack.c.b16 %v3991, %v3990
        %v4007 = vpack.c.b16 %v3993, %v3992
        %v4008 = vpack.c.b16 %v3995, %v3994
        %v4009 = vpack.c.b16 %v3997, %v3996
        %v4022 = vsel %vm3906, %v3777, 0
        %4024 = vmatprep.subr.bf16.mxu0 0
        %4025 = vmatpush1.bf16.msra.mxu0 %v4005
        %4026 = vmatprep.subr.bf16.mxu0 0
        %4027 = vmatpush1.bf16.msra.mxu0 %v4004
        %4028 = vmatprep.subr.bf16.mxu0 0
        %4029 = vmatpush1.bf16.msra.mxu0 %v4003
        %4030 = vmatprep.subr.bf16.mxu0 0
        %4031 = vmatpush1.bf16.msra.mxu0 %v4002
        %4032 = vmatprep.subr.bf16.mxu0 0
        %4033 = vmatpush1.bf16.msra.mxu0 %v4001
        %4034 = vmatprep.subr.bf16.mxu0 0
        %4035 = vmatpush1.bf16.msra.mxu0 %v4000
        %4036 = vmatprep.subr.bf16.mxu0 0
        %4037 = vmatpush1.bf16.msra.mxu0 %v3999
        %4038 = vmatprep.subr.bf16.mxu0 0
        %4039 = vmatpush1.bf16.msra.mxu0 %v3998
        %4040 = vmatprep.subr.bf16.mxu0 0
        %4041 = vmatpush2.bf16.msra.mxu0 0
        %4042 = vmatprep.subr.bf16.mxu0 0
        %4043 = vmatpush2.bf16.msra.mxu0 0
        %4044 = vmatprep.subr.bf16.mxu0 0
        %4045 = vmatpush2.bf16.msra.mxu0 0
        %4046 = vmatprep.subr.bf16.mxu0 0
        %4047 = vmatpush2.bf16.msra.mxu0 0
        %4048 = vmatprep.subr.bf16.mxu0 0
        %4049 = vmatpush2.bf16.msra.mxu0 %v4009
        %4050 = vmatprep.subr.bf16.mxu0 0
        %4051 = vmatpush2.bf16.msra.mxu0 %v4008
        %4052 = vmatprep.subr.bf16.mxu0 0
        %4053 = vmatpush2.bf16.msra.mxu0 %v4007
        %4054 = vmatprep.subr.bf16.mxu0 0
        %4055 = vmatpush2.bf16.msra.mxu0 %v4006
        %4056 = vmatprep.mubr.bf16.mxu0 %v4022
        %4057 = vmatmul.mubr.bf16.gmra.mxu0 %v3776
        %v4058 = vpop.f32.mrf.mxu0
        %v4059 = vadd.f32 %v3945, %v4058
        %v4060 = vpop.f32.mrf.mxu0
        %v4061 = vpop.f32.mrf.mxu0
        %v4062 = vpop.f32.mrf.mxu0
        %4063 = vdwg.mxu0
        %s4064 = scalar_lea.vmem %s7, 192
        %v4065 = vld [vmem:[%s4064] sm:$0xf]
        %v4066 = vld [vmem:[%s4064 + $0x4] sm:$0xf]
        %v4067 = vld [vmem:[%s4064 + $0x8] sm:$0xf]
        %v4068 = vld [vmem:[%s4064 + $0xc] sm:$0xf]
        %v4069 = vld [vmem:[%s4064 + $0x10] sm:$0xf]
        %v4070 = vld [vmem:[%s4064 + $0x14] sm:$0xf]
        %v4071 = vld [vmem:[%s4064 + $0x18] sm:$0xf]
        %v4072 = vld [vmem:[%s4064 + $0x1c] sm:$0xf]
        %v4073 = vld [vmem:[%s4064 + $0x20] sm:$0xf]
        %v4074 = vld [vmem:[%s4064 + $0x24] sm:$0xf]
        %v4075 = vld [vmem:[%s4064 + $0x28] sm:$0xf]
        %v4076 = vld [vmem:[%s4064 + $0x2c] sm:$0xf]
        %v4077 = vld [vmem:[%s4064 + $0x30] sm:$0xf]
        %v4078 = vld [vmem:[%s4064 + $0x34] sm:$0xf]
        %v4079 = vld [vmem:[%s4064 + $0x38] sm:$0xf]
        %v4080 = vld [vmem:[%s4064 + $0x3c] sm:$0xf]
        %v4081 = vld [vmem:[%s4064 + $0x40] sm:$0xf]
        %v4082 = vld [vmem:[%s4064 + $0x44] sm:$0xf]
        %v4083 = vld [vmem:[%s4064 + $0x48] sm:$0xf]
        %v4084 = vld [vmem:[%s4064 + $0x4c] sm:$0xf]
        %v4085 = vld [vmem:[%s4064 + $0x50] sm:$0xf]
        %v4086 = vld [vmem:[%s4064 + $0x54] sm:$0xf]
        %v4087 = vld [vmem:[%s4064 + $0x58] sm:$0xf]
        %v4088 = vld [vmem:[%s4064 + $0x5c] sm:$0xf]
        %v4091 = vrot.slane %v3776, 1
        %v4092 = vrot.slane %v3777, 1
        %v4118 = vunpack.c.l.b16 %v4065
        %v4119 = vunpack.c.l.b16 %v4066
        %v4120 = vunpack.c.l.b16 %v4067
        %v4121 = vunpack.c.l.b16 %v4068
        %v4122 = vunpack.c.l.b16 %v4069
        %v4123 = vunpack.c.l.b16 %v4070
        %v4124 = vunpack.c.l.b16 %v4071
        %v4125 = vunpack.c.l.b16 %v4072
        %v4126 = vunpack.c.l.b16 %v4073
        %v4127 = vunpack.c.l.b16 %v4074
        %v4128 = vunpack.c.l.b16 %v4075
        %v4129 = vunpack.c.l.b16 %v4076
        %v4130 = vunpack.c.l.b16 %v4077
        %v4131 = vunpack.c.l.b16 %v4078
        %v4132 = vunpack.c.l.b16 %v4079
        %v4133 = vunpack.c.l.b16 %v4080
        %v4134 = vunpack.c.l.b16 %v4081
        %v4135 = vunpack.c.l.b16 %v4082
        %v4136 = vunpack.c.l.b16 %v4083
        %v4137 = vunpack.c.l.b16 %v4084
        %v4138 = vunpack.c.l.b16 %v4085
        %v4139 = vunpack.c.l.b16 %v4086
        %v4140 = vunpack.c.l.b16 %v4087
        %v4141 = vunpack.c.l.b16 %v4088
        %v4142 = vpack.c.b16 %v4119, %v4118
        %v4143 = vpack.c.b16 %v4121, %v4120
        %v4144 = vpack.c.b16 %v4123, %v4122
        %v4145 = vpack.c.b16 %v4125, %v4124
        %v4146 = vpack.c.b16 %v4127, %v4126
        %v4147 = vpack.c.b16 %v4129, %v4128
        %v4148 = vpack.c.b16 %v4131, %v4130
        %v4149 = vpack.c.b16 %v4133, %v4132
        %v4150 = vpack.c.b16 %v4135, %v4134
        %v4151 = vpack.c.b16 %v4137, %v4136
        %v4152 = vpack.c.b16 %v4139, %v4138
        %v4153 = vpack.c.b16 %v4141, %v4140
        %v4167 = vsel %vm3906, %v4092, 0
        %4169 = vmatprep.subr.bf16.mxu0 0
        %4170 = vmatpush1.bf16.msra.mxu0 %v4149
        %4171 = vmatprep.subr.bf16.mxu0 0
        %4172 = vmatpush1.bf16.msra.mxu0 %v4148
        %4173 = vmatprep.subr.bf16.mxu0 0
        %4174 = vmatpush1.bf16.msra.mxu0 %v4147
        %4175 = vmatprep.subr.bf16.mxu0 0
        %4176 = vmatpush1.bf16.msra.mxu0 %v4146
        %4177 = vmatprep.subr.bf16.mxu0 0
        %4178 = vmatpush1.bf16.msra.mxu0 %v4145
        %4179 = vmatprep.subr.bf16.mxu0 0
        %4180 = vmatpush1.bf16.msra.mxu0 %v4144
        %4181 = vmatprep.subr.bf16.mxu0 0
        %4182 = vmatpush1.bf16.msra.mxu0 %v4143
        %4183 = vmatprep.subr.bf16.mxu0 0
        %4184 = vmatpush1.bf16.msra.mxu0 %v4142
        %4185 = vmatprep.subr.bf16.mxu0 0
        %4186 = vmatpush2.bf16.msra.mxu0 0
        %4187 = vmatprep.subr.bf16.mxu0 0
        %4188 = vmatpush2.bf16.msra.mxu0 0
        %4189 = vmatprep.subr.bf16.mxu0 0
        %4190 = vmatpush2.bf16.msra.mxu0 0
        %4191 = vmatprep.subr.bf16.mxu0 0
        %4192 = vmatpush2.bf16.msra.mxu0 0
        %4193 = vmatprep.subr.bf16.mxu0 0
        %4194 = vmatpush2.bf16.msra.mxu0 %v4153
        %4195 = vmatprep.subr.bf16.mxu0 0
        %4196 = vmatpush2.bf16.msra.mxu0 %v4152
        %4197 = vmatprep.subr.bf16.mxu0 0
        %4198 = vmatpush2.bf16.msra.mxu0 %v4151
        %4199 = vmatprep.subr.bf16.mxu0 0
        %4200 = vmatpush2.bf16.msra.mxu0 %v4150
        %4201 = vmatprep.mubr.bf16.mxu0 %v4167
        %4202 = vmatmul.mubr.bf16.gmra.mxu0 %v4091
        %v4203 = vpop.f32.mrf.mxu0
        %v4204 = vadd.f32 0.0, %v4203
        %v4205 = vpop.f32.mrf.mxu0
        %v4206 = vpop.f32.mrf.mxu0
        %v4207 = vpop.f32.mrf.mxu0
        %4208 = vdwg.mxu0
        %v4209 = vadd.f32 %v4059, %v4204
        %v4210 = vld [vmem:[%s8] sm:$0x1]
        %v4211 = vadd.f32 %v4209, %v4210
        %v4212 = vmax.f32 %v4211, 0.0
        %v4213 = vpack.c.bf16 %v4212, %v4212
        %v4214 = vld [vmem:[%s9] sm:$0xff]
        %v4215 = vld [vmem:[%s9 + $0x8] sm:$0xff]
        %v4216 = vld [vmem:[%s9 + $0x10] sm:$0xff]
        %v4217 = vld [vmem:[%s9 + $0x18] sm:$0xff]
        %v4218 = vld [vmem:[%s9 + $0x20] sm:$0xff]
        %v4219 = vld [vmem:[%s9 + $0x28] sm:$0xff]
        %v4220 = vld [vmem:[%s9 + $0x30] sm:$0xff]
        %v4221 = vld [vmem:[%s9 + $0x38] sm:$0xff]
        %v4222 = vld [vmem:[%s9 + $0x40] sm:$0xff]
        %v4223 = vld [vmem:[%s9 + $0x48] sm:$0xff]
        %v4224 = vld [vmem:[%s9 + $0x50] sm:$0xff]
        %v4225 = vld [vmem:[%s9 + $0x58] sm:$0xff]
        %v4226 = vld [vmem:[%s9 + $0x60] sm:$0xff]
        %v4227 = vld [vmem:[%s9 + $0x68] sm:$0xff]
        %v4228 = vld [vmem:[%s9 + $0x70] sm:$0xff]
        %v4229 = vld [vmem:[%s9 + $0x78] sm:$0xff]
        %v4230 = vld [vmem:[%s10] sm:$0xf]
        %v4247 = vunpack.c.l.b16 %v4214
        %v4248 = vunpack.c.h.b16 %v4214
        %v4249 = vunpack.c.l.b16 %v4215
        %v4250 = vunpack.c.h.b16 %v4215
        %v4251 = vunpack.c.l.b16 %v4216
        %v4252 = vunpack.c.h.b16 %v4216
        %v4253 = vunpack.c.l.b16 %v4217
        %v4254 = vunpack.c.h.b16 %v4217
        %v4255 = vunpack.c.l.b16 %v4218
        %v4256 = vunpack.c.h.b16 %v4218
        %v4257 = vunpack.c.l.b16 %v4219
        %v4258 = vunpack.c.h.b16 %v4219
        %v4259 = vunpack.c.l.b16 %v4220
        %v4260 = vunpack.c.h.b16 %v4220
        %v4261 = vunpack.c.l.b16 %v4221
        %v4262 = vunpack.c.h.b16 %v4221
        %v4263 = vunpack.c.l.b16 %v4222
        %v4264 = vunpack.c.h.b16 %v4222
        %v4265 = vunpack.c.l.b16 %v4223
        %v4266 = vunpack.c.h.b16 %v4223
        %v4267 = vunpack.c.l.b16 %v4224
        %v4268 = vunpack.c.h.b16 %v4224
        %v4269 = vunpack.c.l.b16 %v4225
        %v4270 = vunpack.c.h.b16 %v4225
        %v4271 = vunpack.c.l.b16 %v4226
        %v4272 = vunpack.c.h.b16 %v4226
        %v4273 = vunpack.c.l.b16 %v4227
        %v4274 = vunpack.c.h.b16 %v4227
        %v4275 = vunpack.c.l.b16 %v4228
        %v4276 = vunpack.c.h.b16 %v4228
        %v4277 = vunpack.c.l.b16 %v4229
        %v4278 = vunpack.c.h.b16 %v4229
        %v4279 = vpack.c.b16 %v4251, %v4247
        %v4280 = vpack.c.b16 %v4252, %v4248
        %v4281 = vpack.c.b16 %v4253, %v4249
        %v4282 = vpack.c.b16 %v4254, %v4250
        %v4283 = vpack.c.b16 %v4259, %v4255
        %v4284 = vpack.c.b16 %v4260, %v4256
        %v4285 = vpack.c.b16 %v4261, %v4257
        %v4286 = vpack.c.b16 %v4262, %v4258
        %v4287 = vpack.c.b16 %v4267, %v4263
        %v4288 = vpack.c.b16 %v4268, %v4264
        %v4289 = vpack.c.b16 %v4269, %v4265
        %v4290 = vpack.c.b16 %v4270, %v4266
        %v4291 = vpack.c.b16 %v4275, %v4271
        %v4292 = vpack.c.b16 %v4276, %v4272
        %v4293 = vpack.c.b16 %v4277, %v4273
        %v4294 = vpack.c.b16 %v4278, %v4274
        %v4312 = vlaneseq
        %v4313 = vshrl.u32 %v4312, 7
        %v4314 = vsub.s32 0, %v4313
        %v4315 = vrot.slane %v4230, %v4314
        %v4316 = vlaneseq
        %v4317 = vshrl.u32 %v4316, 7
        %v4318 = vsub.s32 1, %v4317
        %v4319 = vrot.slane %v4230, %v4318
        %v4320 = vlaneseq
        %v4321 = vshrl.u32 %v4320, 7
        %v4322 = vsub.s32 2, %v4321
        %v4323 = vrot.slane %v4230, %v4322
        %v4324 = vlaneseq
        %v4325 = vshrl.u32 %v4324, 7
        %v4326 = vsub.s32 3, %v4325
        %v4327 = vrot.slane %v4230, %v4326
        %v4333 = vsel %vm3906, %v4213, 0
        %4335 = vmatprep.subr.bf16.mxu0 0
        %4336 = vmatpush1.bf16.msra.mxu0 0
        %4337 = vmatprep.subr.bf16.mxu0 0
        %4338 = vmatpush1.bf16.msra.mxu0 0
        %4339 = vmatprep.subr.bf16.mxu0 0
        %4340 = vmatpush1.bf16.msra.mxu0 0
        %4341 = vmatprep.subr.bf16.mxu0 0
        %4342 = vmatpush1.bf16.msra.mxu0 0
        %4343 = vmatprep.subr.bf16.mxu0 %v4292
        %4344 = vmatpush1.bf16.msra.mxu0 %v4291
        %4345 = vmatprep.subr.bf16.mxu0 %v4288
        %4346 = vmatpush1.bf16.msra.mxu0 %v4287
        %4347 = vmatprep.subr.bf16.mxu0 %v4284
        %4348 = vmatpush1.bf16.msra.mxu0 %v4283
        %4349 = vmatprep.subr.bf16.mxu0 %v4280
        %4350 = vmatpush1.bf16.msra.mxu0 %v4279
        %4351 = vmatprep.subr.bf16.mxu0 0
        %4352 = vmatpush2.bf16.msra.mxu0 0
        %4353 = vmatprep.subr.bf16.mxu0 0
        %4354 = vmatpush2.bf16.msra.mxu0 0
        %4355 = vmatprep.subr.bf16.mxu0 0
        %4356 = vmatpush2.bf16.msra.mxu0 0
        %4357 = vmatprep.subr.bf16.mxu0 0
        %4358 = vmatpush2.bf16.msra.mxu0 0
        %4359 = vmatprep.subr.bf16.mxu0 0
        %4360 = vmatpush2.bf16.msra.mxu0 0
        %4361 = vmatprep.subr.bf16.mxu0 0
        %4362 = vmatpush2.bf16.msra.mxu0 0
        %4363 = vmatprep.subr.bf16.mxu0 0
        %4364 = vmatpush2.bf16.msra.mxu0 0
        %4365 = vmatprep.subr.bf16.mxu0 0
        %4366 = vmatpush2.bf16.msra.mxu0 0
        %4367 = vmatprep.mubr.bf16.mxu0 0
        %4368 = vmatmul.mubr.bf16.gmra.mxu0 %v4333
        %v4369 = vpop.f32.mrf.mxu0
        %v4370 = vadd.f32 %v4315, %v4369
        %v4371 = vpop.f32.mrf.mxu0
        %v4372 = vadd.f32 %v4319, %v4371
        %v4373 = vpop.f32.mrf.mxu0
        %v4374 = vpop.f32.mrf.mxu0
        %4375 = vdwg.mxu0
        %4376 = vmatprep.subr.bf16.mxu0 0
        %4377 = vmatpush1.bf16.msra.mxu0 0
        %4378 = vmatprep.subr.bf16.mxu0 0
        %4379 = vmatpush1.bf16.msra.mxu0 0
        %4380 = vmatprep.subr.bf16.mxu0 0
        %4381 = vmatpush1.bf16.msra.mxu0 0
        %4382 = vmatprep.subr.bf16.mxu0 0
        %4383 = vmatpush1.bf16.msra.mxu0 0
        %4384 = vmatprep.subr.bf16.mxu0 %v4294
        %4385 = vmatpush1.bf16.msra.mxu0 %v4293
        %4386 = vmatprep.subr.bf16.mxu0 %v4290
        %4387 = vmatpush1.bf16.msra.mxu0 %v4289
        %4388 = vmatprep.subr.bf16.mxu0 %v4286
        %4389 = vmatpush1.bf16.msra.mxu0 %v4285
        %4390 = vmatprep.subr.bf16.mxu0 %v4282
        %4391 = vmatpush1.bf16.msra.mxu0 %v4281
        %4392 = vmatprep.subr.bf16.mxu0 0
        %4393 = vmatpush2.bf16.msra.mxu0 0
        %4394 = vmatprep.subr.bf16.mxu0 0
        %4395 = vmatpush2.bf16.msra.mxu0 0
        %4396 = vmatprep.subr.bf16.mxu0 0
        %4397 = vmatpush2.bf16.msra.mxu0 0
        %4398 = vmatprep.subr.bf16.mxu0 0
        %4399 = vmatpush2.bf16.msra.mxu0 0
        %4400 = vmatprep.subr.bf16.mxu0 0
        %4401 = vmatpush2.bf16.msra.mxu0 0
        %4402 = vmatprep.subr.bf16.mxu0 0
        %4403 = vmatpush2.bf16.msra.mxu0 0
        %4404 = vmatprep.subr.bf16.mxu0 0
        %4405 = vmatpush2.bf16.msra.mxu0 0
        %4406 = vmatprep.subr.bf16.mxu0 0
        %4407 = vmatpush2.bf16.msra.mxu0 0
        %4408 = vmatprep.mubr.bf16.mxu0 0
        %4409 = vmatmul.mubr.bf16.gmra.mxu0 %v4333
        %v4410 = vpop.f32.mrf.mxu0
        %v4411 = vadd.f32 %v4323, %v4410
        %v4412 = vpop.f32.mrf.mxu0
        %v4413 = vadd.f32 %v4327, %v4412
        %v4414 = vpop.f32.mrf.mxu0
        %v4415 = vpop.f32.mrf.mxu0
        %4416 = vdwg.mxu0
        %v4417 = vmax.f32 %v4370, 0.0
        %v4418 = vmax.f32 %v4372, 0.0
        %v4419 = vmax.f32 %v4411, 0.0
        %v4420 = vmax.f32 %v4413, 0.0
        %v4421 = vpack.c.bf16 %v4417, %v4417
        %v4422 = vpack.c.bf16 %v4418, %v4418
        %v4423 = vpack.c.bf16 %v4419, %v4419
        %v4424 = vpack.c.bf16 %v4420, %v4420
        %v4425 = vld [vmem:[%s11] sm:$0xf]
        %v4426 = vld [vmem:[%s11 + $0x4] sm:$0xf]
        %v4427 = vld [vmem:[%s11 + $0x8] sm:$0xf]
        %v4428 = vld [vmem:[%s11 + $0xc] sm:$0xf]
        %v4429 = vld [vmem:[%s11 + $0x10] sm:$0xf]
        %v4430 = vld [vmem:[%s11 + $0x14] sm:$0xf]
        %v4431 = vld [vmem:[%s11 + $0x18] sm:$0xf]
        %v4432 = vld [vmem:[%s11 + $0x1c] sm:$0xf]
        %v4433 = vld [vmem:[%s11 + $0x20] sm:$0xf]
        %v4434 = vld [vmem:[%s11 + $0x24] sm:$0xf]
        %v4435 = vld [vmem:[%s11 + $0x28] sm:$0xf]
        %v4436 = vld [vmem:[%s11 + $0x2c] sm:$0xf]
        %v4437 = vld [vmem:[%s11 + $0x30] sm:$0xf]
        %v4438 = vld [vmem:[%s11 + $0x34] sm:$0xf]
        %v4439 = vld [vmem:[%s11 + $0x38] sm:$0xf]
        %v4440 = vld [vmem:[%s11 + $0x3c] sm:$0xf]
        %v4441 = vld [vmem:[%s11 + $0x40] sm:$0xf]
        %v4442 = vld [vmem:[%s11 + $0x44] sm:$0xf]
        %v4443 = vld [vmem:[%s11 + $0x48] sm:$0xf]
        %v4444 = vld [vmem:[%s11 + $0x4c] sm:$0xf]
        %v4445 = vld [vmem:[%s11 + $0x50] sm:$0xf]
        %v4446 = vld [vmem:[%s11 + $0x54] sm:$0xf]
        %v4447 = vld [vmem:[%s11 + $0x58] sm:$0xf]
        %v4448 = vld [vmem:[%s11 + $0x5c] sm:$0xf]
        %v4449 = vld [vmem:[%s11 + $0x60] sm:$0xf]
        %v4450 = vld [vmem:[%s11 + $0x64] sm:$0xf]
        %v4451 = vld [vmem:[%s11 + $0x68] sm:$0xf]
        %v4452 = vld [vmem:[%s11 + $0x6c] sm:$0xf]
        %v4453 = vld [vmem:[%s11 + $0x70] sm:$0xf]
        %v4454 = vld [vmem:[%s11 + $0x74] sm:$0xf]
        %v4455 = vld [vmem:[%s11 + $0x78] sm:$0xf]
        %v4456 = vld [vmem:[%s11 + $0x7c] sm:$0xf]
        %v4457 = vld [vmem:[%s11 + $0x80] sm:$0xf]
        %v4458 = vld [vmem:[%s11 + $0x84] sm:$0xf]
        %v4459 = vld [vmem:[%s11 + $0x88] sm:$0xf]
        %v4460 = vld [vmem:[%s11 + $0x8c] sm:$0xf]
        %v4461 = vld [vmem:[%s11 + $0x90] sm:$0xf]
        %v4462 = vld [vmem:[%s11 + $0x94] sm:$0xf]
        %v4463 = vld [vmem:[%s11 + $0x98] sm:$0xf]
        %v4464 = vld [vmem:[%s11 + $0x9c] sm:$0xf]
        %v4465 = vld [vmem:[%s11 + $0xa0] sm:$0xf]
        %v4466 = vld [vmem:[%s11 + $0xa4] sm:$0xf]
        %v4467 = vld [vmem:[%s11 + $0xa8] sm:$0xf]
        %v4468 = vld [vmem:[%s11 + $0xac] sm:$0xf]
        %v4469 = vld [vmem:[%s11 + $0xb0] sm:$0xf]
        %v4470 = vld [vmem:[%s11 + $0xb4] sm:$0xf]
        %v4471 = vld [vmem:[%s11 + $0xb8] sm:$0xf]
        %v4472 = vld [vmem:[%s11 + $0xbc] sm:$0xf]
        %v4473 = vld [vmem:[%s11 + $0xc0] sm:$0xf]
        %v4474 = vld [vmem:[%s11 + $0xc4] sm:$0xf]
        %v4475 = vld [vmem:[%s11 + $0xc8] sm:$0xf]
        %v4476 = vld [vmem:[%s11 + $0xcc] sm:$0xf]
        %v4477 = vld [vmem:[%s11 + $0xd0] sm:$0xf]
        %v4478 = vld [vmem:[%s11 + $0xd4] sm:$0xf]
        %v4479 = vld [vmem:[%s11 + $0xd8] sm:$0xf]
        %v4480 = vld [vmem:[%s11 + $0xdc] sm:$0xf]
        %v4481 = vld [vmem:[%s11 + $0xe0] sm:$0xf]
        %v4482 = vld [vmem:[%s11 + $0xe4] sm:$0xf]
        %v4483 = vld [vmem:[%s11 + $0xe8] sm:$0xf]
        %v4484 = vld [vmem:[%s11 + $0xec] sm:$0xf]
        %v4485 = vld [vmem:[%s11 + $0xf0] sm:$0xf]
        %v4486 = vld [vmem:[%s11 + $0xf4] sm:$0xf]
        %v4487 = vld [vmem:[%s11 + $0xf8] sm:$0xf]
        %v4488 = vld [vmem:[%s11 + $0xfc] sm:$0xf]
        %v4489 = vld [vmem:[%s12] sm:$0x1]
        %v4554 = vunpack.c.l.b16 %v4425
        %v4555 = vunpack.c.l.b16 %v4426
        %v4556 = vunpack.c.l.b16 %v4427
        %v4557 = vunpack.c.l.b16 %v4428
        %v4558 = vunpack.c.l.b16 %v4429
        %v4559 = vunpack.c.l.b16 %v4430
        %v4560 = vunpack.c.l.b16 %v4431
        %v4561 = vunpack.c.l.b16 %v4432
        %v4562 = vunpack.c.l.b16 %v4433
        %v4563 = vunpack.c.l.b16 %v4434
        %v4564 = vunpack.c.l.b16 %v4435
        %v4565 = vunpack.c.l.b16 %v4436
        %v4566 = vunpack.c.l.b16 %v4437
        %v4567 = vunpack.c.l.b16 %v4438
        %v4568 = vunpack.c.l.b16 %v4439
        %v4569 = vunpack.c.l.b16 %v4440
        %v4570 = vunpack.c.l.b16 %v4441
        %v4571 = vunpack.c.l.b16 %v4442
        %v4572 = vunpack.c.l.b16 %v4443
        %v4573 = vunpack.c.l.b16 %v4444
        %v4574 = vunpack.c.l.b16 %v4445
        %v4575 = vunpack.c.l.b16 %v4446
        %v4576 = vunpack.c.l.b16 %v4447
        %v4577 = vunpack.c.l.b16 %v4448
        %v4578 = vunpack.c.l.b16 %v4449
        %v4579 = vunpack.c.l.b16 %v4450
        %v4580 = vunpack.c.l.b16 %v4451
        %v4581 = vunpack.c.l.b16 %v4452
        %v4582 = vunpack.c.l.b16 %v4453
        %v4583 = vunpack.c.l.b16 %v4454
        %v4584 = vunpack.c.l.b16 %v4455
        %v4585 = vunpack.c.l.b16 %v4456
        %v4586 = vunpack.c.l.b16 %v4457
        %v4587 = vunpack.c.l.b16 %v4458
        %v4588 = vunpack.c.l.b16 %v4459
        %v4589 = vunpack.c.l.b16 %v4460
        %v4590 = vunpack.c.l.b16 %v4461
        %v4591 = vunpack.c.l.b16 %v4462
        %v4592 = vunpack.c.l.b16 %v4463
        %v4593 = vunpack.c.l.b16 %v4464
        %v4594 = vunpack.c.l.b16 %v4465
        %v4595 = vunpack.c.l.b16 %v4466
        %v4596 = vunpack.c.l.b16 %v4467
        %v4597 = vunpack.c.l.b16 %v4468
        %v4598 = vunpack.c.l.b16 %v4469
        %v4599 = vunpack.c.l.b16 %v4470
        %v4600 = vunpack.c.l.b16 %v4471
        %v4601 = vunpack.c.l.b16 %v4472
        %v4602 = vunpack.c.l.b16 %v4473
        %v4603 = vunpack.c.l.b16 %v4474
        %v4604 = vunpack.c.l.b16 %v4475
        %v4605 = vunpack.c.l.b16 %v4476
        %v4606 = vunpack.c.l.b16 %v4477
        %v4607 = vunpack.c.l.b16 %v4478
        %v4608 = vunpack.c.l.b16 %v4479
        %v4609 = vunpack.c.l.b16 %v4480
        %v4610 = vunpack.c.l.b16 %v4481
        %v4611 = vunpack.c.l.b16 %v4482
        %v4612 = vunpack.c.l.b16 %v4483
        %v4613 = vunpack.c.l.b16 %v4484
        %v4614 = vunpack.c.l.b16 %v4485
        %v4615 = vunpack.c.l.b16 %v4486
        %v4616 = vunpack.c.l.b16 %v4487
        %v4617 = vunpack.c.l.b16 %v4488
        %v4618 = vpack.c.b16 %v4555, %v4554
        %v4619 = vpack.c.b16 %v4557, %v4556
        %v4620 = vpack.c.b16 %v4559, %v4558
        %v4621 = vpack.c.b16 %v4561, %v4560
        %v4622 = vpack.c.b16 %v4563, %v4562
        %v4623 = vpack.c.b16 %v4565, %v4564
        %v4624 = vpack.c.b16 %v4567, %v4566
        %v4625 = vpack.c.b16 %v4569, %v4568
        %v4626 = vpack.c.b16 %v4571, %v4570
        %v4627 = vpack.c.b16 %v4573, %v4572
        %v4628 = vpack.c.b16 %v4575, %v4574
        %v4629 = vpack.c.b16 %v4577, %v4576
        %v4630 = vpack.c.b16 %v4579, %v4578
        %v4631 = vpack.c.b16 %v4581, %v4580
        %v4632 = vpack.c.b16 %v4583, %v4582
        %v4633 = vpack.c.b16 %v4585, %v4584
        %v4634 = vpack.c.b16 %v4587, %v4586
        %v4635 = vpack.c.b16 %v4589, %v4588
        %v4636 = vpack.c.b16 %v4591, %v4590
        %v4637 = vpack.c.b16 %v4593, %v4592
        %v4638 = vpack.c.b16 %v4595, %v4594
        %v4639 = vpack.c.b16 %v4597, %v4596
        %v4640 = vpack.c.b16 %v4599, %v4598
        %v4641 = vpack.c.b16 %v4601, %v4600
        %v4642 = vpack.c.b16 %v4603, %v4602
        %v4643 = vpack.c.b16 %v4605, %v4604
        %v4644 = vpack.c.b16 %v4607, %v4606
        %v4645 = vpack.c.b16 %v4609, %v4608
        %v4646 = vpack.c.b16 %v4611, %v4610
        %v4647 = vpack.c.b16 %v4613, %v4612
        %v4648 = vpack.c.b16 %v4615, %v4614
        %v4649 = vpack.c.b16 %v4617, %v4616
        %4682 = vmatprep.subr.bf16.mxu0 0
        %4683 = vmatpush1.bf16.msra.mxu0 %v4625
        %4684 = vmatprep.subr.bf16.mxu0 0
        %4685 = vmatpush1.bf16.msra.mxu0 %v4624
        %4686 = vmatprep.subr.bf16.mxu0 0
        %4687 = vmatpush1.bf16.msra.mxu0 %v4623
        %4688 = vmatprep.subr.bf16.mxu0 0
        %4689 = vmatpush1.bf16.msra.mxu0 %v4622
        %4690 = vmatprep.subr.bf16.mxu0 0
        %4691 = vmatpush1.bf16.msra.mxu0 %v4621
        %4692 = vmatprep.subr.bf16.mxu0 0
        %4693 = vmatpush1.bf16.msra.mxu0 %v4620
        %4694 = vmatprep.subr.bf16.mxu0 0
        %4695 = vmatpush1.bf16.msra.mxu0 %v4619
        %4696 = vmatprep.subr.bf16.mxu0 0
        %4697 = vmatpush1.bf16.msra.mxu0 %v4618
        %4698 = vmatprep.subr.bf16.mxu0 0
        %4699 = vmatpush2.bf16.msra.mxu0 %v4633
        %4700 = vmatprep.subr.bf16.mxu0 0
        %4701 = vmatpush2.bf16.msra.mxu0 %v4632
        %4702 = vmatprep.subr.bf16.mxu0 0
        %4703 = vmatpush2.bf16.msra.mxu0 %v4631
        %4704 = vmatprep.subr.bf16.mxu0 0
        %4705 = vmatpush2.bf16.msra.mxu0 %v4630
        %4706 = vmatprep.subr.bf16.mxu0 0
        %4707 = vmatpush2.bf16.msra.mxu0 %v4629
        %4708 = vmatprep.subr.bf16.mxu0 0
        %4709 = vmatpush2.bf16.msra.mxu0 %v4628
        %4710 = vmatprep.subr.bf16.mxu0 0
        %4711 = vmatpush2.bf16.msra.mxu0 %v4627
        %4712 = vmatprep.subr.bf16.mxu0 0
        %4713 = vmatpush2.bf16.msra.mxu0 %v4626
        %4714 = vmatprep.mubr.bf16.mxu0 %v4422
        %4715 = vmatmul.mubr.bf16.gmra.mxu0 %v4421
        %v4716 = vpop.f32.mrf.mxu0
        %v4717 = vadd.f32 %v4489, %v4716
        %v4718 = vpop.f32.mrf.mxu0
        %v4719 = vpop.f32.mrf.mxu0
        %v4720 = vpop.f32.mrf.mxu0
        %4721 = vdwg.mxu0
        %4722 = vmatprep.subr.bf16.mxu0 0
        %4723 = vmatpush1.bf16.msra.mxu0 %v4641
        %4724 = vmatprep.subr.bf16.mxu0 0
        %4725 = vmatpush1.bf16.msra.mxu0 %v4640
        %4726 = vmatprep.subr.bf16.mxu0 0
        %4727 = vmatpush1.bf16.msra.mxu0 %v4639
        %4728 = vmatprep.subr.bf16.mxu0 0
        %4729 = vmatpush1.bf16.msra.mxu0 %v4638
        %4730 = vmatprep.subr.bf16.mxu0 0
        %4731 = vmatpush1.bf16.msra.mxu0 %v4637
        %4732 = vmatprep.subr.bf16.mxu0 0
        %4733 = vmatpush1.bf16.msra.mxu0 %v4636
        %4734 = vmatprep.subr.bf16.mxu0 0
        %4735 = vmatpush1.bf16.msra.mxu0 %v4635
        %4736 = vmatprep.subr.bf16.mxu0 0
        %4737 = vmatpush1.bf16.msra.mxu0 %v4634
        %4738 = vmatprep.subr.bf16.mxu0 0
        %4739 = vmatpush2.bf16.msra.mxu0 %v4649
        %4740 = vmatprep.subr.bf16.mxu0 0
        %4741 = vmatpush2.bf16.msra.mxu0 %v4648
        %4742 = vmatprep.subr.bf16.mxu0 0
        %4743 = vmatpush2.bf16.msra.mxu0 %v4647
        %4744 = vmatprep.subr.bf16.mxu0 0
        %4745 = vmatpush2.bf16.msra.mxu0 %v4646
        %4746 = vmatprep.subr.bf16.mxu0 0
        %4747 = vmatpush2.bf16.msra.mxu0 %v4645
        %4748 = vmatprep.subr.bf16.mxu0 0
        %4749 = vmatpush2.bf16.msra.mxu0 %v4644
        %4750 = vmatprep.subr.bf16.mxu0 0
        %4751 = vmatpush2.bf16.msra.mxu0 %v4643
        %4752 = vmatprep.subr.bf16.mxu0 0
        %4753 = vmatpush2.bf16.msra.mxu0 %v4642
        %4754 = vmatprep.mubr.bf16.mxu0 %v4424
        %4755 = vmatmul.mubr.bf16.gmra.mxu0 %v4423
        %v4756 = vpop.f32.mrf.mxu0
        %v4757 = vadd.f32 %v4717, %v4756
        %v4758 = vpop.f32.mrf.mxu0
        %v4759 = vpop.f32.mrf.mxu0
        %v4760 = vpop.f32.mrf.mxu0
        %4761 = vdwg.mxu0
        %4762 = vst [vmem:[%s432] sm:$0x1] %v4757
        %s4763 = sand.u32 %s313, 1
        %s4764 = scalar_lea.sflag [#allocation3], %s4763
        %s4765 = sand.u32 %s313, 1
        %s4766 = scalar_lea.vmem [#allocation2], %s4765
        // Predicated region
        $region73: #{dqn_forward.1} parent=71 // pred_check
          %p4767 = pneg %p323
        $region74: #{dqn_forward.1} parent=71 // pred_check_branch
          %4769 = sbr.rel (%p4767) target = $region76
        $region75: #{dqn_forward.1} parent=71 // pred_region
          %s4771 = ssub.s32 16, 16
          %4772 = vsyncadd %s4764, %s4771
          %s4773 = smul.addr %s27, 16
          %s4774 = scalar_lea.hbm %s13, %s4773
          %s4776 = sshll.u32 %s4766, 4
          %s4777 = int_to_ptr.vmem [resolvable:$true] %s4776
          %4779 = dma.vmem_to_hbm [thread:$0]  %s4777, 16, %s4774, %s4764
        $region76: #{dqn_forward.1} parent=71 // pred_fallthru
          _
      $region72: #{dqn_forward.1} parent=5 // pred_fallthru
        _
      %p4780 = scmp.le.s32.totalorder 2, %s22
      // Predicated region
      $region77: #{dqn_forward.1} parent=5 // pred_check
        %p4781 = pneg %p4780
      $region78: #{dqn_forward.1} parent=5 // pred_check_branch
        %4783 = sbr.rel (%p4781) target = $region80
      $region79: #{dqn_forward.1} parent=5 // pred_region
        %s4784 = ssub.s32 %s22, 2
        // Predicated region
        $region81: #{dqn_forward.1} parent=79 // pred_check
          %p4785 = pneg %p329
        $region82: #{dqn_forward.1} parent=79 // pred_check_branch
          %4787 = sbr.rel (%p4785) target = $region84
        $region83: #{dqn_forward.1} parent=79 // pred_region
          %s4788 = sand.u32 %s314, 1
          %s4789 = scalar_lea.sflag [#allocation3], %s4788
          %s4790 = sand.u32 %s314, 1
          %s4791 = scalar_lea.vmem [#allocation2], %s4790
          %4792 = dma.done %s4789, 16
        $region84: #{dqn_forward.1} parent=79 // pred_fallthru
          _
      $region80: #{dqn_forward.1} parent=5 // pred_fallthru
        _
    $region6: #{dqn_forward.1} parent=1 // loop_footer
      %s26 = sadd.s32 1, %s22
    $region7: #{dqn_forward.1} parent=1 // loop_footer_branch
      %21 = sbr.rel target = $region3
    $region8: #{dqn_forward.1} parent=1 // loop_exit
      _
    %4793 = vsyncpa [#allocation3], 1
    %s4794 = scalar_lea.sflag [#allocation3], 1
    %4795 = vsyncpa %s4794, 1

</llo_original>
